<compile_context>
chip_gen: v7x
topology: tpu7x:2x2x1
jax: 0.10.0
libtpu: 0.0.40
codegen_flags: <defaults>
</compile_context>

<pallas_src>
import functools

import jax
import jax.numpy as jnp
from jax.experimental import pallas as pl
from jax.experimental.pallas import tpu as pltpu


def _round_up(x, m):
    return (x + m - 1) // m * m


def _pad1(v, n):
    return jnp.pad(v.astype(jnp.float32), (0, n - v.shape[0]))


# ---------------------------------------------------------------------------
# Kernel 1: initial ConvTranspose2d(nz, cngf, 4, 1, 0) on a 1x1 input
#           == [N, nz] @ [nz, 4*4*cngf] matmul, with fused per-column
#           (sum, sum-of-squares) statistics for the following BatchNorm.
# ---------------------------------------------------------------------------

def _mm_stats_kernel(a_ref, b_ref, y_ref, st_ref):
    acc = jnp.dot(a_ref[...], b_ref[...], preferred_element_type=jnp.float32)
    y_ref[...] = acc.astype(y_ref.dtype)
    s0 = jnp.sum(acc, axis=0, keepdims=True)
    s1 = jnp.sum(acc * acc, axis=0, keepdims=True)
    st_ref[...] = jnp.concatenate([s0, s1], axis=0)


def matmul_stats_pallas(a, b):
    """a: [Mp, Kp] bf16, b: [Kp, Ncols] bf16 -> (y [Mp, Ncols] bf16,
    stats [2, Ncols] f32).  Ncols is split into at most 2 big blocks (one per
    v7x TensorCore); the per-block MXU work is tiny, so more grid steps would
    be pure pipeline overhead."""
    mp, kp = a.shape
    _, ncols = b.shape
    nblk = 2 if ncols >= 512 else 1
    tn = ncols // nblk
    return pl.pallas_call(
        _mm_stats_kernel,
        out_shape=(jax.ShapeDtypeStruct((mp, ncols), jnp.bfloat16),
                   jax.ShapeDtypeStruct((2, ncols), jnp.float32)),
        grid=(nblk,),
        in_specs=[pl.BlockSpec((mp, kp), lambda j: (0, 0)),
                  pl.BlockSpec((kp, tn), lambda j: (0, j))],
        out_specs=(pl.BlockSpec((mp, tn), lambda j: (0, j)),
                   pl.BlockSpec((2, tn), lambda j: (0, j))),
        compiler_params=pltpu.CompilerParams(dimension_semantics=("parallel",)),
    )(a, b)


# ---------------------------------------------------------------------------
# Kernel 2: inter-layer prep.  One memory pass that
#   - applies the folded BatchNorm affine + ReLU of the *previous* layer,
#   - adds the zero halo rows,
#   - emits the column-shift-tripled layout
#       x3[n, r, j, c*Cp + ch] = relu(affine(h))[n, r-1, j-1+c, ch]
#     (zero outside the image), c in {0,1,2},
# so the deconv kernel never needs sublane-offset window slices.
# ---------------------------------------------------------------------------

def _prep_kernel(h_ref, s_ref, b_ref, o_ref):
    _, H, W, Cp = h_ref.shape
    scale = s_ref[...].reshape(1, 1, 1, Cp)
    shift = b_ref[...].reshape(1, 1, 1, Cp)
    h = jnp.maximum(h_ref[...].astype(jnp.float32) * scale + shift, 0.0)
    h = h.astype(jnp.bfloat16)
    zc = jnp.zeros((1, H, 1, Cp), jnp.bfloat16)
    left = jnp.concatenate([zc, h[:, :, :W - 1, :]], axis=2)     # h[.., j-1, :]
    right = jnp.concatenate([h[:, :, 1:, :], zc], axis=2)        # h[.., j+1, :]
    core = jnp.concatenate([left, h, right], axis=3)             # (1,H,W,3*Cp)
    zr = jnp.zeros((1, 1, W, 3 * Cp), jnp.bfloat16)
    o_ref[...] = jnp.concatenate([zr, core, zr], axis=1)         # halo rows


def prep_pallas(h_raw, scale, shift):
    """h_raw: [N, H, W, Cp] bf16 raw (pre-BN) activations; scale/shift: [Cp]
    f32 -> x3 [N, H+2, W, 3*Cp] bf16 (affine+ReLU applied, zero halo rows,
    3 column-shifted copies concatenated along channels)."""
    n, H, W, cp = h_raw.shape
    return pl.pallas_call(
        _prep_kernel,
        out_shape=jax.ShapeDtypeStruct((n, H + 2, W, 3 * cp), jnp.bfloat16),
        grid=(n,),
        in_specs=[pl.BlockSpec((1, H, W, cp), lambda b: (b, 0, 0, 0)),
                  pl.BlockSpec((1, cp), lambda b: (0, 0)),
                  pl.BlockSpec((1, cp), lambda b: (0, 0))],
        out_specs=pl.BlockSpec((1, H + 2, W, 3 * cp), lambda b: (b, 0, 0, 0)),
        compiler_params=pltpu.CompilerParams(dimension_semantics=("parallel",)),
    )(h_raw, scale.reshape(1, cp), shift.reshape(1, cp))


# ---------------------------------------------------------------------------
# Kernel 3: stride-2 transposed conv (k=4, s=2, p=1).  All 4 output phases for
# one batch element are produced in a single grid step from 8 matmuls of
# K = 2*Cp.  Weights [4, 2, 2*Cp, OCp] are loaded once and stay resident
# across the batch (their block index never changes).  Optional fused BN batch
# statistics, optional fused Tanh (final layer) with bf16 writeback.
# ---------------------------------------------------------------------------

def _deconv_kernel(x3_ref, w_ref, y_ref, *stats_refs, act):
    _, hp2, W, c3 = x3_ref.shape
    H = hp2 - 2
    Cp = c3 // 3
    OCp = w_ref.shape[3]
    accs = []
    for dy in range(2):
        for dx in range(2):
            acc = None
            for t in range(2):                     # 2 row taps: ky = 3 - dy - 2t
                a = x3_ref[0, dy + t:dy + t + H, :, dx * Cp:(dx + 2) * Cp]
                a = a.reshape(H * W, 2 * Cp)
                d = jnp.dot(a, w_ref[2 * dy + dx, t],
                            preferred_element_type=jnp.float32)
                acc = d if acc is None else acc + d
            accs.append(acc)
    if stats_refs:                                 # fused BN batch statistics
        st_ref, = stats_refs
        s0 = jnp.zeros((1, OCp), jnp.float32)
        s1 = jnp.zeros((1, OCp), jnp.float32)
        for acc in accs:
            s0 = s0 + jnp.sum(acc, axis=0, keepdims=True)
            s1 = s1 + jnp.sum(acc * acc, axis=0, keepdims=True)
        st_ref[...] = jnp.concatenate([s0, s1], axis=0).reshape(1, 2, OCp)
    outs = []
    for acc in accs:
        v = jnp.tanh(acc) if act == "tanh" else acc
        outs.append(v.astype(y_ref.dtype).reshape(H, W, OCp))
    row0 = jnp.concatenate([outs[0], outs[1]], axis=-1)   # dy=0 : (H, W, 2*OCp)
    row1 = jnp.concatenate([outs[2], outs[3]], axis=-1)   # dy=1
    y_ref[...] = jnp.stack([row0, row1], axis=1)[None]    # (1, H, 2, W, 2*OCp)


def deconv_s2_pallas(x3, wpk, *, act=None, with_stats=False):
    """x3: [N, H+2, W, 3*Cp] bf16 (prep layout).  wpk: [4, 2, 2*Cp, OCp] bf16.
    Returns y [N, H, 2, W, 2*OCp] bf16 -- a free reshape away from NHWC
    [N, 2H, 2W, OCp] -- and optionally stats [N, 2, OCp] f32."""
    n, hp2, W, c3 = x3.shape
    H = hp2 - 2
    cp = c3 // 3
    ocp = wpk.shape[3]
    kern = functools.partial(_deconv_kernel, act=act)
    y_shape = jax.ShapeDtypeStruct((n, H, 2, W, 2 * ocp), jnp.bfloat16)
    in_specs = [pl.BlockSpec((1, hp2, W, c3), lambda b: (b, 0, 0, 0)),
                pl.BlockSpec((4, 2, 2 * cp, ocp), lambda b: (0, 0, 0, 0))]
    y_spec = pl.BlockSpec((1, H, 2, W, 2 * ocp), lambda b: (b, 0, 0, 0, 0))
    # Raise the scoped-VMEM limit only when the resident weight block gets big
    # (large-channel configs); leave defaults at demo sizes.
    vmem_est = (2 * 2 * (hp2 * W * c3 + 16 * cp * ocp + 4 * H * W * ocp)
                + 4 * 4 * H * W * ocp)
    ckw = {}
    if vmem_est > 12 * 1024 * 1024:
        ckw["vmem_limit_bytes"] = int(vmem_est * 1.5)
    cparams = pltpu.CompilerParams(dimension_semantics=("parallel",), **ckw)
    if with_stats:
        st_shape = jax.ShapeDtypeStruct((n, 2, ocp), jnp.float32)
        st_spec = pl.BlockSpec((1, 2, ocp), lambda b: (b, 0, 0))
        return pl.pallas_call(
            kern, out_shape=(y_shape, st_shape), grid=(n,),
            in_specs=in_specs, out_specs=(y_spec, st_spec),
            compiler_params=cparams)(x3, wpk)
    return pl.pallas_call(
        kern, out_shape=y_shape, grid=(n,),
        in_specs=in_specs, out_specs=y_spec,
        compiler_params=cparams)(x3, wpk)


# ---------------------------------------------------------------------------
# Weight packing / BN folding helpers (tiny, done in XLA).
# ---------------------------------------------------------------------------

def _build_packed_weights(w, cin_p, oc_p):
    """PyTorch ConvTranspose2d weight [C_in, C_out, 4, 4] ->
    [4(phase=2*dy+dx), 2(row tap t), 2*cin_p, oc_p] bf16.  Row tap t uses
    kernel row ky = 3 - dy - 2t; the two column taps (kx = 3 - dx - 2u) are
    stacked along the K axis to match the column-shift-tripled input layout."""
    c_in, c_out = w.shape[0], w.shape[1]
    w_p = jnp.pad(w.astype(jnp.float32),
                  ((0, cin_p - c_in), (0, oc_p - c_out), (0, 0), (0, 0)))
    phases = []
    for dy in range(2):
        for dx in range(2):
            taps = []
            for t in range(2):
                ky = 3 - dy - 2 * t
                taps.append(jnp.concatenate(
                    [w_p[:, :, ky, 3 - dx - 2 * u] for u in range(2)], axis=0))
            phases.append(jnp.stack(taps))
    return jnp.stack(phases).astype(jnp.bfloat16)


def _bn_scale_shift(ssum, ssq, count, gamma_p, beta_p, eps=1e-5):
    mean = ssum / count
    var = ssq / count - mean * mean          # biased (training-mode) variance
    scale = gamma_p / jnp.sqrt(var + eps)
    shift = beta_p - mean * scale
    return scale, shift


# ---------------------------------------------------------------------------
# Decoder forward
# ---------------------------------------------------------------------------

def decoder_forward(x, params):
    """x: [N, nz, 1, 1] (NCHW) -> [N, nc, isize, isize] (NCHW), matching the
    PyTorch Decoder (ConvT + BN(train stats) + ReLU pyramid, final ConvT+Tanh)."""
    N, nz = x.shape[0], x.shape[1]

    # --- initial: ConvTranspose2d(nz, cngf, 4, 1, 0) on 1x1 input == matmul ---
    w0 = params["initial"]["w"]                       # [nz, cngf, 4, 4]
    cngf = w0.shape[1]
    cp = _round_up(cngf, 128)
    kp = _round_up(nz, 128)
    mp = _round_up(N, 8)
    a = jnp.pad(x.reshape(N, nz), ((0, mp - N), (0, kp - nz))).astype(jnp.bfloat16)
    b = jnp.pad(w0.transpose(0, 2, 3, 1),             # [nz, ky, kx, oc]
                ((0, kp - nz), (0, 0), (0, 0), (0, cp - cngf)))
    b = b.reshape(kp, 16 * cp).astype(jnp.bfloat16)
    y, st = matmul_stats_pallas(a, b)
    scale, shift = _bn_scale_shift(
        st[0].reshape(16, cp).sum(0), st[1].reshape(16, cp).sum(0), float(N * 16),
        _pad1(params["initial"]["gamma"], cp), _pad1(params["initial"]["beta"], cp))
    h_raw = y[:N].reshape(N, 4, 4, cp)                # raw (pre-BN) NHWC bf16
    H = W = 4

    # --- pyramid: ConvTranspose2d(c, c//2, 4, 2, 1) + BN + ReLU ---
    for lyr in params["pyramid"]:
        wl = lyr["w"]                                 # [c_in, c_out, 4, 4]
        ocp = _round_up(wl.shape[1], 128)
        wpk = _build_packed_weights(wl, cp, ocp)
        x3 = prep_pallas(h_raw, scale, shift)         # fused BN+ReLU+halo+triple
        yb, st = deconv_s2_pallas(x3, wpk, act=None, with_stats=True)
        scale, shift = _bn_scale_shift(
            st[:, 0, :].sum(0), st[:, 1, :].sum(0), float(N * 4 * H * W),
            _pad1(lyr["gamma"], ocp), _pad1(lyr["beta"], ocp))
        H, W, cp = 2 * H, 2 * W, ocp
        h_raw = yb.reshape(N, H, W, cp)               # free reshape to NHWC

    # --- final: ConvTranspose2d(c, nc, 4, 2, 1) + Tanh (fused, bf16 output) ---
    wf = params["final"]["w"]
    nc = wf.shape[1]
    ocp = _round_up(nc, 128)
    wpk = _build_packed_weights(wf, cp, ocp)
    x3 = prep_pallas(h_raw, scale, shift)
    yf = deconv_s2_pallas(x3, wpk, act="tanh", with_stats=False)
    out = yf.reshape(N, 2 * H, 2 * W, ocp)[..., :nc]  # slice before transpose
    return out.transpose(0, 3, 1, 2).astype(jnp.float32)   # NCHW at the boundary

# TODO(synk): n_extra_layers > 0 (3x3 Conv2d + BN + ReLU blocks) not implemented;
# the module default (n_extra_layers=0) is covered.  ngpu / data_parallel is a
# no-op on a single device.
# TODO(synk): for isize >= 128 the resident [4, 2, 2*Cp, OCp] weight block of
# the first pyramid layer gets large; add an output-channel grid axis and
# spatial (row) tiling there if targeting v7x's 64 MiB VMEM at those sizes.


# ---------------------------------------------------------------------------
# Parameter init (matches nn.ConvTranspose2d weight layout [C_in, C_out, kh, kw])
# ---------------------------------------------------------------------------

def init_decoder_params(key, isize=16, nz=8, nc=3, ngf=64):
    assert isize % 16 == 0, "isize has to be a multiple of 16"
    cngf, tisize = ngf // 2, 4
    while tisize != isize:
        cngf, tisize = cngf * 2, tisize * 2
    keys = list(jax.random.split(key, 32))
    ki = 0

    def nrm(shape):
        nonlocal ki
        v = 0.02 * jax.random.normal(keys[ki], shape, jnp.float32)
        ki += 1
        return v

    params = {"initial": dict(w=nrm((nz, cngf, 4, 4)),
                              gamma=1.0 + nrm((cngf,)),
                              beta=jnp.zeros((cngf,), jnp.float32))}
    pyramid = []
    csize, c = 4, cngf
    while csize < isize // 2:
        pyramid.append(dict(w=nrm((c, c // 2, 4, 4)),
                            gamma=1.0 + nrm((c // 2,)),
                            beta=jnp.zeros((c // 2,), jnp.float32)))
        c, csize = c // 2, csize * 2
    params["pyramid"] = pyramid
    params["final"] = dict(w=nrm((c, nc, 4, 4)))
    return params


# ---------------------------------------------------------------------------
# Pure-JAX reference (lax.conv_general_dilated with lhs_dilation == ConvTranspose)
# ---------------------------------------------------------------------------

def ref_decoder(x, params):
    eps = 1e-5

    def convt(h, w, stride, pad):
        k = w.shape[2]
        q = k - 1 - pad
        w_ = jnp.flip(w, axis=(2, 3)).transpose(1, 0, 2, 3)   # -> [C_out, C_in, kh, kw]
        return jax.lax.conv_general_dilated(
            h, w_, window_strides=(1, 1), padding=[(q, q), (q, q)],
            lhs_dilation=(stride, stride),
            dimension_numbers=("NCHW", "OIHW", "NCHW"))

    def bn_relu(h, gamma, beta):
        mean = jnp.mean(h, axis=(0, 2, 3), keepdims=True)
        var = jnp.mean((h - mean) ** 2, axis=(0, 2, 3), keepdims=True)
        h = (h - mean) / jnp.sqrt(var + eps) * gamma[None, :, None, None] \
            + beta[None, :, None, None]
        return jnp.maximum(h, 0.0)

    h = convt(x, params["initial"]["w"], 1, 0)
    h = bn_relu(h, params["initial"]["gamma"], params["initial"]["beta"])
    for lyr in params["pyramid"]:
        h = bn_relu(convt(h, lyr["w"], 2, 1), lyr["gamma"], lyr["beta"])
    return jnp.tanh(convt(h, params["final"]["w"], 2, 1))


if __name__ == "__main__":
    key = jax.random.PRNGKey(0)
    pkey, xkey = jax.random.split(key)
    batch, nz, nc, isize, ngf = 2, 8, 3, 16, 64
    params = init_decoder_params(pkey, isize=isize, nz=nz, nc=nc, ngf=ngf)
    x = jax.random.normal(xkey, (batch, nz, 1, 1), jnp.float32)

    out = jax.jit(decoder_forward)(x, params)
    jax.block_until_ready(out)

    out_ref = ref_decoder(x, params)
    assert out.shape == (batch, nc, isize, isize), out.shape
    err = float(jnp.max(jnp.abs(out.astype(jnp.float32) - out_ref)))
    assert err < 5e-2, f"max abs err {err}"   # bf16 matmuls with f32 accumulation
    print("KERNEL_OK")
</pallas_src>

<mosaic_0001>
module attributes {stable_mosaic.version = 11 : i64} {
  func.func @_mm_stats_kernel(%arg0: i32, %arg1: memref<8x128xbf16, #tpu.memory_space<vmem>>, %arg2: memref<128x1024xbf16, #tpu.memory_space<vmem>>, %arg3: memref<8x1024xbf16, #tpu.memory_space<vmem>>, %arg4: memref<2x1024xf32, #tpu.memory_space<vmem>>) attributes {dimension_semantics = [#tpu.dimension_semantics<parallel>], iteration_bounds = array<i64: 2>, scalar_prefetch = 0 : i64, scratch_operands = 0 : i64, tpu.core_type = #tpu.core_type<tc>, window_params = [{pipeline_mode = #tpu.pipeline_mode<synchronous>, transform_indices = @transform_0, window_bounds = array<i64: 8, 128>}, {transform_indices = @transform_1, window_bounds = array<i64: 128, 1024>}, {transform_indices = @transform_2, window_bounds = array<i64: 8, 1024>}, {transform_indices = @transform_3, window_bounds = array<i64: 2, 1024>}]} {
    %c0 = arith.constant 0 : index
    %c0_0 = arith.constant 0 : index
    %0 = vector.load %arg1[%c0, %c0_0] : memref<8x128xbf16, #tpu.memory_space<vmem>>, vector<8x128xbf16>
    %c0_1 = arith.constant 0 : index
    %c0_2 = arith.constant 0 : index
    %1 = vector.load %arg2[%c0_1, %c0_2] : memref<128x1024xbf16, #tpu.memory_space<vmem>>, vector<128x1024xbf16>
    %cst = arith.constant dense<0.000000e+00> : vector<8x1024xf32>
    %2 = tpu.matmul %0, %1, %cst {dimension_numbers = #tpu.dot_dimension_numbers<[1], [0], [0], [1], [0, 0, 1, 1], [], []>} : vector<8x128xbf16>, vector<128x1024xbf16>, vector<8x1024xf32> -> vector<8x1024xf32>
    %3 = arith.truncf %2 : vector<8x1024xf32> to vector<8x1024xbf16>
    %c0_3 = arith.constant 0 : index
    %c0_4 = arith.constant 0 : index
    %4 = vector.load %arg3[%c0_3, %c0_4] : memref<8x1024xbf16, #tpu.memory_space<vmem>>, vector<8x1024xbf16>
    tpu.vector_store %arg3[%c0_3, %c0_4], %3 {strides = array<i32>} : memref<8x1024xbf16, #tpu.memory_space<vmem>>, vector<8x1024xbf16>,
    %cst_5 = arith.constant dense<0.000000e+00> : vector<1024xf32>
    %5 = vector.multi_reduction <add>, %2, %cst_5 [0] : vector<8x1024xf32> to vector<1024xf32>
    %6 = vector.shape_cast %5 : vector<1024xf32> to vector<1x1024xf32>
    %7 = arith.mulf %2, %2 : vector<8x1024xf32>
    %cst_6 = arith.constant dense<0.000000e+00> : vector<1024xf32>
    %8 = vector.multi_reduction <add>, %7, %cst_6 [0] : vector<8x1024xf32> to vector<1024xf32>
    %9 = vector.shape_cast %8 : vector<1024xf32> to vector<1x1024xf32>
    %10 = tpu.concatenate %6, %9 in 0 : vector<1x1024xf32>, vector<1x1024xf32> -> vector<2x1024xf32>
    %c0_7 = arith.constant 0 : index
    %c0_8 = arith.constant 0 : index
    %11 = vector.load %arg4[%c0_7, %c0_8] : memref<2x1024xf32, #tpu.memory_space<vmem>>, vector<2x1024xf32>
    tpu.vector_store %arg4[%c0_7, %c0_8], %10 {strides = array<i32>} : memref<2x1024xf32, #tpu.memory_space<vmem>>, vector<2x1024xf32>,
    return
  }
  func.func @transform_0(%arg0: i32) -> (i32, i32) {
    %c0_i32 = arith.constant 0 : i32
    %c0_i32_0 = arith.constant 0 : i32
    %c0_i32_1 = arith.constant 0 : i32
    return %c0_i32, %c0_i32_0 : i32, i32
  }
  func.func @transform_1(%arg0: i32) -> (i32, i32) {
    %c0_i32 = arith.constant 0 : i32
    %c0_i32_0 = arith.constant 0 : i32
    return %c0_i32, %arg0 : i32, i32
  }
  func.func @transform_2(%arg0: i32) -> (i32, i32) {
    %c0_i32 = arith.constant 0 : i32
    %c0_i32_0 = arith.constant 0 : i32
    return %c0_i32, %arg0 : i32, i32
  }
  func.func @transform_3(%arg0: i32) -> (i32, i32) {
    %c0_i32 = arith.constant 0 : i32
    %c0_i32_0 = arith.constant 0 : i32
    return %c0_i32, %arg0 : i32, i32
  }
}

module attributes {stable_mosaic.version = 11 : i64} {
  func.func @_prep_kernel(%arg0: i32, %arg1: memref<1x4x4x128xbf16, #tpu.memory_space<vmem>>, %arg2: memref<1x128xf32, #tpu.memory_space<vmem>>, %arg3: memref<1x128xf32, #tpu.memory_space<vmem>>, %arg4: memref<1x6x4x384xbf16, #tpu.memory_space<vmem>>) attributes {dimension_semantics = [#tpu.dimension_semantics<parallel>], iteration_bounds = array<i64: 2>, scalar_prefetch = 0 : i64, scratch_operands = 0 : i64, tpu.core_type = #tpu.core_type<tc>, window_params = [{transform_indices = @transform_0, window_bounds = array<i64: 1, 4, 4, 128>}, {pipeline_mode = #tpu.pipeline_mode<synchronous>, transform_indices = @transform_1, window_bounds = array<i64: 1, 128>}, {pipeline_mode = #tpu.pipeline_mode<synchronous>, transform_indices = @transform_2, window_bounds = array<i64: 1, 128>}, {transform_indices = @transform_3, window_bounds = array<i64: 1, 6, 4, 384>}]} {
    %c0 = arith.constant 0 : index
    %c0_0 = arith.constant 0 : index
    %0 = vector.load %arg2[%c0, %c0_0] : memref<1x128xf32, #tpu.memory_space<vmem>>, vector<1x128xf32>
    %1 = vector.shape_cast %0 : vector<1x128xf32> to vector<1x1x1x128xf32>
    %c0_1 = arith.constant 0 : index
    %c0_2 = arith.constant 0 : index
    %2 = vector.load %arg3[%c0_1, %c0_2] : memref<1x128xf32, #tpu.memory_space<vmem>>, vector<1x128xf32>
    %3 = vector.shape_cast %2 : vector<1x128xf32> to vector<1x1x1x128xf32>
    %c0_3 = arith.constant 0 : index
    %c0_4 = arith.constant 0 : index
    %c0_5 = arith.constant 0 : index
    %c0_6 = arith.constant 0 : index
    %4 = vector.load %arg1[%c0_3, %c0_4, %c0_5, %c0_6] : memref<1x4x4x128xbf16, #tpu.memory_space<vmem>>, vector<1x4x4x128xbf16>
    %5 = arith.extf %4 : vector<1x4x4x128xbf16> to vector<1x4x4x128xf32>
    %6 = vector.broadcast %1 : vector<1x1x1x128xf32> to vector<1x4x4x128xf32>
    %7 = arith.mulf %5, %6 : vector<1x4x4x128xf32>
    %8 = vector.broadcast %3 : vector<1x1x1x128xf32> to vector<1x4x4x128xf32>
    %9 = arith.addf %7, %8 : vector<1x4x4x128xf32>
    %cst = arith.constant 0.000000e+00 : f32
    %10 = vector.broadcast %cst : f32 to vector<1x4x4x128xf32>
    %11 = arith.maximumf %9, %10 : vector<1x4x4x128xf32>
    %12 = arith.truncf %11 : vector<1x4x4x128xf32> to vector<1x4x4x128xbf16>
    %cst_7 = arith.constant 0.000000e+00 : bf16
    %13 = vector.broadcast %cst_7 : bf16 to vector<1x4x1x128xbf16>
    %14 = vector.extract_strided_slice %12 {offsets = [0, 0, 0, 0], sizes = [1, 4, 3, 128], strides = [1, 1, 1, 1]} : vector<1x4x4x128xbf16> to vector<1x4x3x128xbf16>
    %15 = tpu.concatenate %13, %14 in 2 : vector<1x4x1x128xbf16>, vector<1x4x3x128xbf16> -> vector<1x4x4x128xbf16>
    %16 = vector.extract_strided_slice %12 {offsets = [0, 0, 1, 0], sizes = [1, 4, 3, 128], strides = [1, 1, 1, 1]} : vector<1x4x4x128xbf16> to vector<1x4x3x128xbf16>
    %17 = tpu.concatenate %16, %13 in 2 : vector<1x4x3x128xbf16>, vector<1x4x1x128xbf16> -> vector<1x4x4x128xbf16>
    %18 = tpu.concatenate %15, %12, %17 in 3 : vector<1x4x4x128xbf16>, vector<1x4x4x128xbf16>, vector<1x4x4x128xbf16> -> vector<1x4x4x384xbf16>
    %cst_8 = arith.constant 0.000000e+00 : bf16
    %19 = vector.broadcast %cst_8 : bf16 to vector<1x1x4x384xbf16>
    %20 = tpu.concatenate %19, %18, %19 in 1 : vector<1x1x4x384xbf16>, vector<1x4x4x384xbf16>, vector<1x1x4x384xbf16> -> vector<1x6x4x384xbf16>
    %c0_9 = arith.constant 0 : index
    %c0_10 = arith.constant 0 : index
    %c0_11 = arith.constant 0 : index
    %c0_12 = arith.constant 0 : index
    %21 = vector.load %arg4[%c0_9, %c0_10, %c0_11, %c0_12] : memref<1x6x4x384xbf16, #tpu.memory_space<vmem>>, vector<1x6x4x384xbf16>
    tpu.vector_store %arg4[%c0_9, %c0_10, %c0_11, %c0_12], %20 {strides = array<i32>} : memref<1x6x4x384xbf16, #tpu.memory_space<vmem>>, vector<1x6x4x384xbf16>,
    return
  }
  func.func @transform_0(%arg0: i32) -> (i32, i32, i32, i32) {
    %c0_i32 = arith.constant 0 : i32
    %c0_i32_0 = arith.constant 0 : i32
    %c0_i32_1 = arith.constant 0 : i32
    %c0_i32_2 = arith.constant 0 : i32
    return %arg0, %c0_i32, %c0_i32_0, %c0_i32_1 : i32, i32, i32, i32
  }
  func.func @transform_1(%arg0: i32) -> (i32, i32) {
    %c0_i32 = arith.constant 0 : i32
    %c0_i32_0 = arith.constant 0 : i32
    %c0_i32_1 = arith.constant 0 : i32
    return %c0_i32, %c0_i32_0 : i32, i32
  }
  func.func @transform_2(%arg0: i32) -> (i32, i32) {
    %c0_i32 = arith.constant 0 : i32
    %c0_i32_0 = arith.constant 0 : i32
    %c0_i32_1 = arith.constant 0 : i32
    return %c0_i32, %c0_i32_0 : i32, i32
  }
  func.func @transform_3(%arg0: i32) -> (i32, i32, i32, i32) {
    %c0_i32 = arith.constant 0 : i32
    %c0_i32_0 = arith.constant 0 : i32
    %c0_i32_1 = arith.constant 0 : i32
    %c0_i32_2 = arith.constant 0 : i32
    return %arg0, %c0_i32, %c0_i32_0, %c0_i32_1 : i32, i32, i32, i32
  }
}

module attributes {stable_mosaic.version = 11 : i64} {
  func.func @_deconv_kernel(%arg0: i32, %arg1: memref<1x6x4x384xbf16, #tpu.memory_space<vmem>>, %arg2: memref<4x2x256x128xbf16, #tpu.memory_space<vmem>>, %arg3: memref<1x4x2x4x256xbf16, #tpu.memory_space<vmem>>, %arg4: memref<1x2x128xf32, #tpu.memory_space<vmem>>) attributes {dimension_semantics = [#tpu.dimension_semantics<parallel>], iteration_bounds = array<i64: 2>, scalar_prefetch = 0 : i64, scratch_operands = 0 : i64, tpu.core_type = #tpu.core_type<tc>, window_params = [{transform_indices = @transform_0, window_bounds = array<i64: 1, 6, 4, 384>}, {pipeline_mode = #tpu.pipeline_mode<synchronous>, transform_indices = @transform_1, window_bounds = array<i64: 4, 2, 256, 128>}, {transform_indices = @transform_2, window_bounds = array<i64: 1, 4, 2, 4, 256>}, {transform_indices = @transform_3, window_bounds = array<i64: 1, 2, 128>}]} {
    %c0 = arith.constant 0 : index
    %c0_0 = arith.constant 0 : index
    %c0_1 = arith.constant 0 : index
    %c0_2 = arith.constant 0 : index
    %0 = vector.load %arg1[%c0, %c0_0, %c0_1, %c0_2] : memref<1x6x4x384xbf16, #tpu.memory_space<vmem>>, vector<1x4x4x256xbf16>
    %1 = vector.shape_cast %0 : vector<1x4x4x256xbf16> to vector<4x4x256xbf16>
    %2 = vector.shape_cast %1 : vector<4x4x256xbf16> to vector<16x256xbf16>
    %c0_3 = arith.constant 0 : index
    %c0_4 = arith.constant 0 : index
    %c0_5 = arith.constant 0 : index
    %c0_6 = arith.constant 0 : index
    %3 = vector.load %arg2[%c0_3, %c0_4, %c0_5, %c0_6] : memref<4x2x256x128xbf16, #tpu.memory_space<vmem>>, vector<1x1x256x128xbf16>
    %4 = vector.shape_cast %3 : vector<1x1x256x128xbf16> to vector<256x128xbf16>
    %cst = arith.constant dense<0.000000e+00> : vector<16x128xf32>
    %5 = tpu.matmul %2, %4, %cst {dimension_numbers = #tpu.dot_dimension_numbers<[1], [0], [0], [1], [0, 0, 1, 1], [], []>} : vector<16x256xbf16>, vector<256x128xbf16>, vector<16x128xf32> -> vector<16x128xf32>
    %c0_7 = arith.constant 0 : index
    %c1 = arith.constant 1 : index
    %c0_8 = arith.constant 0 : index
    %c0_9 = arith.constant 0 : index
    %6 = vector.load %arg1[%c0_7, %c1, %c0_8, %c0_9] : memref<1x6x4x384xbf16, #tpu.memory_space<vmem>>, vector<1x4x4x256xbf16>
    %7 = vector.shape_cast %6 : vector<1x4x4x256xbf16> to vector<4x4x256xbf16>
    %8 = vector.shape_cast %7 : vector<4x4x256xbf16> to vector<16x256xbf16>
    %c0_10 = arith.constant 0 : index
    %c1_11 = arith.constant 1 : index
    %c0_12 = arith.constant 0 : index
    %c0_13 = arith.constant 0 : index
    %9 = vector.load %arg2[%c0_10, %c1_11, %c0_12, %c0_13] : memref<4x2x256x128xbf16, #tpu.memory_space<vmem>>, vector<1x1x256x128xbf16>
    %10 = vector.shape_cast %9 : vector<1x1x256x128xbf16> to vector<256x128xbf16>
    %cst_14 = arith.constant dense<0.000000e+00> : vector<16x128xf32>
    %11 = tpu.matmul %8, %10, %cst_14 {dimension_numbers = #tpu.dot_dimension_numbers<[1], [0], [0], [1], [0, 0, 1, 1], [], []>} : vector<16x256xbf16>, vector<256x128xbf16>, vector<16x128xf32> -> vector<16x128xf32>
    %12 = arith.addf %5, %11 : vector<16x128xf32>
    %c0_15 = arith.constant 0 : index
    %c0_16 = arith.constant 0 : index
    %c0_17 = arith.constant 0 : index
    %c128 = arith.constant 128 : index
    %13 = vector.load %arg1[%c0_15, %c0_16, %c0_17, %c128] : memref<1x6x4x384xbf16, #tpu.memory_space<vmem>>, vector<1x4x4x256xbf16>
    %14 = vector.shape_cast %13 : vector<1x4x4x256xbf16> to vector<4x4x256xbf16>
    %15 = vector.shape_cast %14 : vector<4x4x256xbf16> to vector<16x256xbf16>
    %c1_18 = arith.constant 1 : index
    %c0_19 = arith.constant 0 : index
    %c0_20 = arith.constant 0 : index
    %c0_21 = arith.constant 0 : index
    %16 = vector.load %arg2[%c1_18, %c0_19, %c0_20, %c0_21] : memref<4x2x256x128xbf16, #tpu.memory_space<vmem>>, vector<1x1x256x128xbf16>
    %17 = vector.shape_cast %16 : vector<1x1x256x128xbf16> to vector<256x128xbf16>
    %cst_22 = arith.constant dense<0.000000e+00> : vector<16x128xf32>
    %18 = tpu.matmul %15, %17, %cst_22 {dimension_numbers = #tpu.dot_dimension_numbers<[1], [0], [0], [1], [0, 0, 1, 1], [], []>} : vector<16x256xbf16>, vector<256x128xbf16>, vector<16x128xf32> -> vector<16x128xf32>
    %c0_23 = arith.constant 0 : index
    %c1_24 = arith.constant 1 : index
    %c0_25 = arith.constant 0 : index
    %c128_26 = arith.constant 128 : index
    %19 = vector.load %arg1[%c0_23, %c1_24, %c0_25, %c128_26] : memref<1x6x4x384xbf16, #tpu.memory_space<vmem>>, vector<1x4x4x256xbf16>
    %20 = vector.shape_cast %19 : vector<1x4x4x256xbf16> to vector<4x4x256xbf16>
    %21 = vector.shape_cast %20 : vector<4x4x256xbf16> to vector<16x256xbf16>
    %c1_27 = arith.constant 1 : index
    %c1_28 = arith.constant 1 : index
    %c0_29 = arith.constant 0 : index
    %c0_30 = arith.constant 0 : index
    %22 = vector.load %arg2[%c1_27, %c1_28, %c0_29, %c0_30] : memref<4x2x256x128xbf16, #tpu.memory_space<vmem>>, vector<1x1x256x128xbf16>
    %23 = vector.shape_cast %22 : vector<1x1x256x128xbf16> to vector<256x128xbf16>
    %cst_31 = arith.constant dense<0.000000e+00> : vector<16x128xf32>
    %24 = tpu.matmul %21, %23, %cst_31 {dimension_numbers = #tpu.dot_dimension_numbers<[1], [0], [0], [1], [0, 0, 1, 1], [], []>} : vector<16x256xbf16>, vector<256x128xbf16>, vector<16x128xf32> -> vector<16x128xf32>
    %25 = arith.addf %18, %24 : vector<16x128xf32>
    %c0_32 = arith.constant 0 : index
    %c1_33 = arith.constant 1 : index
    %c0_34 = arith.constant 0 : index
    %c0_35 = arith.constant 0 : index
    %26 = vector.load %arg1[%c0_32, %c1_33, %c0_34, %c0_35] : memref<1x6x4x384xbf16, #tpu.memory_space<vmem>>, vector<1x4x4x256xbf16>
    %27 = vector.shape_cast %26 : vector<1x4x4x256xbf16> to vector<4x4x256xbf16>
    %28 = vector.shape_cast %27 : vector<4x4x256xbf16> to vector<16x256xbf16>
    %c2 = arith.constant 2 : index
    %c0_36 = arith.constant 0 : index
    %c0_37 = arith.constant 0 : index
    %c0_38 = arith.constant 0 : index
    %29 = vector.load %arg2[%c2, %c0_36, %c0_37, %c0_38] : memref<4x2x256x128xbf16, #tpu.memory_space<vmem>>, vector<1x1x256x128xbf16>
    %30 = vector.shape_cast %29 : vector<1x1x256x128xbf16> to vector<256x128xbf16>
    %cst_39 = arith.constant dense<0.000000e+00> : vector<16x128xf32>
    %31 = tpu.matmul %28, %30, %cst_39 {dimension_numbers = #tpu.dot_dimension_numbers<[1], [0], [0], [1], [0, 0, 1, 1], [], []>} : vector<16x256xbf16>, vector<256x128xbf16>, vector<16x128xf32> -> vector<16x128xf32>
    %c0_40 = arith.constant 0 : index
    %c2_41 = arith.constant 2 : index
    %c0_42 = arith.constant 0 : index
    %c0_43 = arith.constant 0 : index
    %32 = vector.load %arg1[%c0_40, %c2_41, %c0_42, %c0_43] : memref<1x6x4x384xbf16, #tpu.memory_space<vmem>>, vector<1x4x4x256xbf16>
    %33 = vector.shape_cast %32 : vector<1x4x4x256xbf16> to vector<4x4x256xbf16>
    %34 = vector.shape_cast %33 : vector<4x4x256xbf16> to vector<16x256xbf16>
    %c2_44 = arith.constant 2 : index
    %c1_45 = arith.constant 1 : index
    %c0_46 = arith.constant 0 : index
    %c0_47 = arith.constant 0 : index
    %35 = vector.load %arg2[%c2_44, %c1_45, %c0_46, %c0_47] : memref<4x2x256x128xbf16, #tpu.memory_space<vmem>>, vector<1x1x256x128xbf16>
    %36 = vector.shape_cast %35 : vector<1x1x256x128xbf16> to vector<256x128xbf16>
    %cst_48 = arith.constant dense<0.000000e+00> : vector<16x128xf32>
    %37 = tpu.matmul %34, %36, %cst_48 {dimension_numbers = #tpu.dot_dimension_numbers<[1], [0], [0], [1], [0, 0, 1, 1], [], []>} : vector<16x256xbf16>, vector<256x128xbf16>, vector<16x128xf32> -> vector<16x128xf32>
    %38 = arith.addf %31, %37 : vector<16x128xf32>
    %c0_49 = arith.constant 0 : index
    %c1_50 = arith.constant 1 : index
    %c0_51 = arith.constant 0 : index
    %c128_52 = arith.constant 128 : index
    %39 = vector.load %arg1[%c0_49, %c1_50, %c0_51, %c128_52] : memref<1x6x4x384xbf16, #tpu.memory_space<vmem>>, vector<1x4x4x256xbf16>
    %40 = vector.shape_cast %39 : vector<1x4x4x256xbf16> to vector<4x4x256xbf16>
    %41 = vector.shape_cast %40 : vector<4x4x256xbf16> to vector<16x256xbf16>
    %c3 = arith.constant 3 : index
    %c0_53 = arith.constant 0 : index
    %c0_54 = arith.constant 0 : index
    %c0_55 = arith.constant 0 : index
    %42 = vector.load %arg2[%c3, %c0_53, %c0_54, %c0_55] : memref<4x2x256x128xbf16, #tpu.memory_space<vmem>>, vector<1x1x256x128xbf16>
    %43 = vector.shape_cast %42 : vector<1x1x256x128xbf16> to vector<256x128xbf16>
    %cst_56 = arith.constant dense<0.000000e+00> : vector<16x128xf32>
    %44 = tpu.matmul %41, %43, %cst_56 {dimension_numbers = #tpu.dot_dimension_numbers<[1], [0], [0], [1], [0, 0, 1, 1], [], []>} : vector<16x256xbf16>, vector<256x128xbf16>, vector<16x128xf32> -> vector<16x128xf32>
    %c0_57 = arith.constant 0 : index
    %c2_58 = arith.constant 2 : index
    %c0_59 = arith.constant 0 : index
    %c128_60 = arith.constant 128 : index
    %45 = vector.load %arg1[%c0_57, %c2_58, %c0_59, %c128_60] : memref<1x6x4x384xbf16, #tpu.memory_space<vmem>>, vector<1x4x4x256xbf16>
    %46 = vector.shape_cast %45 : vector<1x4x4x256xbf16> to vector<4x4x256xbf16>
    %47 = vector.shape_cast %46 : vector<4x4x256xbf16> to vector<16x256xbf16>
    %c3_61 = arith.constant 3 : index
    %c1_62 = arith.constant 1 : index
    %c0_63 = arith.constant 0 : index
    %c0_64 = arith.constant 0 : index
    %48 = vector.load %arg2[%c3_61, %c1_62, %c0_63, %c0_64] : memref<4x2x256x128xbf16, #tpu.memory_space<vmem>>, vector<1x1x256x128xbf16>
    %49 = vector.shape_cast %48 : vector<1x1x256x128xbf16> to vector<256x128xbf16>
    %cst_65 = arith.constant dense<0.000000e+00> : vector<16x128xf32>
    %50 = tpu.matmul %47, %49, %cst_65 {dimension_numbers = #tpu.dot_dimension_numbers<[1], [0], [0], [1], [0, 0, 1, 1], [], []>} : vector<16x256xbf16>, vector<256x128xbf16>, vector<16x128xf32> -> vector<16x128xf32>
    %51 = arith.addf %44, %50 : vector<16x128xf32>
    %cst_66 = arith.constant 0.000000e+00 : f32
    %52 = vector.broadcast %cst_66 : f32 to vector<1x128xf32>
    %cst_67 = arith.constant 0.000000e+00 : f32
    %53 = vector.broadcast %cst_67 : f32 to vector<1x128xf32>
    %cst_68 = arith.constant dense<0.000000e+00> : vector<128xf32>
    %54 = vector.multi_reduction <add>, %12, %cst_68 [0] : vector<16x128xf32> to vector<128xf32>
    %55 = vector.shape_cast %54 : vector<128xf32> to vector<1x128xf32>
    %56 = arith.addf %52, %55 : vector<1x128xf32>
    %57 = arith.mulf %12, %12 : vector<16x128xf32>
    %cst_69 = arith.constant dense<0.000000e+00> : vector<128xf32>
    %58 = vector.multi_reduction <add>, %57, %cst_69 [0] : vector<16x128xf32> to vector<128xf32>
    %59 = vector.shape_cast %58 : vector<128xf32> to vector<1x128xf32>
    %60 = arith.addf %53, %59 : vector<1x128xf32>
    %cst_70 = arith.constant dense<0.000000e+00> : vector<128xf32>
    %61 = vector.multi_reduction <add>, %25, %cst_70 [0] : vector<16x128xf32> to vector<128xf32>
    %62 = vector.shape_cast %61 : vector<128xf32> to vector<1x128xf32>
    %63 = arith.addf %56, %62 : vector<1x128xf32>
    %64 = arith.mulf %25, %25 : vector<16x128xf32>
    %cst_71 = arith.constant dense<0.000000e+00> : vector<128xf32>
    %65 = vector.multi_reduction <add>, %64, %cst_71 [0] : vector<16x128xf32> to vector<128xf32>
    %66 = vector.shape_cast %65 : vector<128xf32> to vector<1x128xf32>
    %67 = arith.addf %60, %66 : vector<1x128xf32>
    %cst_72 = arith.constant dense<0.000000e+00> : vector<128xf32>
    %68 = vector.multi_reduction <add>, %38, %cst_72 [0] : vector<16x128xf32> to vector<128xf32>
    %69 = vector.shape_cast %68 : vector<128xf32> to vector<1x128xf32>
    %70 = arith.addf %63, %69 : vector<1x128xf32>
    %71 = arith.mulf %38, %38 : vector<16x128xf32>
    %cst_73 = arith.constant dense<0.000000e+00> : vector<128xf32>
    %72 = vector.multi_reduction <add>, %71, %cst_73 [0] : vector<16x128xf32> to vector<128xf32>
    %73 = vector.shape_cast %72 : vector<128xf32> to vector<1x128xf32>
    %74 = arith.addf %67, %73 : vector<1x128xf32>
    %cst_74 = arith.constant dense<0.000000e+00> : vector<128xf32>
    %75 = vector.multi_reduction <add>, %51, %cst_74 [0] : vector<16x128xf32> to vector<128xf32>
    %76 = vector.shape_cast %75 : vector<128xf32> to vector<1x128xf32>
    %77 = arith.addf %70, %76 : vector<1x128xf32>
    %78 = arith.mulf %51, %51 : vector<16x128xf32>
    %cst_75 = arith.constant dense<0.000000e+00> : vector<128xf32>
    %79 = vector.multi_reduction <add>, %78, %cst_75 [0] : vector<16x128xf32> to vector<128xf32>
    %80 = vector.shape_cast %79 : vector<128xf32> to vector<1x128xf32>
    %81 = arith.addf %74, %80 : vector<1x128xf32>
    %82 = tpu.concatenate %77, %81 in 0 : vector<1x128xf32>, vector<1x128xf32> -> vector<2x128xf32>
    %83 = vector.shape_cast %82 : vector<2x128xf32> to vector<1x2x128xf32>
    %c0_76 = arith.constant 0 : index
    %c0_77 = arith.constant 0 : index
    %c0_78 = arith.constant 0 : index
    %84 = vector.load %arg4[%c0_76, %c0_77, %c0_78] : memref<1x2x128xf32, #tpu.memory_space<vmem>>, vector<1x2x128xf32>
    tpu.vector_store %arg4[%c0_76, %c0_77, %c0_78], %83 {strides = array<i32>} : memref<1x2x128xf32, #tpu.memory_space<vmem>>, vector<1x2x128xf32>,
    %85 = arith.truncf %12 : vector<16x128xf32> to vector<16x128xbf16>
    %86 = vector.shape_cast %85 : vector<16x128xbf16> to vector<4x4x128xbf16>
    %87 = arith.truncf %25 : vector<16x128xf32> to vector<16x128xbf16>
    %88 = vector.shape_cast %87 : vector<16x128xbf16> to vector<4x4x128xbf16>
    %89 = arith.truncf %38 : vector<16x128xf32> to vector<16x128xbf16>
    %90 = vector.shape_cast %89 : vector<16x128xbf16> to vector<4x4x128xbf16>
    %91 = arith.truncf %51 : vector<16x128xf32> to vector<16x128xbf16>
    %92 = vector.shape_cast %91 : vector<16x128xbf16> to vector<4x4x128xbf16>
    %93 = tpu.concatenate %86, %88 in 2 : vector<4x4x128xbf16>, vector<4x4x128xbf16> -> vector<4x4x256xbf16>
    %94 = tpu.concatenate %90, %92 in 2 : vector<4x4x128xbf16>, vector<4x4x128xbf16> -> vector<4x4x256xbf16>
    %95 = vector.shape_cast %93 : vector<4x4x256xbf16> to vector<4x1x4x256xbf16>
    %96 = vector.shape_cast %94 : vector<4x4x256xbf16> to vector<4x1x4x256xbf16>
    %97 = tpu.concatenate %95, %96 in 1 : vector<4x1x4x256xbf16>, vector<4x1x4x256xbf16> -> vector<4x2x4x256xbf16>
    %98 = vector.shape_cast %97 : vector<4x2x4x256xbf16> to vector<1x4x2x4x256xbf16>
    %c0_79 = arith.constant 0 : index
    %c0_80 = arith.constant 0 : index
    %c0_81 = arith.constant 0 : index
    %c0_82 = arith.constant 0 : index
    %c0_83 = arith.constant 0 : index
    %99 = vector.load %arg3[%c0_79, %c0_80, %c0_81, %c0_82, %c0_83] : memref<1x4x2x4x256xbf16, #tpu.memory_space<vmem>>, vector<1x4x2x4x256xbf16>
    tpu.vector_store %arg3[%c0_79, %c0_80, %c0_81, %c0_82, %c0_83], %98 {strides = array<i32>} : memref<1x4x2x4x256xbf16, #tpu.memory_space<vmem>>, vector<1x4x2x4x256xbf16>,
    return
  }
  func.func @transform_0(%arg0: i32) -> (i32, i32, i32, i32) {
    %c0_i32 = arith.constant 0 : i32
    %c0_i32_0 = arith.constant 0 : i32
    %c0_i32_1 = arith.constant 0 : i32
    %c0_i32_2 = arith.constant 0 : i32
    return %arg0, %c0_i32, %c0_i32_0, %c0_i32_1 : i32, i32, i32, i32
  }
  func.func @transform_1(%arg0: i32) -> (i32, i32, i32, i32) {
    %c0_i32 = arith.constant 0 : i32
    %c0_i32_0 = arith.constant 0 : i32
    %c0_i32_1 = arith.constant 0 : i32
    %c0_i32_2 = arith.constant 0 : i32
    %c0_i32_3 = arith.constant 0 : i32
    return %c0_i32, %c0_i32_0, %c0_i32_1, %c0_i32_2 : i32, i32, i32, i32
  }
  func.func @transform_2(%arg0: i32) -> (i32, i32, i32, i32, i32) {
    %c0_i32 = arith.constant 0 : i32
    %c0_i32_0 = arith.constant 0 : i32
    %c0_i32_1 = arith.constant 0 : i32
    %c0_i32_2 = arith.constant 0 : i32
    %c0_i32_3 = arith.constant 0 : i32
    return %arg0, %c0_i32, %c0_i32_0, %c0_i32_1, %c0_i32_2 : i32, i32, i32, i32, i32
  }
  func.func @transform_3(%arg0: i32) -> (i32, i32, i32) {
    %c0_i32 = arith.constant 0 : i32
    %c0_i32_0 = arith.constant 0 : i32
    %c0_i32_1 = arith.constant 0 : i32
    return %arg0, %c0_i32, %c0_i32_0 : i32, i32, i32
  }
}

module attributes {stable_mosaic.version = 11 : i64} {
  func.func @_prep_kernel(%arg0: i32, %arg1: memref<1x8x8x128xbf16, #tpu.memory_space<vmem>>, %arg2: memref<1x128xf32, #tpu.memory_space<vmem>>, %arg3: memref<1x128xf32, #tpu.memory_space<vmem>>, %arg4: memref<1x10x8x384xbf16, #tpu.memory_space<vmem>>) attributes {dimension_semantics = [#tpu.dimension_semantics<parallel>], iteration_bounds = array<i64: 2>, scalar_prefetch = 0 : i64, scratch_operands = 0 : i64, tpu.core_type = #tpu.core_type<tc>, window_params = [{transform_indices = @transform_0, window_bounds = array<i64: 1, 8, 8, 128>}, {pipeline_mode = #tpu.pipeline_mode<synchronous>, transform_indices = @transform_1, window_bounds = array<i64: 1, 128>}, {pipeline_mode = #tpu.pipeline_mode<synchronous>, transform_indices = @transform_2, window_bounds = array<i64: 1, 128>}, {transform_indices = @transform_3, window_bounds = array<i64: 1, 10, 8, 384>}]} {
    %c0 = arith.constant 0 : index
    %c0_0 = arith.constant 0 : index
    %0 = vector.load %arg2[%c0, %c0_0] : memref<1x128xf32, #tpu.memory_space<vmem>>, vector<1x128xf32>
    %1 = vector.shape_cast %0 : vector<1x128xf32> to vector<1x1x1x128xf32>
    %c0_1 = arith.constant 0 : index
    %c0_2 = arith.constant 0 : index
    %2 = vector.load %arg3[%c0_1, %c0_2] : memref<1x128xf32, #tpu.memory_space<vmem>>, vector<1x128xf32>
    %3 = vector.shape_cast %2 : vector<1x128xf32> to vector<1x1x1x128xf32>
    %c0_3 = arith.constant 0 : index
    %c0_4 = arith.constant 0 : index
    %c0_5 = arith.constant 0 : index
    %c0_6 = arith.constant 0 : index
    %4 = vector.load %arg1[%c0_3, %c0_4, %c0_5, %c0_6] : memref<1x8x8x128xbf16, #tpu.memory_space<vmem>>, vector<1x8x8x128xbf16>
    %5 = arith.extf %4 : vector<1x8x8x128xbf16> to vector<1x8x8x128xf32>
    %6 = vector.broadcast %1 : vector<1x1x1x128xf32> to vector<1x8x8x128xf32>
    %7 = arith.mulf %5, %6 : vector<1x8x8x128xf32>
    %8 = vector.broadcast %3 : vector<1x1x1x128xf32> to vector<1x8x8x128xf32>
    %9 = arith.addf %7, %8 : vector<1x8x8x128xf32>
    %cst = arith.constant 0.000000e+00 : f32
    %10 = vector.broadcast %cst : f32 to vector<1x8x8x128xf32>
    %11 = arith.maximumf %9, %10 : vector<1x8x8x128xf32>
    %12 = arith.truncf %11 : vector<1x8x8x128xf32> to vector<1x8x8x128xbf16>
    %cst_7 = arith.constant 0.000000e+00 : bf16
    %13 = vector.broadcast %cst_7 : bf16 to vector<1x8x1x128xbf16>
    %14 = vector.extract_strided_slice %12 {offsets = [0, 0, 0, 0], sizes = [1, 8, 7, 128], strides = [1, 1, 1, 1]} : vector<1x8x8x128xbf16> to vector<1x8x7x128xbf16>
    %15 = tpu.concatenate %13, %14 in 2 : vector<1x8x1x128xbf16>, vector<1x8x7x128xbf16> -> vector<1x8x8x128xbf16>
    %16 = vector.extract_strided_slice %12 {offsets = [0, 0, 1, 0], sizes = [1, 8, 7, 128], strides = [1, 1, 1, 1]} : vector<1x8x8x128xbf16> to vector<1x8x7x128xbf16>
    %17 = tpu.concatenate %16, %13 in 2 : vector<1x8x7x128xbf16>, vector<1x8x1x128xbf16> -> vector<1x8x8x128xbf16>
    %18 = tpu.concatenate %15, %12, %17 in 3 : vector<1x8x8x128xbf16>, vector<1x8x8x128xbf16>, vector<1x8x8x128xbf16> -> vector<1x8x8x384xbf16>
    %cst_8 = arith.constant 0.000000e+00 : bf16
    %19 = vector.broadcast %cst_8 : bf16 to vector<1x1x8x384xbf16>
    %20 = tpu.concatenate %19, %18, %19 in 1 : vector<1x1x8x384xbf16>, vector<1x8x8x384xbf16>, vector<1x1x8x384xbf16> -> vector<1x10x8x384xbf16>
    %c0_9 = arith.constant 0 : index
    %c0_10 = arith.constant 0 : index
    %c0_11 = arith.constant 0 : index
    %c0_12 = arith.constant 0 : index
    %21 = vector.load %arg4[%c0_9, %c0_10, %c0_11, %c0_12] : memref<1x10x8x384xbf16, #tpu.memory_space<vmem>>, vector<1x10x8x384xbf16>
    tpu.vector_store %arg4[%c0_9, %c0_10, %c0_11, %c0_12], %20 {strides = array<i32>} : memref<1x10x8x384xbf16, #tpu.memory_space<vmem>>, vector<1x10x8x384xbf16>,
    return
  }
  func.func @transform_0(%arg0: i32) -> (i32, i32, i32, i32) {
    %c0_i32 = arith.constant 0 : i32
    %c0_i32_0 = arith.constant 0 : i32
    %c0_i32_1 = arith.constant 0 : i32
    %c0_i32_2 = arith.constant 0 : i32
    return %arg0, %c0_i32, %c0_i32_0, %c0_i32_1 : i32, i32, i32, i32
  }
  func.func @transform_1(%arg0: i32) -> (i32, i32) {
    %c0_i32 = arith.constant 0 : i32
    %c0_i32_0 = arith.constant 0 : i32
    %c0_i32_1 = arith.constant 0 : i32
    return %c0_i32, %c0_i32_0 : i32, i32
  }
  func.func @transform_2(%arg0: i32) -> (i32, i32) {
    %c0_i32 = arith.constant 0 : i32
    %c0_i32_0 = arith.constant 0 : i32
    %c0_i32_1 = arith.constant 0 : i32
    return %c0_i32, %c0_i32_0 : i32, i32
  }
  func.func @transform_3(%arg0: i32) -> (i32, i32, i32, i32) {
    %c0_i32 = arith.constant 0 : i32
    %c0_i32_0 = arith.constant 0 : i32
    %c0_i32_1 = arith.constant 0 : i32
    %c0_i32_2 = arith.constant 0 : i32
    return %arg0, %c0_i32, %c0_i32_0, %c0_i32_1 : i32, i32, i32, i32
  }
}

module attributes {stable_mosaic.version = 11 : i64} {
  func.func @_deconv_kernel(%arg0: i32, %arg1: memref<1x10x8x384xbf16, #tpu.memory_space<vmem>>, %arg2: memref<4x2x256x128xbf16, #tpu.memory_space<vmem>>, %arg3: memref<1x8x2x8x256xbf16, #tpu.memory_space<vmem>>) attributes {dimension_semantics = [#tpu.dimension_semantics<parallel>], iteration_bounds = array<i64: 2>, scalar_prefetch = 0 : i64, scratch_operands = 0 : i64, tpu.core_type = #tpu.core_type<tc>, window_params = [{transform_indices = @transform_0, window_bounds = array<i64: 1, 10, 8, 384>}, {pipeline_mode = #tpu.pipeline_mode<synchronous>, transform_indices = @transform_1, window_bounds = array<i64: 4, 2, 256, 128>}, {transform_indices = @transform_2, window_bounds = array<i64: 1, 8, 2, 8, 256>}]} {
    %c0 = arith.constant 0 : index
    %c0_0 = arith.constant 0 : index
    %c0_1 = arith.constant 0 : index
    %c0_2 = arith.constant 0 : index
    %0 = vector.load %arg1[%c0, %c0_0, %c0_1, %c0_2] : memref<1x10x8x384xbf16, #tpu.memory_space<vmem>>, vector<1x8x8x256xbf16>
    %1 = vector.shape_cast %0 : vector<1x8x8x256xbf16> to vector<8x8x256xbf16>
    %2 = vector.shape_cast %1 : vector<8x8x256xbf16> to vector<64x256xbf16>
    %c0_3 = arith.constant 0 : index
    %c0_4 = arith.constant 0 : index
    %c0_5 = arith.constant 0 : index
    %c0_6 = arith.constant 0 : index
    %3 = vector.load %arg2[%c0_3, %c0_4, %c0_5, %c0_6] : memref<4x2x256x128xbf16, #tpu.memory_space<vmem>>, vector<1x1x256x128xbf16>
    %4 = vector.shape_cast %3 : vector<1x1x256x128xbf16> to vector<256x128xbf16>
    %cst = arith.constant dense<0.000000e+00> : vector<64x128xf32>
    %5 = tpu.matmul %2, %4, %cst {dimension_numbers = #tpu.dot_dimension_numbers<[1], [0], [0], [1], [0, 0, 1, 1], [], []>} : vector<64x256xbf16>, vector<256x128xbf16>, vector<64x128xf32> -> vector<64x128xf32>
    %c0_7 = arith.constant 0 : index
    %c1 = arith.constant 1 : index
    %c0_8 = arith.constant 0 : index
    %c0_9 = arith.constant 0 : index
    %6 = vector.load %arg1[%c0_7, %c1, %c0_8, %c0_9] : memref<1x10x8x384xbf16, #tpu.memory_space<vmem>>, vector<1x8x8x256xbf16>
    %7 = vector.shape_cast %6 : vector<1x8x8x256xbf16> to vector<8x8x256xbf16>
    %8 = vector.shape_cast %7 : vector<8x8x256xbf16> to vector<64x256xbf16>
    %c0_10 = arith.constant 0 : index
    %c1_11 = arith.constant 1 : index
    %c0_12 = arith.constant 0 : index
    %c0_13 = arith.constant 0 : index
    %9 = vector.load %arg2[%c0_10, %c1_11, %c0_12, %c0_13] : memref<4x2x256x128xbf16, #tpu.memory_space<vmem>>, vector<1x1x256x128xbf16>
    %10 = vector.shape_cast %9 : vector<1x1x256x128xbf16> to vector<256x128xbf16>
    %cst_14 = arith.constant dense<0.000000e+00> : vector<64x128xf32>
    %11 = tpu.matmul %8, %10, %cst_14 {dimension_numbers = #tpu.dot_dimension_numbers<[1], [0], [0], [1], [0, 0, 1, 1], [], []>} : vector<64x256xbf16>, vector<256x128xbf16>, vector<64x128xf32> -> vector<64x128xf32>
    %12 = arith.addf %5, %11 : vector<64x128xf32>
    %c0_15 = arith.constant 0 : index
    %c0_16 = arith.constant 0 : index
    %c0_17 = arith.constant 0 : index
    %c128 = arith.constant 128 : index
    %13 = vector.load %arg1[%c0_15, %c0_16, %c0_17, %c128] : memref<1x10x8x384xbf16, #tpu.memory_space<vmem>>, vector<1x8x8x256xbf16>
    %14 = vector.shape_cast %13 : vector<1x8x8x256xbf16> to vector<8x8x256xbf16>
    %15 = vector.shape_cast %14 : vector<8x8x256xbf16> to vector<64x256xbf16>
    %c1_18 = arith.constant 1 : index
    %c0_19 = arith.constant 0 : index
    %c0_20 = arith.constant 0 : index
    %c0_21 = arith.constant 0 : index
    %16 = vector.load %arg2[%c1_18, %c0_19, %c0_20, %c0_21] : memref<4x2x256x128xbf16, #tpu.memory_space<vmem>>, vector<1x1x256x128xbf16>
    %17 = vector.shape_cast %16 : vector<1x1x256x128xbf16> to vector<256x128xbf16>
    %cst_22 = arith.constant dense<0.000000e+00> : vector<64x128xf32>
    %18 = tpu.matmul %15, %17, %cst_22 {dimension_numbers = #tpu.dot_dimension_numbers<[1], [0], [0], [1], [0, 0, 1, 1], [], []>} : vector<64x256xbf16>, vector<256x128xbf16>, vector<64x128xf32> -> vector<64x128xf32>
    %c0_23 = arith.constant 0 : index
    %c1_24 = arith.constant 1 : index
    %c0_25 = arith.constant 0 : index
    %c128_26 = arith.constant 128 : index
    %19 = vector.load %arg1[%c0_23, %c1_24, %c0_25, %c128_26] : memref<1x10x8x384xbf16, #tpu.memory_space<vmem>>, vector<1x8x8x256xbf16>
    %20 = vector.shape_cast %19 : vector<1x8x8x256xbf16> to vector<8x8x256xbf16>
    %21 = vector.shape_cast %20 : vector<8x8x256xbf16> to vector<64x256xbf16>
    %c1_27 = arith.constant 1 : index
    %c1_28 = arith.constant 1 : index
    %c0_29 = arith.constant 0 : index
    %c0_30 = arith.constant 0 : index
    %22 = vector.load %arg2[%c1_27, %c1_28, %c0_29, %c0_30] : memref<4x2x256x128xbf16, #tpu.memory_space<vmem>>, vector<1x1x256x128xbf16>
    %23 = vector.shape_cast %22 : vector<1x1x256x128xbf16> to vector<256x128xbf16>
    %cst_31 = arith.constant dense<0.000000e+00> : vector<64x128xf32>
    %24 = tpu.matmul %21, %23, %cst_31 {dimension_numbers = #tpu.dot_dimension_numbers<[1], [0], [0], [1], [0, 0, 1, 1], [], []>} : vector<64x256xbf16>, vector<256x128xbf16>, vector<64x128xf32> -> vector<64x128xf32>
    %25 = arith.addf %18, %24 : vector<64x128xf32>
    %c0_32 = arith.constant 0 : index
    %c1_33 = arith.constant 1 : index
    %c0_34 = arith.constant 0 : index
    %c0_35 = arith.constant 0 : index
    %26 = vector.load %arg1[%c0_32, %c1_33, %c0_34, %c0_35] : memref<1x10x8x384xbf16, #tpu.memory_space<vmem>>, vector<1x8x8x256xbf16>
    %27 = vector.shape_cast %26 : vector<1x8x8x256xbf16> to vector<8x8x256xbf16>
    %28 = vector.shape_cast %27 : vector<8x8x256xbf16> to vector<64x256xbf16>
    %c2 = arith.constant 2 : index
    %c0_36 = arith.constant 0 : index
    %c0_37 = arith.constant 0 : index
    %c0_38 = arith.constant 0 : index
    %29 = vector.load %arg2[%c2, %c0_36, %c0_37, %c0_38] : memref<4x2x256x128xbf16, #tpu.memory_space<vmem>>, vector<1x1x256x128xbf16>
    %30 = vector.shape_cast %29 : vector<1x1x256x128xbf16> to vector<256x128xbf16>
    %cst_39 = arith.constant dense<0.000000e+00> : vector<64x128xf32>
    %31 = tpu.matmul %28, %30, %cst_39 {dimension_numbers = #tpu.dot_dimension_numbers<[1], [0], [0], [1], [0, 0, 1, 1], [], []>} : vector<64x256xbf16>, vector<256x128xbf16>, vector<64x128xf32> -> vector<64x128xf32>
    %c0_40 = arith.constant 0 : index
    %c2_41 = arith.constant 2 : index
    %c0_42 = arith.constant 0 : index
    %c0_43 = arith.constant 0 : index
    %32 = vector.load %arg1[%c0_40, %c2_41, %c0_42, %c0_43] : memref<1x10x8x384xbf16, #tpu.memory_space<vmem>>, vector<1x8x8x256xbf16>
    %33 = vector.shape_cast %32 : vector<1x8x8x256xbf16> to vector<8x8x256xbf16>
    %34 = vector.shape_cast %33 : vector<8x8x256xbf16> to vector<64x256xbf16>
    %c2_44 = arith.constant 2 : index
    %c1_45 = arith.constant 1 : index
    %c0_46 = arith.constant 0 : index
    %c0_47 = arith.constant 0 : index
    %35 = vector.load %arg2[%c2_44, %c1_45, %c0_46, %c0_47] : memref<4x2x256x128xbf16, #tpu.memory_space<vmem>>, vector<1x1x256x128xbf16>
    %36 = vector.shape_cast %35 : vector<1x1x256x128xbf16> to vector<256x128xbf16>
    %cst_48 = arith.constant dense<0.000000e+00> : vector<64x128xf32>
    %37 = tpu.matmul %34, %36, %cst_48 {dimension_numbers = #tpu.dot_dimension_numbers<[1], [0], [0], [1], [0, 0, 1, 1], [], []>} : vector<64x256xbf16>, vector<256x128xbf16>, vector<64x128xf32> -> vector<64x128xf32>
    %38 = arith.addf %31, %37 : vector<64x128xf32>
    %c0_49 = arith.constant 0 : index
    %c1_50 = arith.constant 1 : index
    %c0_51 = arith.constant 0 : index
    %c128_52 = arith.constant 128 : index
    %39 = vector.load %arg1[%c0_49, %c1_50, %c0_51, %c128_52] : memref<1x10x8x384xbf16, #tpu.memory_space<vmem>>, vector<1x8x8x256xbf16>
    %40 = vector.shape_cast %39 : vector<1x8x8x256xbf16> to vector<8x8x256xbf16>
    %41 = vector.shape_cast %40 : vector<8x8x256xbf16> to vector<64x256xbf16>
    %c3 = arith.constant 3 : index
    %c0_53 = arith.constant 0 : index
    %c0_54 = arith.constant 0 : index
    %c0_55 = arith.constant 0 : index
    %42 = vector.load %arg2[%c3, %c0_53, %c0_54, %c0_55] : memref<4x2x256x128xbf16, #tpu.memory_space<vmem>>, vector<1x1x256x128xbf16>
    %43 = vector.shape_cast %42 : vector<1x1x256x128xbf16> to vector<256x128xbf16>
    %cst_56 = arith.constant dense<0.000000e+00> : vector<64x128xf32>
    %44 = tpu.matmul %41, %43, %cst_56 {dimension_numbers = #tpu.dot_dimension_numbers<[1], [0], [0], [1], [0, 0, 1, 1], [], []>} : vector<64x256xbf16>, vector<256x128xbf16>, vector<64x128xf32> -> vector<64x128xf32>
    %c0_57 = arith.constant 0 : index
    %c2_58 = arith.constant 2 : index
    %c0_59 = arith.constant 0 : index
    %c128_60 = arith.constant 128 : index
    %45 = vector.load %arg1[%c0_57, %c2_58, %c0_59, %c128_60] : memref<1x10x8x384xbf16, #tpu.memory_space<vmem>>, vector<1x8x8x256xbf16>
    %46 = vector.shape_cast %45 : vector<1x8x8x256xbf16> to vector<8x8x256xbf16>
    %47 = vector.shape_cast %46 : vector<8x8x256xbf16> to vector<64x256xbf16>
    %c3_61 = arith.constant 3 : index
    %c1_62 = arith.constant 1 : index
    %c0_63 = arith.constant 0 : index
    %c0_64 = arith.constant 0 : index
    %48 = vector.load %arg2[%c3_61, %c1_62, %c0_63, %c0_64] : memref<4x2x256x128xbf16, #tpu.memory_space<vmem>>, vector<1x1x256x128xbf16>
    %49 = vector.shape_cast %48 : vector<1x1x256x128xbf16> to vector<256x128xbf16>
    %cst_65 = arith.constant dense<0.000000e+00> : vector<64x128xf32>
    %50 = tpu.matmul %47, %49, %cst_65 {dimension_numbers = #tpu.dot_dimension_numbers<[1], [0], [0], [1], [0, 0, 1, 1], [], []>} : vector<64x256xbf16>, vector<256x128xbf16>, vector<64x128xf32> -> vector<64x128xf32>
    %51 = arith.addf %44, %50 : vector<64x128xf32>
    %52 = math.tanh %12 : vector<64x128xf32>
    %53 = arith.truncf %52 : vector<64x128xf32> to vector<64x128xbf16>
    %54 = vector.shape_cast %53 : vector<64x128xbf16> to vector<8x8x128xbf16>
    %55 = math.tanh %25 : vector<64x128xf32>
    %56 = arith.truncf %55 : vector<64x128xf32> to vector<64x128xbf16>
    %57 = vector.shape_cast %56 : vector<64x128xbf16> to vector<8x8x128xbf16>
    %58 = math.tanh %38 : vector<64x128xf32>
    %59 = arith.truncf %58 : vector<64x128xf32> to vector<64x128xbf16>
    %60 = vector.shape_cast %59 : vector<64x128xbf16> to vector<8x8x128xbf16>
    %61 = math.tanh %51 : vector<64x128xf32>
    %62 = arith.truncf %61 : vector<64x128xf32> to vector<64x128xbf16>
    %63 = vector.shape_cast %62 : vector<64x128xbf16> to vector<8x8x128xbf16>
    %64 = tpu.concatenate %54, %57 in 2 : vector<8x8x128xbf16>, vector<8x8x128xbf16> -> vector<8x8x256xbf16>
    %65 = tpu.concatenate %60, %63 in 2 : vector<8x8x128xbf16>, vector<8x8x128xbf16> -> vector<8x8x256xbf16>
    %66 = vector.shape_cast %64 : vector<8x8x256xbf16> to vector<8x1x8x256xbf16>
    %67 = vector.shape_cast %65 : vector<8x8x256xbf16> to vector<8x1x8x256xbf16>
    %68 = tpu.concatenate %66, %67 in 1 : vector<8x1x8x256xbf16>, vector<8x1x8x256xbf16> -> vector<8x2x8x256xbf16>
    %69 = vector.shape_cast %68 : vector<8x2x8x256xbf16> to vector<1x8x2x8x256xbf16>
    %c0_66 = arith.constant 0 : index
    %c0_67 = arith.constant 0 : index
    %c0_68 = arith.constant 0 : index
    %c0_69 = arith.constant 0 : index
    %c0_70 = arith.constant 0 : index
    %70 = vector.load %arg3[%c0_66, %c0_67, %c0_68, %c0_69, %c0_70] : memref<1x8x2x8x256xbf16, #tpu.memory_space<vmem>>, vector<1x8x2x8x256xbf16>
    tpu.vector_store %arg3[%c0_66, %c0_67, %c0_68, %c0_69, %c0_70], %69 {strides = array<i32>} : memref<1x8x2x8x256xbf16, #tpu.memory_space<vmem>>, vector<1x8x2x8x256xbf16>,
    return
  }
  func.func @transform_0(%arg0: i32) -> (i32, i32, i32, i32) {
    %c0_i32 = arith.constant 0 : i32
    %c0_i32_0 = arith.constant 0 : i32
    %c0_i32_1 = arith.constant 0 : i32
    %c0_i32_2 = arith.constant 0 : i32
    return %arg0, %c0_i32, %c0_i32_0, %c0_i32_1 : i32, i32, i32, i32
  }
  func.func @transform_1(%arg0: i32) -> (i32, i32, i32, i32) {
    %c0_i32 = arith.constant 0 : i32
    %c0_i32_0 = arith.constant 0 : i32
    %c0_i32_1 = arith.constant 0 : i32
    %c0_i32_2 = arith.constant 0 : i32
    %c0_i32_3 = arith.constant 0 : i32
    return %c0_i32, %c0_i32_0, %c0_i32_1, %c0_i32_2 : i32, i32, i32, i32
  }
  func.func @transform_2(%arg0: i32) -> (i32, i32, i32, i32, i32) {
    %c0_i32 = arith.constant 0 : i32
    %c0_i32_0 = arith.constant 0 : i32
    %c0_i32_1 = arith.constant 0 : i32
    %c0_i32_2 = arith.constant 0 : i32
    %c0_i32_3 = arith.constant 0 : i32
    return %arg0, %c0_i32, %c0_i32_0, %c0_i32_1, %c0_i32_2 : i32, i32, i32, i32, i32
  }
}

</mosaic_0001>

<llo_original>
// kernel: decoder_forward.6
$region0: #{decoder_forward.6}
  #allocation0 [shape = 'u32[]', space=smem, size = 0x4, offset = 0x4, fixed_abs, tag = 'smem constant byte address 0x4 - core index']
  #allocation1 [shape = 'u32[144,128]{1,0:T(1,128)}', space=vmem, size = 0x12000, scoped, tag = 'internal scratch']
  %s0 = inlined_call_operand.vmem [shape: bf16[2,4,4,128], index: 0, kind: input, shape index: {}]
  %s1 = inlined_call_operand.vmem [shape: f32[1,128], index: 1, kind: input, shape index: {}]
  %s2 = inlined_call_operand.vmem [shape: f32[1,128], index: 2, kind: input, shape index: {}]
  %s3 = inlined_call_operand.vmem [shape: bf16[2,6,4,384], index: 3, kind: output, shape index: {}]
  %s4 = sld [smem:[#allocation0]]
  $region45: #{decoder_forward.6} parent=0
    _
  %s6 = ssub.s32 1, %s4
  %s7 = scalar_select 0, %s6, %s4
  loop: start=0, step=1, limit=4
  $region2: #{decoder_forward.6} parent=0 // loop_pre_header
    _
  $region3: #{decoder_forward.6} parent=0 // loop_header
    %s9 = sphi 0, %s13
    %p10 = scmp.ge.s32.totalorder %s9, 4
    %s19 = sphi 0, %s21
    %s22 = sphi 0, %s19
    %s23 = sphi 0, %s22
    %s39 = sphi 0, %s23
    %s43 = sphi 0, %s43
    %s45 = sphi 0, %s43
    %s46 = sphi 0, %s45
    %s60 = sphi 0, %s46
    %s64 = sphi 0, %s64
    %s66 = sphi 0, %s64
    %s67 = sphi 0, %s66
    %s81 = sphi 0, %s67
    %s87 = sphi 0, %s89
    %s90 = sphi 0, %s87
    %s91 = sphi 0, %s90
    %s107 = sphi 0, %s91
  $region4: #{decoder_forward.6} parent=0 // loop_header_branch
    %12 = sbr.rel (%p10) target = $region8
  $region5: #{decoder_forward.6} parent=0 // loop_body
    %s14 = ssub.s32 %s9, 1
    %s15 = ssub.s32 %s9, 2
    %s16 = sadd.s32 %s9, 1
    %s17 = ssub.s32 %s9, %s16
    %p18 = scmp.eq.s32.totalorder %s17, 0
    %s20 = sadd.s32 %s19, 1
    %s21 = scalar_select %p18, %s19, %s20
    %p24 = pneg %p18
    %p25 = scmp.eq.s32.totalorder %s9, 1
    %p26 = por %p24, %p25
    %p27 = scmp.ne.s32.totalorder %s19, %s22
    %p28 = scmp.eq.s32.totalorder %s9, 0
    %p29 = por %p27, %p28
    %p30 = scmp.ne.s32.totalorder %s19, %s22
    %p31 = scmp.eq.s32.totalorder %s14, 1
    %p32 = por %p30, %p31
    %p33 = scmp.ne.s32.totalorder %s22, %s23
    %p34 = scmp.eq.s32.totalorder %s14, 0
    %p35 = por %p33, %p34
    %p36 = scmp.ne.s32.totalorder %s22, %s23
    %p37 = scmp.eq.s32.totalorder %s15, 1
    %p38 = por %p36, %p37
    %p40 = scmp.ne.s32.totalorder %s23, %s39
    %p41 = scmp.eq.s32.totalorder %s15, 0
    %p42 = por %p40, %p41
    %s44 = sadd.s32 %s43, 1
    %p47 = scmp.eq.s32.totalorder %s9, 1
    %p48 = scmp.ne.s32.totalorder %s43, %s45
    %p49 = scmp.eq.s32.totalorder %s9, 0
    %p50 = por %p48, %p49
    %p51 = scmp.ne.s32.totalorder %s43, %s45
    %p52 = scmp.eq.s32.totalorder %s14, 1
    %p53 = por %p51, %p52
    %p54 = scmp.ne.s32.totalorder %s45, %s46
    %p55 = scmp.eq.s32.totalorder %s14, 0
    %p56 = por %p54, %p55
    %p57 = scmp.ne.s32.totalorder %s45, %s46
    %p58 = scmp.eq.s32.totalorder %s15, 1
    %p59 = por %p57, %p58
    %p61 = scmp.ne.s32.totalorder %s46, %s60
    %p62 = scmp.eq.s32.totalorder %s15, 0
    %p63 = por %p61, %p62
    %s65 = sadd.s32 %s64, 1
    %p68 = scmp.eq.s32.totalorder %s9, 1
    %p69 = scmp.ne.s32.totalorder %s64, %s66
    %p70 = scmp.eq.s32.totalorder %s9, 0
    %p71 = por %p69, %p70
    %p72 = scmp.ne.s32.totalorder %s64, %s66
    %p73 = scmp.eq.s32.totalorder %s14, 1
    %p74 = por %p72, %p73
    %p75 = scmp.ne.s32.totalorder %s66, %s67
    %p76 = scmp.eq.s32.totalorder %s14, 0
    %p77 = por %p75, %p76
    %p78 = scmp.ne.s32.totalorder %s66, %s67
    %p79 = scmp.eq.s32.totalorder %s15, 1
    %p80 = por %p78, %p79
    %p82 = scmp.ne.s32.totalorder %s67, %s81
    %p83 = scmp.eq.s32.totalorder %s15, 0
    %p84 = por %p82, %p83
    %s85 = ssub.s32 %s9, %s16
    %p86 = scmp.eq.s32.totalorder %s85, 0
    %s88 = sadd.s32 %s87, 1
    %s89 = scalar_select %p86, %s87, %s88
    %p92 = pneg %p86
    %p93 = scmp.eq.s32.totalorder %s9, 1
    %p94 = por %p92, %p93
    %p95 = scmp.ne.s32.totalorder %s87, %s90
    %p96 = scmp.eq.s32.totalorder %s9, 0
    %p97 = por %p95, %p96
    %p98 = scmp.ne.s32.totalorder %s87, %s90
    %p99 = scmp.eq.s32.totalorder %s14, 1
    %p100 = por %p98, %p99
    %p101 = scmp.ne.s32.totalorder %s90, %s91
    %p102 = scmp.eq.s32.totalorder %s14, 0
    %p103 = por %p101, %p102
    %p104 = scmp.ne.s32.totalorder %s90, %s91
    %p105 = scmp.eq.s32.totalorder %s15, 1
    %p106 = por %p104, %p105
    %p108 = scmp.ne.s32.totalorder %s91, %s107
    %p109 = scmp.eq.s32.totalorder %s15, 0
    %p110 = por %p108, %p109
    %p111 = scmp.le.s32.totalorder 1, %s9
    %p112 = scmp.lt.s32.totalorder %s9, 3
    %p113 = pnand %p111, %p112
    %p114 = pneg %p113
    // Predicated region
    $region9: #{decoder_forward.6} parent=5 // pred_check
      _
    $region10: #{decoder_forward.6} parent=5 // pred_check_branch
      %116 = sbr.rel (%p113) target = $region12
    $region11: #{decoder_forward.6} parent=5 // pred_region
      %s117 = ssub.s32 %s9, 1
      // Predicated region
      $region13: #{decoder_forward.6} parent=11 // pred_check
        %p118 = pneg %p56
      $region14: #{decoder_forward.6} parent=11 // pred_check_branch
        %120 = sbr.rel (%p118) target = $region16
      $region15: #{decoder_forward.6} parent=11 // pred_region
        _
      $region16: #{decoder_forward.6} parent=11 // pred_fallthru
        _
      // Predicated region
      $region17: #{decoder_forward.6} parent=11 // pred_check
        %p121 = pneg %p77
      $region18: #{decoder_forward.6} parent=11 // pred_check_branch
        %123 = sbr.rel (%p121) target = $region20
      $region19: #{decoder_forward.6} parent=11 // pred_region
        _
      $region20: #{decoder_forward.6} parent=11 // pred_fallthru
        _
    $region12: #{decoder_forward.6} parent=5 // pred_fallthru
      _
    %p124 = scmp.lt.s32.totalorder %s9, 2
    // Predicated region
    $region21: #{decoder_forward.6} parent=5 // pred_check
      %p125 = pneg %p124
    $region22: #{decoder_forward.6} parent=5 // pred_check_branch
      %127 = sbr.rel (%p125) target = $region24
    $region23: #{decoder_forward.6} parent=5 // pred_region
      // Predicated region
      $region25: #{decoder_forward.6} parent=23 // pred_check
        %p128 = pneg %p29
      $region26: #{decoder_forward.6} parent=23 // pred_check_branch
        %130 = sbr.rel (%p128) target = $region28
      $region27: #{decoder_forward.6} parent=23 // pred_region
        %p131 = scmp.lt.s32.totalorder %s9, 1
        %s132 = scalar_select %p131, %s9, 1
        %s133 = smul.addr %s132, 4
        %s134 = smul.addr %s133, 2
        %s135 = scalar_lea.vmem %s0, %s134
      $region28: #{decoder_forward.6} parent=23 // pred_fallthru
        _
    $region24: #{decoder_forward.6} parent=5 // pred_fallthru
      _
    %p136 = scmp.le.s32.totalorder 1, %s9
    %p137 = scmp.lt.s32.totalorder %s9, 3
    %p138 = pnand %p136, %p137
    %p139 = pneg %p138
    // Predicated region
    $region29: #{decoder_forward.6} parent=5 // pred_check
      _
    $region30: #{decoder_forward.6} parent=5 // pred_check_branch
      %141 = sbr.rel (%p138) target = $region32
    $region31: #{decoder_forward.6} parent=5 // pred_region
      %s142 = ssub.s32 %s9, 1
      %p143 = scmp.lt.s32.totalorder %s14, 1
      %s144 = scalar_select %p143, %s14, 1
      %s145 = smul.addr %s144, 4
      %s146 = smul.addr %s145, 2
      %s147 = scalar_lea.vmem %s0, %s146
      %p148 = pneg %p35
      %p149 = pneg %p32
      %p150 = pneg %p56
      %p151 = pneg %p53
      %p152 = pneg %p77
      %p153 = pneg %p74
      %p154 = pneg %p103
      %p155 = pneg %p100
      %p156 = scmp.lt.s32.totalorder %s14, 1
      %s157 = scalar_select %p156, %s14, 1
      %s158 = smul.addr %s157, 18
      %s159 = smul.addr %s158, 2
      %s160 = scalar_lea.vmem %s3, %s159
      %p161 = scmp.lt.s32.totalorder %s14, 1
      %s162 = scalar_select %p161, %s14, 1
      %s163 = smul.addr %s162, 4
      %s164 = smul.addr %s163, 2
      %s165 = scalar_lea.vmem %s0, %s164
      %p166 = scmp.lt.s32.totalorder %s14, 1
      %s167 = scalar_select %p166, %s14, 1
      %s168 = smul.addr %s167, 18
      %s169 = smul.addr %s168, 2
      %s170 = scalar_lea.vmem %s3, %s169
      %v172 = vld [vmem:[%s1] sm:$0x1]
      %v173 = vld [vmem:[%s2] sm:$0x1]
      %v174 = vld [vmem:[%s165] sm:$0x3]
      %v175 = vld [vmem:[%s165 + $0x2] sm:$0x3]
      %v176 = vld [vmem:[%s165 + $0x4] sm:$0x3]
      %v177 = vld [vmem:[%s165 + $0x6] sm:$0x3]
      %v178 = vunpack.c.l.bf16 %v174
      %v179 = vunpack.c.l.bf16 %v175
      %v180 = vunpack.c.l.bf16 %v176
      %v181 = vunpack.c.l.bf16 %v177
      %v183 = vlaneseq
      %v184 = vshrl.u32 %v183, 7
      %v185 = vsub.s32 0, %v184
      %v186 = vrot.slane %v172, %v185
      %v188 = vmul.f32 %v178, %v186
      %v189 = vmul.f32 %v179, %v186
      %v190 = vmul.f32 %v180, %v186
      %v191 = vmul.f32 %v181, %v186
      %v193 = vlaneseq
      %v194 = vshrl.u32 %v193, 7
      %v195 = vsub.s32 0, %v194
      %v196 = vrot.slane %v173, %v195
      %v198 = vadd.f32 %v188, %v196
      %v199 = vadd.f32 %v189, %v196
      %v200 = vadd.f32 %v190, %v196
      %v201 = vadd.f32 %v191, %v196
      %v202 = vmax.f32 %v198, 0.0
      %v203 = vmax.f32 %v199, 0.0
      %v204 = vmax.f32 %v200, 0.0
      %v205 = vmax.f32 %v201, 0.0
      %v206 = vpack.c.bf16 %v202, %v202
      %v207 = vpack.c.bf16 %v203, %v203
      %v208 = vpack.c.bf16 %v204, %v204
      %v209 = vpack.c.bf16 %v205, %v205
      %v211 = vshrl.u32 %v206, 16
      %v213 = vrot.slane %v211, 7
      %v214 = vshll.u32 %v206, 16
      %v216 = vor.u32 %v213, %v214
      %v218 = vshrl.u32 %v207, 16
      %v220 = vrot.slane %v218, 7
      %v221 = vshll.u32 %v207, 16
      %v223 = vor.u32 %v220, %v221
      %v225 = vshrl.u32 %v208, 16
      %v227 = vrot.slane %v225, 7
      %v228 = vshll.u32 %v208, 16
      %v230 = vor.u32 %v227, %v228
      %v232 = vshrl.u32 %v209, 16
      %v234 = vrot.slane %v232, 7
      %v235 = vshll.u32 %v209, 16
      %v237 = vor.u32 %v234, %v235
      %vm242 = vcmask 1040384
      %vm243 = vsmask.f32 256
      %vm244 = vmand %vm242, %vm243
      %v245 = vsel %vm244, 0, %v216
      %v246 = vsel %vm244, 0, %v223
      %v247 = vsel %vm244, 0, %v230
      %v248 = vsel %vm244, 0, %v237
      %v249 = vrot.slane %v214, 1
      %v250 = vor.u32 %v211, %v249
      %v251 = vrot.slane %v221, 1
      %v252 = vor.u32 %v218, %v251
      %v253 = vrot.slane %v228, 1
      %v254 = vor.u32 %v225, %v253
      %v255 = vrot.slane %v235, 1
      %v256 = vor.u32 %v232, %v255
      %vm261 = vcmask 1041408
      %vm262 = vsmask.f32 1280
      %vm263 = vmand %vm261, %vm262
      %v264 = vsel %vm263, %v250, 0
      %v265 = vsel %vm263, %v252, 0
      %v266 = vsel %vm263, %v254, 0
      %v267 = vsel %vm263, %v256, 0
      %v281 = vcombine.low 0, 0
      %v283 = vunpack.c.l.s4 1983009808
      %v284 = vunpack.c.0.s8 %v283
      %v285 = vlaneseq
      %v286 = vshrl.u32 %v285, 7
      %v287 = vsub.s32 %v284, %v286
      %v288 = vrot.slane %v281, %v287
      %v290 = vunpack.c.l.s4 1983009808
      %v291 = vunpack.c.0.s8 %v290
      %v292 = vlaneseq
      %v293 = vshrl.u32 %v292, 7
      %v294 = vsub.s32 %v291, %v293
      %v295 = vrot.slane 0, %v294
      %v296 = vcombine.low %v288, %v295
      %v297 = vcombine.low %v245, %v206
      %v299 = vunpack.c.l.s4 1983009808
      %v300 = vunpack.c.0.s8 %v299
      %v301 = vlaneseq
      %v302 = vshrl.u32 %v301, 7
      %v303 = vsub.s32 %v300, %v302
      %v304 = vrot.slane %v297, %v303
      %v306 = vunpack.c.l.s4 1983009808
      %v307 = vunpack.c.0.s8 %v306
      %v308 = vlaneseq
      %v309 = vshrl.u32 %v308, 7
      %v310 = vsub.s32 %v307, %v309
      %v311 = vrot.slane %v264, %v310
      %v312 = vcombine.low %v304, %v311
      %v313 = vcombine.low %v246, %v207
      %v315 = vunpack.c.l.s4 1983009808
      %v316 = vunpack.c.0.s8 %v315
      %v317 = vlaneseq
      %v318 = vshrl.u32 %v317, 7
      %v319 = vsub.s32 %v316, %v318
      %v320 = vrot.slane %v313, %v319
      %v322 = vunpack.c.l.s4 1983009808
      %v323 = vunpack.c.0.s8 %v322
      %v324 = vlaneseq
      %v325 = vshrl.u32 %v324, 7
      %v326 = vsub.s32 %v323, %v325
      %v327 = vrot.slane %v265, %v326
      %v328 = vcombine.low %v320, %v327
      %v329 = vcombine.low %v247, %v208
      %v331 = vunpack.c.l.s4 1983009808
      %v332 = vunpack.c.0.s8 %v331
      %v333 = vlaneseq
      %v334 = vshrl.u32 %v333, 7
      %v335 = vsub.s32 %v332, %v334
      %v336 = vrot.slane %v329, %v335
      %v338 = vunpack.c.l.s4 1983009808
      %v339 = vunpack.c.0.s8 %v338
      %v340 = vlaneseq
      %v341 = vshrl.u32 %v340, 7
      %v342 = vsub.s32 %v339, %v341
      %v343 = vrot.slane %v266, %v342
      %v344 = vcombine.low %v336, %v343
      %v345 = vcombine.low %v248, %v209
      %v347 = vunpack.c.l.s4 1983009808
      %v348 = vunpack.c.0.s8 %v347
      %v349 = vlaneseq
      %v350 = vshrl.u32 %v349, 7
      %v351 = vsub.s32 %v348, %v350
      %v352 = vrot.slane %v345, %v351
      %v354 = vunpack.c.l.s4 1983009808
      %v355 = vunpack.c.0.s8 %v354
      %v356 = vlaneseq
      %v357 = vshrl.u32 %v356, 7
      %v358 = vsub.s32 %v355, %v357
      %v359 = vrot.slane %v267, %v358
      %v360 = vcombine.low %v352, %v359
      %366 = vst [vmem:[%s170] sm:$0x3f] %v296
      %367 = vst [vmem:[%s170 + $0x6] sm:$0x3f] %v312
      %368 = vst [vmem:[%s170 + $0xc] sm:$0x3f] %v328
      %369 = vst [vmem:[%s170 + $0x12] sm:$0x3f] %v344
      %370 = vst [vmem:[%s170 + $0x18] sm:$0x3f] %v360
      %371 = vst [vmem:[%s170 + $0x1e] sm:$0x3f] %v296
      %p372 = scmp.lt.s32.totalorder %s14, 1
      %s373 = scalar_select %p372, %s14, 1
      %s374 = smul.addr %s373, 18
      %s375 = smul.addr %s374, 2
      %s376 = scalar_lea.vmem %s3, %s375
      // Predicated region
      $region33: #{decoder_forward.6} parent=31 // pred_check
        %p377 = pneg %p100
      $region34: #{decoder_forward.6} parent=31 // pred_check_branch
        %379 = sbr.rel (%p377) target = $region36
      $region35: #{decoder_forward.6} parent=31 // pred_region
        _
      $region36: #{decoder_forward.6} parent=31 // pred_fallthru
        _
    $region32: #{decoder_forward.6} parent=5 // pred_fallthru
      _
    %p380 = scmp.le.s32.totalorder 2, %s9
    // Predicated region
    $region37: #{decoder_forward.6} parent=5 // pred_check
      %p381 = pneg %p380
    $region38: #{decoder_forward.6} parent=5 // pred_check_branch
      %383 = sbr.rel (%p381) target = $region40
    $region39: #{decoder_forward.6} parent=5 // pred_region
      %s384 = ssub.s32 %s9, 2
      // Predicated region
      $region41: #{decoder_forward.6} parent=39 // pred_check
        %p385 = pneg %p106
      $region42: #{decoder_forward.6} parent=39 // pred_check_branch
        %387 = sbr.rel (%p385) target = $region44
      $region43: #{decoder_forward.6} parent=39 // pred_region
        %p388 = scmp.lt.s32.totalorder %s15, 1
        %s389 = scalar_select %p388, %s15, 1
        %s390 = smul.addr %s389, 18
        %s391 = smul.addr %s390, 2
        %s392 = scalar_lea.vmem %s3, %s391
      $region44: #{decoder_forward.6} parent=39 // pred_fallthru
        _
    $region40: #{decoder_forward.6} parent=5 // pred_fallthru
      _
  $region6: #{decoder_forward.6} parent=0 // loop_footer
    %s13 = sadd.s32 1, %s9
  $region7: #{decoder_forward.6} parent=0 // loop_footer_branch
    %8 = sbr.rel target = $region3
  $region8: #{decoder_forward.6} parent=0 // loop_exit
    _

// kernel: decoder_forward.5
$region0: #{decoder_forward.5}
  #allocation0 [shape = 'u32[]', space=smem, size = 0x4, offset = 0x4, fixed_abs, tag = 'smem constant byte address 0x4 - core index']
  #allocation1 [shape = 'u32[144,128]{1,0:T(1,128)}', space=vmem, size = 0x12000, scoped, tag = 'internal scratch']
  %s0 = inlined_call_operand.vmem [shape: bf16[8,128], index: 0, kind: input, shape index: {}]
  %s1 = inlined_call_operand.vmem [shape: bf16[128,2048], index: 1, kind: input, shape index: {}]
  %s2 = inlined_call_operand.vmem [shape: bf16[8,2048], index: 2, kind: output, shape index: {0}]
  %s3 = inlined_call_operand.vmem [shape: f32[2,2048], index: 3, kind: output, shape index: {1}]
  %4 = xla_tuple %s2, %s3
  %s5 = sld [smem:[#allocation0]]
  $region72: #{decoder_forward.5} parent=0
    _
  %s7 = ssub.s32 1, %s5
  %s8 = scalar_select 0, %s7, %s5
  $region1: #{decoder_forward.5} parent=0
    #allocation2 [shape = 'u8[524288]{0}', space=vmem, size = 0x80000, scoped, tag = 'input window, operand 1']
    loop: start=0, step=1, limit=4
    $region2: #{decoder_forward.5} parent=1 // loop_pre_header
      _
    $region3: #{decoder_forward.5} parent=1 // loop_header
      %s10 = sphi 0, %s14
      %p11 = scmp.ge.s32.totalorder %s10, 4
      %s18 = sphi 0, %s18
      %s20 = sphi 0, %s18
      %s21 = sphi 0, %s20
      %s35 = sphi 0, %s21
      %s41 = sphi 0, %s43
      %s44 = sphi 0, %s41
      %s45 = sphi 0, %s44
      %s61 = sphi 0, %s45
      %s67 = sphi 0, %s69
      %s70 = sphi 0, %s67
      %s71 = sphi 0, %s70
      %s87 = sphi 0, %s71
      %s93 = sphi 0, %s95
      %s96 = sphi 0, %s93
      %s97 = sphi 0, %s96
      %s113 = sphi 0, %s97
    $region4: #{decoder_forward.5} parent=1 // loop_header_branch
      %13 = sbr.rel (%p11) target = $region8
    $region5: #{decoder_forward.5} parent=1 // loop_body
      %s15 = ssub.s32 %s10, 1
      %s16 = ssub.s32 %s10, 2
      %s17 = sadd.s32 %s10, 1
      %s19 = sadd.s32 %s18, 1
      %p22 = scmp.eq.s32.totalorder %s10, 1
      %p23 = scmp.ne.s32.totalorder %s18, %s20
      %p24 = scmp.eq.s32.totalorder %s10, 0
      %p25 = por %p23, %p24
      %p26 = scmp.ne.s32.totalorder %s18, %s20
      %p27 = scmp.eq.s32.totalorder %s15, 1
      %p28 = por %p26, %p27
      %p29 = scmp.ne.s32.totalorder %s20, %s21
      %p30 = scmp.eq.s32.totalorder %s15, 0
      %p31 = por %p29, %p30
      %p32 = scmp.ne.s32.totalorder %s20, %s21
      %p33 = scmp.eq.s32.totalorder %s16, 1
      %p34 = por %p32, %p33
      %p36 = scmp.ne.s32.totalorder %s21, %s35
      %p37 = scmp.eq.s32.totalorder %s16, 0
      %p38 = por %p36, %p37
      %s39 = ssub.s32 %s10, %s17
      %p40 = scmp.eq.s32.totalorder %s39, 0
      %s42 = sadd.s32 %s41, 1
      %s43 = scalar_select %p40, %s41, %s42
      %p46 = pneg %p40
      %p47 = scmp.eq.s32.totalorder %s10, 1
      %p48 = por %p46, %p47
      %p49 = scmp.ne.s32.totalorder %s41, %s44
      %p50 = scmp.eq.s32.totalorder %s10, 0
      %p51 = por %p49, %p50
      %p52 = scmp.ne.s32.totalorder %s41, %s44
      %p53 = scmp.eq.s32.totalorder %s15, 1
      %p54 = por %p52, %p53
      %p55 = scmp.ne.s32.totalorder %s44, %s45
      %p56 = scmp.eq.s32.totalorder %s15, 0
      %p57 = por %p55, %p56
      %p58 = scmp.ne.s32.totalorder %s44, %s45
      %p59 = scmp.eq.s32.totalorder %s16, 1
      %p60 = por %p58, %p59
      %p62 = scmp.ne.s32.totalorder %s45, %s61
      %p63 = scmp.eq.s32.totalorder %s16, 0
      %p64 = por %p62, %p63
      %s65 = ssub.s32 %s10, %s17
      %p66 = scmp.eq.s32.totalorder %s65, 0
      %s68 = sadd.s32 %s67, 1
      %s69 = scalar_select %p66, %s67, %s68
      %p72 = pneg %p66
      %p73 = scmp.eq.s32.totalorder %s10, 1
      %p74 = por %p72, %p73
      %p75 = scmp.ne.s32.totalorder %s67, %s70
      %p76 = scmp.eq.s32.totalorder %s10, 0
      %p77 = por %p75, %p76
      %p78 = scmp.ne.s32.totalorder %s67, %s70
      %p79 = scmp.eq.s32.totalorder %s15, 1
      %p80 = por %p78, %p79
      %p81 = scmp.ne.s32.totalorder %s70, %s71
      %p82 = scmp.eq.s32.totalorder %s15, 0
      %p83 = por %p81, %p82
      %p84 = scmp.ne.s32.totalorder %s70, %s71
      %p85 = scmp.eq.s32.totalorder %s16, 1
      %p86 = por %p84, %p85
      %p88 = scmp.ne.s32.totalorder %s71, %s87
      %p89 = scmp.eq.s32.totalorder %s16, 0
      %p90 = por %p88, %p89
      %s91 = ssub.s32 %s10, %s17
      %p92 = scmp.eq.s32.totalorder %s91, 0
      %s94 = sadd.s32 %s93, 1
      %s95 = scalar_select %p92, %s93, %s94
      %p98 = pneg %p92
      %p99 = scmp.eq.s32.totalorder %s10, 1
      %p100 = por %p98, %p99
      %p101 = scmp.ne.s32.totalorder %s93, %s96
      %p102 = scmp.eq.s32.totalorder %s10, 0
      %p103 = por %p101, %p102
      %p104 = scmp.ne.s32.totalorder %s93, %s96
      %p105 = scmp.eq.s32.totalorder %s15, 1
      %p106 = por %p104, %p105
      %p107 = scmp.ne.s32.totalorder %s96, %s97
      %p108 = scmp.eq.s32.totalorder %s15, 0
      %p109 = por %p107, %p108
      %p110 = scmp.ne.s32.totalorder %s96, %s97
      %p111 = scmp.eq.s32.totalorder %s16, 1
      %p112 = por %p110, %p111
      %p114 = scmp.ne.s32.totalorder %s97, %s113
      %p115 = scmp.eq.s32.totalorder %s16, 0
      %p116 = por %p114, %p115
      %p117 = scmp.le.s32.totalorder 1, %s10
      %p118 = scmp.lt.s32.totalorder %s10, 3
      %p119 = pnand %p117, %p118
      %p120 = pneg %p119
      // Predicated region
      $region9: #{decoder_forward.5} parent=5 // pred_check
        _
      $region10: #{decoder_forward.5} parent=5 // pred_check_branch
        %122 = sbr.rel (%p119) target = $region12
      $region11: #{decoder_forward.5} parent=5 // pred_region
        %s123 = ssub.s32 %s10, 1
        // Predicated region
        $region13: #{decoder_forward.5} parent=11 // pred_check
          %p124 = pneg %p31
        $region14: #{decoder_forward.5} parent=11 // pred_check_branch
          %126 = sbr.rel (%p124) target = $region16
        $region15: #{decoder_forward.5} parent=11 // pred_region
          _
        $region16: #{decoder_forward.5} parent=11 // pred_fallthru
          _
      $region12: #{decoder_forward.5} parent=5 // pred_fallthru
        _
      %p127 = scmp.lt.s32.totalorder %s10, 2
      // Predicated region
      $region17: #{decoder_forward.5} parent=5 // pred_check
        %p128 = pneg %p127
      $region18: #{decoder_forward.5} parent=5 // pred_check_branch
        %130 = sbr.rel (%p128) target = $region20
      $region19: #{decoder_forward.5} parent=5 // pred_region
        // Predicated region
        $region21: #{decoder_forward.5} parent=19 // pred_check
          %p131 = pneg %p51
        $region22: #{decoder_forward.5} parent=19 // pred_check_branch
          %133 = sbr.rel (%p131) target = $region24
        $region23: #{decoder_forward.5} parent=19 // pred_region
          %s134 = sand.u32 %s41, 1
          %s135 = sand.u32 %s41, 1
          %s136 = smul.addr %s135, 512
          %s137 = scalar_lea.vmem [#allocation2], %s136
          %s138 = smul.u32 8, %s10
          %s139 = smul.addr %s138, 4
          %s140 = scalar_lea.vmem %s1, %s139
          // Predicated region
          $region25: #{decoder_forward.5} parent=23 // pred_check
            _
          $region26: #{decoder_forward.5} parent=23 // pred_check_branch
            %142 = sbr.rel (0) target = $region28
          $region27: #{decoder_forward.5} parent=23 // pred_region
            // Predicated region
            $region29: #{decoder_forward.5} parent=27 // pred_check
              _
            $region30: #{decoder_forward.5} parent=27 // pred_check_branch
              %144 = sbr.rel (0) target = $region32
            $region31: #{decoder_forward.5} parent=27 // pred_region
              loop: start=0, step=1, limit=1
              $region33: #{decoder_forward.5} parent=31 // loop_pre_header
                _
              $region34: #{decoder_forward.5} parent=31 // loop_header
                %s146 = sphi 0, %s150
                %p147 = scmp.ge.s32.totalorder %s146, 1
                %s151 = sphi %s140, %s140
                %s152 = sphi %s137, %s137
              $region35: #{decoder_forward.5} parent=31 // loop_header_branch
                %149 = sbr.rel (%p147) target = $region39
              $region36: #{decoder_forward.5} parent=31 // loop_body
                %v153 = vld [vmem:[%s151] sm:$0xff]
                %154 = vst [vmem:[%s152] sm:$0xff] %v153
                %v155 = vld [vmem:[%s151 + $0x8] sm:$0xff]
                %156 = vst [vmem:[%s152 + $0x8] sm:$0xff] %v155
                %v157 = vld [vmem:[%s151 + $0x10] sm:$0xff]
                %158 = vst [vmem:[%s152 + $0x10] sm:$0xff] %v157
                %v159 = vld [vmem:[%s151 + $0x18] sm:$0xff]
                %160 = vst [vmem:[%s152 + $0x18] sm:$0xff] %v159
                %v161 = vld [vmem:[%s151 + $0x40] sm:$0xff]
                %162 = vst [vmem:[%s152 + $0x20] sm:$0xff] %v161
                %v163 = vld [vmem:[%s151 + $0x48] sm:$0xff]
                %164 = vst [vmem:[%s152 + $0x28] sm:$0xff] %v163
                %v165 = vld [vmem:[%s151 + $0x50] sm:$0xff]
                %166 = vst [vmem:[%s152 + $0x30] sm:$0xff] %v165
                %v167 = vld [vmem:[%s151 + $0x58] sm:$0xff]
                %168 = vst [vmem:[%s152 + $0x38] sm:$0xff] %v167
                %v169 = vld [vmem:[%s151 + $0x80] sm:$0xff]
                %170 = vst [vmem:[%s152 + $0x40] sm:$0xff] %v169
                %v171 = vld [vmem:[%s151 + $0x88] sm:$0xff]
                %172 = vst [vmem:[%s152 + $0x48] sm:$0xff] %v171
                %v173 = vld [vmem:[%s151 + $0x90] sm:$0xff]
                %174 = vst [vmem:[%s152 + $0x50] sm:$0xff] %v173
                %v175 = vld [vmem:[%s151 + $0x98] sm:$0xff]
                %176 = vst [vmem:[%s152 + $0x58] sm:$0xff] %v175
                %v177 = vld [vmem:[%s151 + $0xc0] sm:$0xff]
                %178 = vst [vmem:[%s152 + $0x60] sm:$0xff] %v177
                %v179 = vld [vmem:[%s151 + $0xc8] sm:$0xff]
                %180 = vst [vmem:[%s152 + $0x68] sm:$0xff] %v179
                %v181 = vld [vmem:[%s151 + $0xd0] sm:$0xff]
                %182 = vst [vmem:[%s152 + $0x70] sm:$0xff] %v181
                %v183 = vld [vmem:[%s151 + $0xd8] sm:$0xff]
                %184 = vst [vmem:[%s152 + $0x78] sm:$0xff] %v183
                %v185 = vld [vmem:[%s151 + $0x100] sm:$0xff]
                %186 = vst [vmem:[%s152 + $0x80] sm:$0xff] %v185
                %v187 = vld [vmem:[%s151 + $0x108] sm:$0xff]
                %188 = vst [vmem:[%s152 + $0x88] sm:$0xff] %v187
                %v189 = vld [vmem:[%s151 + $0x110] sm:$0xff]
                %190 = vst [vmem:[%s152 + $0x90] sm:$0xff] %v189
                %v191 = vld [vmem:[%s151 + $0x118] sm:$0xff]
                %192 = vst [vmem:[%s152 + $0x98] sm:$0xff] %v191
                %v193 = vld [vmem:[%s151 + $0x140] sm:$0xff]
                %194 = vst [vmem:[%s152 + $0xa0] sm:$0xff] %v193
                %v195 = vld [vmem:[%s151 + $0x148] sm:$0xff]
                %196 = vst [vmem:[%s152 + $0xa8] sm:$0xff] %v195
                %v197 = vld [vmem:[%s151 + $0x150] sm:$0xff]
                %198 = vst [vmem:[%s152 + $0xb0] sm:$0xff] %v197
                %v199 = vld [vmem:[%s151 + $0x158] sm:$0xff]
                %200 = vst [vmem:[%s152 + $0xb8] sm:$0xff] %v199
                %v201 = vld [vmem:[%s151 + $0x180] sm:$0xff]
                %202 = vst [vmem:[%s152 + $0xc0] sm:$0xff] %v201
                %v203 = vld [vmem:[%s151 + $0x188] sm:$0xff]
                %204 = vst [vmem:[%s152 + $0xc8] sm:$0xff] %v203
                %v205 = vld [vmem:[%s151 + $0x190] sm:$0xff]
                %206 = vst [vmem:[%s152 + $0xd0] sm:$0xff] %v205
                %v207 = vld [vmem:[%s151 + $0x198] sm:$0xff]
                %208 = vst [vmem:[%s152 + $0xd8] sm:$0xff] %v207
                %v209 = vld [vmem:[%s151 + $0x1c0] sm:$0xff]
                %210 = vst [vmem:[%s152 + $0xe0] sm:$0xff] %v209
                %v211 = vld [vmem:[%s151 + $0x1c8] sm:$0xff]
                %212 = vst [vmem:[%s152 + $0xe8] sm:$0xff] %v211
                %v213 = vld [vmem:[%s151 + $0x1d0] sm:$0xff]
                %214 = vst [vmem:[%s152 + $0xf0] sm:$0xff] %v213
                %v215 = vld [vmem:[%s151 + $0x1d8] sm:$0xff]
                %216 = vst [vmem:[%s152 + $0xf8] sm:$0xff] %v215
                %v217 = vld [vmem:[%s151 + $0x200] sm:$0xff]
                %218 = vst [vmem:[%s152 + $0x100] sm:$0xff] %v217
                %v219 = vld [vmem:[%s151 + $0x208] sm:$0xff]
                %220 = vst [vmem:[%s152 + $0x108] sm:$0xff] %v219
                %v221 = vld [vmem:[%s151 + $0x210] sm:$0xff]
                %222 = vst [vmem:[%s152 + $0x110] sm:$0xff] %v221
                %v223 = vld [vmem:[%s151 + $0x218] sm:$0xff]
                %224 = vst [vmem:[%s152 + $0x118] sm:$0xff] %v223
                %v225 = vld [vmem:[%s151 + $0x240] sm:$0xff]
                %226 = vst [vmem:[%s152 + $0x120] sm:$0xff] %v225
                %v227 = vld [vmem:[%s151 + $0x248] sm:$0xff]
                %228 = vst [vmem:[%s152 + $0x128] sm:$0xff] %v227
                %v229 = vld [vmem:[%s151 + $0x250] sm:$0xff]
                %230 = vst [vmem:[%s152 + $0x130] sm:$0xff] %v229
                %v231 = vld [vmem:[%s151 + $0x258] sm:$0xff]
                %232 = vst [vmem:[%s152 + $0x138] sm:$0xff] %v231
                %v233 = vld [vmem:[%s151 + $0x280] sm:$0xff]
                %234 = vst [vmem:[%s152 + $0x140] sm:$0xff] %v233
                %v235 = vld [vmem:[%s151 + $0x288] sm:$0xff]
                %236 = vst [vmem:[%s152 + $0x148] sm:$0xff] %v235
                %v237 = vld [vmem:[%s151 + $0x290] sm:$0xff]
                %238 = vst [vmem:[%s152 + $0x150] sm:$0xff] %v237
                %v239 = vld [vmem:[%s151 + $0x298] sm:$0xff]
                %240 = vst [vmem:[%s152 + $0x158] sm:$0xff] %v239
                %v241 = vld [vmem:[%s151 + $0x2c0] sm:$0xff]
                %242 = vst [vmem:[%s152 + $0x160] sm:$0xff] %v241
                %v243 = vld [vmem:[%s151 + $0x2c8] sm:$0xff]
                %244 = vst [vmem:[%s152 + $0x168] sm:$0xff] %v243
                %v245 = vld [vmem:[%s151 + $0x2d0] sm:$0xff]
                %246 = vst [vmem:[%s152 + $0x170] sm:$0xff] %v245
                %v247 = vld [vmem:[%s151 + $0x2d8] sm:$0xff]
                %248 = vst [vmem:[%s152 + $0x178] sm:$0xff] %v247
                %v249 = vld [vmem:[%s151 + $0x300] sm:$0xff]
                %250 = vst [vmem:[%s152 + $0x180] sm:$0xff] %v249
                %v251 = vld [vmem:[%s151 + $0x308] sm:$0xff]
                %252 = vst [vmem:[%s152 + $0x188] sm:$0xff] %v251
                %v253 = vld [vmem:[%s151 + $0x310] sm:$0xff]
                %254 = vst [vmem:[%s152 + $0x190] sm:$0xff] %v253
                %v255 = vld [vmem:[%s151 + $0x318] sm:$0xff]
                %256 = vst [vmem:[%s152 + $0x198] sm:$0xff] %v255
                %v257 = vld [vmem:[%s151 + $0x340] sm:$0xff]
                %258 = vst [vmem:[%s152 + $0x1a0] sm:$0xff] %v257
                %v259 = vld [vmem:[%s151 + $0x348] sm:$0xff]
                %260 = vst [vmem:[%s152 + $0x1a8] sm:$0xff] %v259
                %v261 = vld [vmem:[%s151 + $0x350] sm:$0xff]
                %262 = vst [vmem:[%s152 + $0x1b0] sm:$0xff] %v261
                %v263 = vld [vmem:[%s151 + $0x358] sm:$0xff]
                %264 = vst [vmem:[%s152 + $0x1b8] sm:$0xff] %v263
                %v265 = vld [vmem:[%s151 + $0x380] sm:$0xff]
                %266 = vst [vmem:[%s152 + $0x1c0] sm:$0xff] %v265
                %v267 = vld [vmem:[%s151 + $0x388] sm:$0xff]
                %268 = vst [vmem:[%s152 + $0x1c8] sm:$0xff] %v267
                %v269 = vld [vmem:[%s151 + $0x390] sm:$0xff]
                %270 = vst [vmem:[%s152 + $0x1d0] sm:$0xff] %v269
                %v271 = vld [vmem:[%s151 + $0x398] sm:$0xff]
                %272 = vst [vmem:[%s152 + $0x1d8] sm:$0xff] %v271
                %v273 = vld [vmem:[%s151 + $0x3c0] sm:$0xff]
                %274 = vst [vmem:[%s152 + $0x1e0] sm:$0xff] %v273
                %v275 = vld [vmem:[%s151 + $0x3c8] sm:$0xff]
                %276 = vst [vmem:[%s152 + $0x1e8] sm:$0xff] %v275
                %v277 = vld [vmem:[%s151 + $0x3d0] sm:$0xff]
                %278 = vst [vmem:[%s152 + $0x1f0] sm:$0xff] %v277
                %v279 = vld [vmem:[%s151 + $0x3d8] sm:$0xff]
                %280 = vst [vmem:[%s152 + $0x1f8] sm:$0xff] %v279
              $region37: #{decoder_forward.5} parent=31 // loop_footer
                %s150 = sadd.s32 1, %s146
              $region38: #{decoder_forward.5} parent=31 // loop_footer_branch
                %145 = sbr.rel target = $region34
              $region39: #{decoder_forward.5} parent=31 // loop_exit
                _
            $region32: #{decoder_forward.5} parent=27 // pred_fallthru
              _
            // Predicated region
            $region40: #{decoder_forward.5} parent=27 // pred_check
              _
            $region41: #{decoder_forward.5} parent=27 // pred_check_branch
              %282 = sbr.rel target = $region43
            $region42: #{decoder_forward.5} parent=27 // pred_region
              _
            $region43: #{decoder_forward.5} parent=27 // pred_fallthru
              _
          $region28: #{decoder_forward.5} parent=23 // pred_fallthru
            _
          %283 = vnop
        $region24: #{decoder_forward.5} parent=19 // pred_fallthru
          _
      $region20: #{decoder_forward.5} parent=5 // pred_fallthru
        _
      %p284 = scmp.le.s32.totalorder 1, %s10
      %p285 = scmp.lt.s32.totalorder %s10, 3
      %p286 = pnand %p284, %p285
      %p287 = pneg %p286
      // Predicated region
      $region44: #{decoder_forward.5} parent=5 // pred_check
        _
      $region45: #{decoder_forward.5} parent=5 // pred_check_branch
        %289 = sbr.rel (%p286) target = $region47
      $region46: #{decoder_forward.5} parent=5 // pred_region
        %s290 = ssub.s32 %s10, 1
        %s291 = sand.u32 %s44, 1
        %s292 = sand.u32 %s44, 1
        %s293 = smul.addr %s292, 512
        %s294 = scalar_lea.vmem [#allocation2], %s293
        // Predicated region
        $region48: #{decoder_forward.5} parent=46 // pred_check
          %p295 = pneg %p57
        $region49: #{decoder_forward.5} parent=46 // pred_check_branch
          %297 = sbr.rel (%p295) target = $region51
        $region50: #{decoder_forward.5} parent=46 // pred_region
          _
        $region51: #{decoder_forward.5} parent=46 // pred_fallthru
          _
        %p298 = pneg %p31
        %p299 = pneg %p28
        %s300 = sand.u32 %s44, 1
        %s301 = sand.u32 %s44, 1
        %s302 = smul.addr %s301, 512
        %s303 = scalar_lea.vmem [#allocation2], %s302
        %p304 = pneg %p57
        %p305 = pneg %p54
        %p306 = pneg %p83
        %p307 = pneg %p80
        %s308 = smul.u32 8, %s15
        %p309 = scmp.lt.s32.totalorder %s308, 15
        %s310 = scalar_select %p309, %s308, 15
        %s311 = smul.addr %s310, 4
        %s312 = scalar_lea.vmem %s2, %s311
        %p313 = pneg %p109
        %p314 = pneg %p106
        %s315 = smul.u32 8, %s15
        %p316 = scmp.lt.s32.totalorder %s315, 15
        %s317 = scalar_select %p316, %s315, 15
        %s318 = smul.addr %s317, 2
        %s319 = scalar_lea.vmem %s3, %s318
        %s320 = smul.u32 8, %s15
        %s321 = smul.u32 8, %s15
        %p322 = scmp.lt.s32.totalorder %s321, 15
        %s323 = scalar_select %p322, %s321, 15
        %s324 = smul.addr %s323, 4
        %s325 = scalar_lea.vmem %s2, %s324
        %s326 = smul.u32 8, %s15
        %s327 = smul.u32 8, %s15
        %p328 = scmp.lt.s32.totalorder %s327, 15
        %s329 = scalar_select %p328, %s327, 15
        %s330 = smul.addr %s329, 2
        %s331 = scalar_lea.vmem %s3, %s330
        %s332 = smul.u32 8, %s15
        %v334 = vld [vmem:[%s0] sm:$0xf]
        %v335 = vld [vmem:[%s294] sm:$0xff]
        %v336 = vld [vmem:[%s294 + $0x8] sm:$0xff]
        %v337 = vld [vmem:[%s294 + $0x10] sm:$0xff]
        %v338 = vld [vmem:[%s294 + $0x18] sm:$0xff]
        %v339 = vld [vmem:[%s294 + $0x20] sm:$0xff]
        %v340 = vld [vmem:[%s294 + $0x28] sm:$0xff]
        %v341 = vld [vmem:[%s294 + $0x30] sm:$0xff]
        %v342 = vld [vmem:[%s294 + $0x38] sm:$0xff]
        %v343 = vld [vmem:[%s294 + $0x40] sm:$0xff]
        %v344 = vld [vmem:[%s294 + $0x48] sm:$0xff]
        %v345 = vld [vmem:[%s294 + $0x50] sm:$0xff]
        %v346 = vld [vmem:[%s294 + $0x58] sm:$0xff]
        %v347 = vld [vmem:[%s294 + $0x60] sm:$0xff]
        %v348 = vld [vmem:[%s294 + $0x68] sm:$0xff]
        %v349 = vld [vmem:[%s294 + $0x70] sm:$0xff]
        %v350 = vld [vmem:[%s294 + $0x78] sm:$0xff]
        %v351 = vld [vmem:[%s294 + $0x80] sm:$0xff]
        %v352 = vld [vmem:[%s294 + $0x88] sm:$0xff]
        %v353 = vld [vmem:[%s294 + $0x90] sm:$0xff]
        %v354 = vld [vmem:[%s294 + $0x98] sm:$0xff]
        %v355 = vld [vmem:[%s294 + $0xa0] sm:$0xff]
        %v356 = vld [vmem:[%s294 + $0xa8] sm:$0xff]
        %v357 = vld [vmem:[%s294 + $0xb0] sm:$0xff]
        %v358 = vld [vmem:[%s294 + $0xb8] sm:$0xff]
        %v359 = vld [vmem:[%s294 + $0xc0] sm:$0xff]
        %v360 = vld [vmem:[%s294 + $0xc8] sm:$0xff]
        %v361 = vld [vmem:[%s294 + $0xd0] sm:$0xff]
        %v362 = vld [vmem:[%s294 + $0xd8] sm:$0xff]
        %v363 = vld [vmem:[%s294 + $0xe0] sm:$0xff]
        %v364 = vld [vmem:[%s294 + $0xe8] sm:$0xff]
        %v365 = vld [vmem:[%s294 + $0xf0] sm:$0xff]
        %v366 = vld [vmem:[%s294 + $0xf8] sm:$0xff]
        %v367 = vld [vmem:[%s294 + $0x100] sm:$0xff]
        %v368 = vld [vmem:[%s294 + $0x108] sm:$0xff]
        %v369 = vld [vmem:[%s294 + $0x110] sm:$0xff]
        %v370 = vld [vmem:[%s294 + $0x118] sm:$0xff]
        %v371 = vld [vmem:[%s294 + $0x120] sm:$0xff]
        %v372 = vld [vmem:[%s294 + $0x128] sm:$0xff]
        %v373 = vld [vmem:[%s294 + $0x130] sm:$0xff]
        %v374 = vld [vmem:[%s294 + $0x138] sm:$0xff]
        %v375 = vld [vmem:[%s294 + $0x140] sm:$0xff]
        %v376 = vld [vmem:[%s294 + $0x148] sm:$0xff]
        %v377 = vld [vmem:[%s294 + $0x150] sm:$0xff]
        %v378 = vld [vmem:[%s294 + $0x158] sm:$0xff]
        %v379 = vld [vmem:[%s294 + $0x160] sm:$0xff]
        %v380 = vld [vmem:[%s294 + $0x168] sm:$0xff]
        %v381 = vld [vmem:[%s294 + $0x170] sm:$0xff]
        %v382 = vld [vmem:[%s294 + $0x178] sm:$0xff]
        %v383 = vld [vmem:[%s294 + $0x180] sm:$0xff]
        %v384 = vld [vmem:[%s294 + $0x188] sm:$0xff]
        %v385 = vld [vmem:[%s294 + $0x190] sm:$0xff]
        %v386 = vld [vmem:[%s294 + $0x198] sm:$0xff]
        %v387 = vld [vmem:[%s294 + $0x1a0] sm:$0xff]
        %v388 = vld [vmem:[%s294 + $0x1a8] sm:$0xff]
        %v389 = vld [vmem:[%s294 + $0x1b0] sm:$0xff]
        %v390 = vld [vmem:[%s294 + $0x1b8] sm:$0xff]
        %v391 = vld [vmem:[%s294 + $0x1c0] sm:$0xff]
        %v392 = vld [vmem:[%s294 + $0x1c8] sm:$0xff]
        %v393 = vld [vmem:[%s294 + $0x1d0] sm:$0xff]
        %v394 = vld [vmem:[%s294 + $0x1d8] sm:$0xff]
        %v395 = vld [vmem:[%s294 + $0x1e0] sm:$0xff]
        %v396 = vld [vmem:[%s294 + $0x1e8] sm:$0xff]
        %v397 = vld [vmem:[%s294 + $0x1f0] sm:$0xff]
        %v398 = vld [vmem:[%s294 + $0x1f8] sm:$0xff]
        %v463 = vunpack.c.l.b16 %v335
        %v464 = vunpack.c.h.b16 %v335
        %v465 = vunpack.c.l.b16 %v336
        %v466 = vunpack.c.h.b16 %v336
        %v467 = vunpack.c.l.b16 %v337
        %v468 = vunpack.c.h.b16 %v337
        %v469 = vunpack.c.l.b16 %v338
        %v470 = vunpack.c.h.b16 %v338
        %v471 = vunpack.c.l.b16 %v339
        %v472 = vunpack.c.h.b16 %v339
        %v473 = vunpack.c.l.b16 %v340
        %v474 = vunpack.c.h.b16 %v340
        %v475 = vunpack.c.l.b16 %v341
        %v476 = vunpack.c.h.b16 %v341
        %v477 = vunpack.c.l.b16 %v342
        %v478 = vunpack.c.h.b16 %v342
        %v479 = vunpack.c.l.b16 %v343
        %v480 = vunpack.c.h.b16 %v343
        %v481 = vunpack.c.l.b16 %v344
        %v482 = vunpack.c.h.b16 %v344
        %v483 = vunpack.c.l.b16 %v345
        %v484 = vunpack.c.h.b16 %v345
        %v485 = vunpack.c.l.b16 %v346
        %v486 = vunpack.c.h.b16 %v346
        %v487 = vunpack.c.l.b16 %v347
        %v488 = vunpack.c.h.b16 %v347
        %v489 = vunpack.c.l.b16 %v348
        %v490 = vunpack.c.h.b16 %v348
        %v491 = vunpack.c.l.b16 %v349
        %v492 = vunpack.c.h.b16 %v349
        %v493 = vunpack.c.l.b16 %v350
        %v494 = vunpack.c.h.b16 %v350
        %v495 = vunpack.c.l.b16 %v351
        %v496 = vunpack.c.h.b16 %v351
        %v497 = vunpack.c.l.b16 %v352
        %v498 = vunpack.c.h.b16 %v352
        %v499 = vunpack.c.l.b16 %v353
        %v500 = vunpack.c.h.b16 %v353
        %v501 = vunpack.c.l.b16 %v354
        %v502 = vunpack.c.h.b16 %v354
        %v503 = vunpack.c.l.b16 %v355
        %v504 = vunpack.c.h.b16 %v355
        %v505 = vunpack.c.l.b16 %v356
        %v506 = vunpack.c.h.b16 %v356
        %v507 = vunpack.c.l.b16 %v357
        %v508 = vunpack.c.h.b16 %v357
        %v509 = vunpack.c.l.b16 %v358
        %v510 = vunpack.c.h.b16 %v358
        %v511 = vunpack.c.l.b16 %v359
        %v512 = vunpack.c.h.b16 %v359
        %v513 = vunpack.c.l.b16 %v360
        %v514 = vunpack.c.h.b16 %v360
        %v515 = vunpack.c.l.b16 %v361
        %v516 = vunpack.c.h.b16 %v361
        %v517 = vunpack.c.l.b16 %v362
        %v518 = vunpack.c.h.b16 %v362
        %v519 = vunpack.c.l.b16 %v363
        %v520 = vunpack.c.h.b16 %v363
        %v521 = vunpack.c.l.b16 %v364
        %v522 = vunpack.c.h.b16 %v364
        %v523 = vunpack.c.l.b16 %v365
        %v524 = vunpack.c.h.b16 %v365
        %v525 = vunpack.c.l.b16 %v366
        %v526 = vunpack.c.h.b16 %v366
        %v527 = vunpack.c.l.b16 %v367
        %v528 = vunpack.c.h.b16 %v367
        %v529 = vunpack.c.l.b16 %v368
        %v530 = vunpack.c.h.b16 %v368
        %v531 = vunpack.c.l.b16 %v369
        %v532 = vunpack.c.h.b16 %v369
        %v533 = vunpack.c.l.b16 %v370
        %v534 = vunpack.c.h.b16 %v370
        %v535 = vunpack.c.l.b16 %v371
        %v536 = vunpack.c.h.b16 %v371
        %v537 = vunpack.c.l.b16 %v372
        %v538 = vunpack.c.h.b16 %v372
        %v539 = vunpack.c.l.b16 %v373
        %v540 = vunpack.c.h.b16 %v373
        %v541 = vunpack.c.l.b16 %v374
        %v542 = vunpack.c.h.b16 %v374
        %v543 = vunpack.c.l.b16 %v375
        %v544 = vunpack.c.h.b16 %v375
        %v545 = vunpack.c.l.b16 %v376
        %v546 = vunpack.c.h.b16 %v376
        %v547 = vunpack.c.l.b16 %v377
        %v548 = vunpack.c.h.b16 %v377
        %v549 = vunpack.c.l.b16 %v378
        %v550 = vunpack.c.h.b16 %v378
        %v551 = vunpack.c.l.b16 %v379
        %v552 = vunpack.c.h.b16 %v379
        %v553 = vunpack.c.l.b16 %v380
        %v554 = vunpack.c.h.b16 %v380
        %v555 = vunpack.c.l.b16 %v381
        %v556 = vunpack.c.h.b16 %v381
        %v557 = vunpack.c.l.b16 %v382
        %v558 = vunpack.c.h.b16 %v382
        %v559 = vunpack.c.l.b16 %v383
        %v560 = vunpack.c.h.b16 %v383
        %v561 = vunpack.c.l.b16 %v384
        %v562 = vunpack.c.h.b16 %v384
        %v563 = vunpack.c.l.b16 %v385
        %v564 = vunpack.c.h.b16 %v385
        %v565 = vunpack.c.l.b16 %v386
        %v566 = vunpack.c.h.b16 %v386
        %v567 = vunpack.c.l.b16 %v387
        %v568 = vunpack.c.h.b16 %v387
        %v569 = vunpack.c.l.b16 %v388
        %v570 = vunpack.c.h.b16 %v388
        %v571 = vunpack.c.l.b16 %v389
        %v572 = vunpack.c.h.b16 %v389
        %v573 = vunpack.c.l.b16 %v390
        %v574 = vunpack.c.h.b16 %v390
        %v575 = vunpack.c.l.b16 %v391
        %v576 = vunpack.c.h.b16 %v391
        %v577 = vunpack.c.l.b16 %v392
        %v578 = vunpack.c.h.b16 %v392
        %v579 = vunpack.c.l.b16 %v393
        %v580 = vunpack.c.h.b16 %v393
        %v581 = vunpack.c.l.b16 %v394
        %v582 = vunpack.c.h.b16 %v394
        %v583 = vunpack.c.l.b16 %v395
        %v584 = vunpack.c.h.b16 %v395
        %v585 = vunpack.c.l.b16 %v396
        %v586 = vunpack.c.h.b16 %v396
        %v587 = vunpack.c.l.b16 %v397
        %v588 = vunpack.c.h.b16 %v397
        %v589 = vunpack.c.l.b16 %v398
        %v590 = vunpack.c.h.b16 %v398
        %v591 = vpack.c.b16 %v471, %v463
        %v592 = vpack.c.b16 %v472, %v464
        %v593 = vpack.c.b16 %v473, %v465
        %v594 = vpack.c.b16 %v474, %v466
        %v595 = vpack.c.b16 %v475, %v467
        %v596 = vpack.c.b16 %v476, %v468
        %v597 = vpack.c.b16 %v477, %v469
        %v598 = vpack.c.b16 %v478, %v470
        %v599 = vpack.c.b16 %v487, %v479
        %v600 = vpack.c.b16 %v488, %v480
        %v601 = vpack.c.b16 %v489, %v481
        %v602 = vpack.c.b16 %v490, %v482
        %v603 = vpack.c.b16 %v491, %v483
        %v604 = vpack.c.b16 %v492, %v484
        %v605 = vpack.c.b16 %v493, %v485
        %v606 = vpack.c.b16 %v494, %v486
        %v607 = vpack.c.b16 %v503, %v495
        %v608 = vpack.c.b16 %v504, %v496
        %v609 = vpack.c.b16 %v505, %v497
        %v610 = vpack.c.b16 %v506, %v498
        %v611 = vpack.c.b16 %v507, %v499
        %v612 = vpack.c.b16 %v508, %v500
        %v613 = vpack.c.b16 %v509, %v501
        %v614 = vpack.c.b16 %v510, %v502
        %v615 = vpack.c.b16 %v519, %v511
        %v616 = vpack.c.b16 %v520, %v512
        %v617 = vpack.c.b16 %v521, %v513
        %v618 = vpack.c.b16 %v522, %v514
        %v619 = vpack.c.b16 %v523, %v515
        %v620 = vpack.c.b16 %v524, %v516
        %v621 = vpack.c.b16 %v525, %v517
        %v622 = vpack.c.b16 %v526, %v518
        %v623 = vpack.c.b16 %v535, %v527
        %v624 = vpack.c.b16 %v536, %v528
        %v625 = vpack.c.b16 %v537, %v529
        %v626 = vpack.c.b16 %v538, %v530
        %v627 = vpack.c.b16 %v539, %v531
        %v628 = vpack.c.b16 %v540, %v532
        %v629 = vpack.c.b16 %v541, %v533
        %v630 = vpack.c.b16 %v542, %v534
        %v631 = vpack.c.b16 %v551, %v543
        %v632 = vpack.c.b16 %v552, %v544
        %v633 = vpack.c.b16 %v553, %v545
        %v634 = vpack.c.b16 %v554, %v546
        %v635 = vpack.c.b16 %v555, %v547
        %v636 = vpack.c.b16 %v556, %v548
        %v637 = vpack.c.b16 %v557, %v549
        %v638 = vpack.c.b16 %v558, %v550
        %v639 = vpack.c.b16 %v567, %v559
        %v640 = vpack.c.b16 %v568, %v560
        %v641 = vpack.c.b16 %v569, %v561
        %v642 = vpack.c.b16 %v570, %v562
        %v643 = vpack.c.b16 %v571, %v563
        %v644 = vpack.c.b16 %v572, %v564
        %v645 = vpack.c.b16 %v573, %v565
        %v646 = vpack.c.b16 %v574, %v566
        %v647 = vpack.c.b16 %v583, %v575
        %v648 = vpack.c.b16 %v584, %v576
        %v649 = vpack.c.b16 %v585, %v577
        %v650 = vpack.c.b16 %v586, %v578
        %v651 = vpack.c.b16 %v587, %v579
        %v652 = vpack.c.b16 %v588, %v580
        %v653 = vpack.c.b16 %v589, %v581
        %v654 = vpack.c.b16 %v590, %v582
        %719 = vmatprep.subr.bf16.mxu0 %v592
        %720 = vmatpush1.bf16.msra.mxu0 %v591
        %721 = vmatprep.subr.bf16.mxu0 %v600
        %722 = vmatpush1.bf16.msra.mxu0 %v599
        %723 = vmatprep.subr.bf16.mxu0 %v608
        %724 = vmatpush1.bf16.msra.mxu0 %v607
        %725 = vmatprep.subr.bf16.mxu0 %v616
        %726 = vmatpush1.bf16.msra.mxu0 %v615
        %727 = vmatprep.subr.bf16.mxu0 %v624
        %728 = vmatpush1.bf16.msra.mxu0 %v623
        %729 = vmatprep.subr.bf16.mxu0 %v632
        %730 = vmatpush1.bf16.msra.mxu0 %v631
        %731 = vmatprep.subr.bf16.mxu0 %v640
        %732 = vmatpush1.bf16.msra.mxu0 %v639
        %733 = vmatprep.subr.bf16.mxu0 %v648
        %734 = vmatpush1.bf16.msra.mxu0 %v647
        %735 = vmatprep.subr.bf16.mxu0 0
        %736 = vmatpush1.bf16.msra.mxu0 0
        %737 = vmatprep.subr.bf16.mxu0 0
        %738 = vmatpush1.bf16.msra.mxu0 0
        %739 = vmatprep.subr.bf16.mxu0 0
        %740 = vmatpush1.bf16.msra.mxu0 0
        %741 = vmatprep.subr.bf16.mxu0 0
        %742 = vmatpush1.bf16.msra.mxu0 0
        %743 = vmatprep.subr.bf16.mxu0 0
        %744 = vmatpush1.bf16.msra.mxu0 0
        %745 = vmatprep.subr.bf16.mxu0 0
        %746 = vmatpush1.bf16.msra.mxu0 0
        %747 = vmatprep.subr.bf16.mxu0 0
        %748 = vmatpush1.bf16.msra.mxu0 0
        %749 = vmatprep.subr.bf16.mxu0 0
        %750 = vmatpush1.bf16.msra.mxu0 0
        %751 = vmatprep.mubr.bf16.mxu0 0
        %752 = vmatmul.mubr.bf16.gmra.mrb[0].mxu0 %v334
        %v753 = vpop.f32.mrb[0].mxu0
        %v754 = vadd.f32 0.0, %v753
        %v755 = vpop.f32.mrb[0].mxu0
        %v756 = vadd.f32 0.0, %v755
        %v757 = vpop.f32.mrb[0].mxu0
        %v758 = vpop.f32.mrb[0].mxu0
        %759 = vdwg.mxu0
        %760 = vmatprep.subr.bf16.mxu0 %v594
        %761 = vmatpush1.bf16.msra.mxu0 %v593
        %762 = vmatprep.subr.bf16.mxu0 %v602
        %763 = vmatpush1.bf16.msra.mxu0 %v601
        %764 = vmatprep.subr.bf16.mxu0 %v610
        %765 = vmatpush1.bf16.msra.mxu0 %v609
        %766 = vmatprep.subr.bf16.mxu0 %v618
        %767 = vmatpush1.bf16.msra.mxu0 %v617
        %768 = vmatprep.subr.bf16.mxu0 %v626
        %769 = vmatpush1.bf16.msra.mxu0 %v625
        %770 = vmatprep.subr.bf16.mxu0 %v634
        %771 = vmatpush1.bf16.msra.mxu0 %v633
        %772 = vmatprep.subr.bf16.mxu0 %v642
        %773 = vmatpush1.bf16.msra.mxu0 %v641
        %774 = vmatprep.subr.bf16.mxu0 %v650
        %775 = vmatpush1.bf16.msra.mxu0 %v649
        %776 = vmatprep.subr.bf16.mxu0 0
        %777 = vmatpush1.bf16.msra.mxu0 0
        %778 = vmatprep.subr.bf16.mxu0 0
        %779 = vmatpush1.bf16.msra.mxu0 0
        %780 = vmatprep.subr.bf16.mxu0 0
        %781 = vmatpush1.bf16.msra.mxu0 0
        %782 = vmatprep.subr.bf16.mxu0 0
        %783 = vmatpush1.bf16.msra.mxu0 0
        %784 = vmatprep.subr.bf16.mxu0 0
        %785 = vmatpush1.bf16.msra.mxu0 0
        %786 = vmatprep.subr.bf16.mxu0 0
        %787 = vmatpush1.bf16.msra.mxu0 0
        %788 = vmatprep.subr.bf16.mxu0 0
        %789 = vmatpush1.bf16.msra.mxu0 0
        %790 = vmatprep.subr.bf16.mxu0 0
        %791 = vmatpush1.bf16.msra.mxu0 0
        %792 = vmatprep.mubr.bf16.mxu0 0
        %793 = vmatmul.mubr.bf16.gmra.mrb[0].mxu0 %v334
        %v794 = vpop.f32.mrb[0].mxu0
        %v795 = vadd.f32 0.0, %v794
        %v796 = vpop.f32.mrb[0].mxu0
        %v797 = vadd.f32 0.0, %v796
        %v798 = vpop.f32.mrb[0].mxu0
        %v799 = vpop.f32.mrb[0].mxu0
        %800 = vdwg.mxu0
        %801 = vmatprep.subr.bf16.mxu0 %v596
        %802 = vmatpush1.bf16.msra.mxu0 %v595
        %803 = vmatprep.subr.bf16.mxu0 %v604
        %804 = vmatpush1.bf16.msra.mxu0 %v603
        %805 = vmatprep.subr.bf16.mxu0 %v612
        %806 = vmatpush1.bf16.msra.mxu0 %v611
        %807 = vmatprep.subr.bf16.mxu0 %v620
        %808 = vmatpush1.bf16.msra.mxu0 %v619
        %809 = vmatprep.subr.bf16.mxu0 %v628
        %810 = vmatpush1.bf16.msra.mxu0 %v627
        %811 = vmatprep.subr.bf16.mxu0 %v636
        %812 = vmatpush1.bf16.msra.mxu0 %v635
        %813 = vmatprep.subr.bf16.mxu0 %v644
        %814 = vmatpush1.bf16.msra.mxu0 %v643
        %815 = vmatprep.subr.bf16.mxu0 %v652
        %816 = vmatpush1.bf16.msra.mxu0 %v651
        %817 = vmatprep.subr.bf16.mxu0 0
        %818 = vmatpush1.bf16.msra.mxu0 0
        %819 = vmatprep.subr.bf16.mxu0 0
        %820 = vmatpush1.bf16.msra.mxu0 0
        %821 = vmatprep.subr.bf16.mxu0 0
        %822 = vmatpush1.bf16.msra.mxu0 0
        %823 = vmatprep.subr.bf16.mxu0 0
        %824 = vmatpush1.bf16.msra.mxu0 0
        %825 = vmatprep.subr.bf16.mxu0 0
        %826 = vmatpush1.bf16.msra.mxu0 0
        %827 = vmatprep.subr.bf16.mxu0 0
        %828 = vmatpush1.bf16.msra.mxu0 0
        %829 = vmatprep.subr.bf16.mxu0 0
        %830 = vmatpush1.bf16.msra.mxu0 0
        %831 = vmatprep.subr.bf16.mxu0 0
        %832 = vmatpush1.bf16.msra.mxu0 0
        %833 = vmatprep.mubr.bf16.mxu0 0
        %834 = vmatmul.mubr.bf16.gmra.mrb[0].mxu0 %v334
        %v835 = vpop.f32.mrb[0].mxu0
        %v836 = vadd.f32 0.0, %v835
        %v837 = vpop.f32.mrb[0].mxu0
        %v838 = vadd.f32 0.0, %v837
        %v839 = vpop.f32.mrb[0].mxu0
        %v840 = vpop.f32.mrb[0].mxu0
        %841 = vdwg.mxu0
        %842 = vmatprep.subr.bf16.mxu0 %v598
        %843 = vmatpush1.bf16.msra.mxu0 %v597
        %844 = vmatprep.subr.bf16.mxu0 %v606
        %845 = vmatpush1.bf16.msra.mxu0 %v605
        %846 = vmatprep.subr.bf16.mxu0 %v614
        %847 = vmatpush1.bf16.msra.mxu0 %v613
        %848 = vmatprep.subr.bf16.mxu0 %v622
        %849 = vmatpush1.bf16.msra.mxu0 %v621
        %850 = vmatprep.subr.bf16.mxu0 %v630
        %851 = vmatpush1.bf16.msra.mxu0 %v629
        %852 = vmatprep.subr.bf16.mxu0 %v638
        %853 = vmatpush1.bf16.msra.mxu0 %v637
        %854 = vmatprep.subr.bf16.mxu0 %v646
        %855 = vmatpush1.bf16.msra.mxu0 %v645
        %856 = vmatprep.subr.bf16.mxu0 %v654
        %857 = vmatpush1.bf16.msra.mxu0 %v653
        %858 = vmatprep.subr.bf16.mxu0 0
        %859 = vmatpush1.bf16.msra.mxu0 0
        %860 = vmatprep.subr.bf16.mxu0 0
        %861 = vmatpush1.bf16.msra.mxu0 0
        %862 = vmatprep.subr.bf16.mxu0 0
        %863 = vmatpush1.bf16.msra.mxu0 0
        %864 = vmatprep.subr.bf16.mxu0 0
        %865 = vmatpush1.bf16.msra.mxu0 0
        %866 = vmatprep.subr.bf16.mxu0 0
        %867 = vmatpush1.bf16.msra.mxu0 0
        %868 = vmatprep.subr.bf16.mxu0 0
        %869 = vmatpush1.bf16.msra.mxu0 0
        %870 = vmatprep.subr.bf16.mxu0 0
        %871 = vmatpush1.bf16.msra.mxu0 0
        %872 = vmatprep.subr.bf16.mxu0 0
        %873 = vmatpush1.bf16.msra.mxu0 0
        %874 = vmatprep.mubr.bf16.mxu0 0
        %875 = vmatmul.mubr.bf16.gmra.mrb[0].mxu0 %v334
        %v876 = vpop.f32.mrb[0].mxu0
        %v877 = vadd.f32 0.0, %v876
        %v878 = vpop.f32.mrb[0].mxu0
        %v879 = vadd.f32 0.0, %v878
        %v880 = vpop.f32.mrb[0].mxu0
        %v881 = vpop.f32.mrb[0].mxu0
        %882 = vdwg.mxu0
        %v883 = vpack.c.bf16 %v754, %v754
        %v884 = vpack.c.bf16 %v756, %v756
        %v885 = vpack.c.bf16 %v795, %v795
        %v886 = vpack.c.bf16 %v797, %v797
        %v887 = vpack.c.bf16 %v836, %v836
        %v888 = vpack.c.bf16 %v838, %v838
        %v889 = vpack.c.bf16 %v877, %v877
        %v890 = vpack.c.bf16 %v879, %v879
        %v899 = vunpack.c.l.b16 %v883
        %v900 = vunpack.c.l.b16 %v884
        %v901 = vunpack.c.l.b16 %v885
        %v902 = vunpack.c.l.b16 %v886
        %v903 = vunpack.c.l.b16 %v887
        %v904 = vunpack.c.l.b16 %v888
        %v905 = vunpack.c.l.b16 %v889
        %v906 = vunpack.c.l.b16 %v890
        %v907 = vpack.c.b16 %v900, %v899
        %v908 = vpack.c.b16 %v902, %v901
        %v909 = vpack.c.b16 %v904, %v903
        %v910 = vpack.c.b16 %v906, %v905
        %915 = vst [vmem:[%s325] sm:$0xff] %v907
        %916 = vst [vmem:[%s325 + $0x8] sm:$0xff] %v908
        %917 = vst [vmem:[%s325 + $0x10] sm:$0xff] %v909
        %918 = vst [vmem:[%s325 + $0x18] sm:$0xff] %v910
        %v919 = vrot.slane %v754, 4
        %v920 = vadd.f32 %v754, %v919
        %v921 = vrot.slane %v920, 2
        %v922 = vadd.f32 %v920, %v921
        %v923 = vrot.slane %v922, 1
        %v924 = vadd.f32 %v922, %v923
        %v925 = vrot.slane %v756, 4
        %v926 = vadd.f32 %v756, %v925
        %v927 = vrot.slane %v926, 2
        %v928 = vadd.f32 %v926, %v927
        %v929 = vrot.slane %v928, 1
        %v930 = vadd.f32 %v928, %v929
        %v931 = vrot.slane %v795, 4
        %v932 = vadd.f32 %v795, %v931
        %v933 = vrot.slane %v932, 2
        %v934 = vadd.f32 %v932, %v933
        %v935 = vrot.slane %v934, 1
        %v936 = vadd.f32 %v934, %v935
        %v937 = vrot.slane %v797, 4
        %v938 = vadd.f32 %v797, %v937
        %v939 = vrot.slane %v938, 2
        %v940 = vadd.f32 %v938, %v939
        %v941 = vrot.slane %v940, 1
        %v942 = vadd.f32 %v940, %v941
        %v943 = vrot.slane %v836, 4
        %v944 = vadd.f32 %v836, %v943
        %v945 = vrot.slane %v944, 2
        %v946 = vadd.f32 %v944, %v945
        %v947 = vrot.slane %v946, 1
        %v948 = vadd.f32 %v946, %v947
        %v949 = vrot.slane %v838, 4
        %v950 = vadd.f32 %v838, %v949
        %v951 = vrot.slane %v950, 2
        %v952 = vadd.f32 %v950, %v951
        %v953 = vrot.slane %v952, 1
        %v954 = vadd.f32 %v952, %v953
        %v955 = vrot.slane %v877, 4
        %v956 = vadd.f32 %v877, %v955
        %v957 = vrot.slane %v956, 2
        %v958 = vadd.f32 %v956, %v957
        %v959 = vrot.slane %v958, 1
        %v960 = vadd.f32 %v958, %v959
        %v961 = vrot.slane %v879, 4
        %v962 = vadd.f32 %v879, %v961
        %v963 = vrot.slane %v962, 2
        %v964 = vadd.f32 %v962, %v963
        %v965 = vrot.slane %v964, 1
        %v966 = vadd.f32 %v964, %v965
        %v967 = vmul.f32 %v754, %v754
        %v968 = vmul.f32 %v756, %v756
        %v969 = vmul.f32 %v795, %v795
        %v970 = vmul.f32 %v797, %v797
        %v971 = vmul.f32 %v836, %v836
        %v972 = vmul.f32 %v838, %v838
        %v973 = vmul.f32 %v877, %v877
        %v974 = vmul.f32 %v879, %v879
        %v975 = vrot.slane %v967, 4
        %v976 = vadd.f32 %v967, %v975
        %v977 = vrot.slane %v976, 2
        %v978 = vadd.f32 %v976, %v977
        %v979 = vrot.slane %v978, 1
        %v980 = vadd.f32 %v978, %v979
        %v981 = vrot.slane %v968, 4
        %v982 = vadd.f32 %v968, %v981
        %v983 = vrot.slane %v982, 2
        %v984 = vadd.f32 %v982, %v983
        %v985 = vrot.slane %v984, 1
        %v986 = vadd.f32 %v984, %v985
        %v987 = vrot.slane %v969, 4
        %v988 = vadd.f32 %v969, %v987
        %v989 = vrot.slane %v988, 2
        %v990 = vadd.f32 %v988, %v989
        %v991 = vrot.slane %v990, 1
        %v992 = vadd.f32 %v990, %v991
        %v993 = vrot.slane %v970, 4
        %v994 = vadd.f32 %v970, %v993
        %v995 = vrot.slane %v994, 2
        %v996 = vadd.f32 %v994, %v995
        %v997 = vrot.slane %v996, 1
        %v998 = vadd.f32 %v996, %v997
        %v999 = vrot.slane %v971, 4
        %v1000 = vadd.f32 %v971, %v999
        %v1001 = vrot.slane %v1000, 2
        %v1002 = vadd.f32 %v1000, %v1001
        %v1003 = vrot.slane %v1002, 1
        %v1004 = vadd.f32 %v1002, %v1003
        %v1005 = vrot.slane %v972, 4
        %v1006 = vadd.f32 %v972, %v1005
        %v1007 = vrot.slane %v1006, 2
        %v1008 = vadd.f32 %v1006, %v1007
        %v1009 = vrot.slane %v1008, 1
        %v1010 = vadd.f32 %v1008, %v1009
        %v1011 = vrot.slane %v973, 4
        %v1012 = vadd.f32 %v973, %v1011
        %v1013 = vrot.slane %v1012, 2
        %v1014 = vadd.f32 %v1012, %v1013
        %v1015 = vrot.slane %v1014, 1
        %v1016 = vadd.f32 %v1014, %v1015
        %v1017 = vrot.slane %v974, 4
        %v1018 = vadd.f32 %v974, %v1017
        %v1019 = vrot.slane %v1018, 2
        %v1020 = vadd.f32 %v1018, %v1019
        %v1021 = vrot.slane %v1020, 1
        %v1022 = vadd.f32 %v1020, %v1021
        %vm1023 = vcmask 1040384
        %v1024 = vsel %vm1023, %v924, %v980
        %v1025 = vsel %vm1023, %v930, %v986
        %v1026 = vsel %vm1023, %v936, %v992
        %v1027 = vsel %vm1023, %v942, %v998
        %v1028 = vsel %vm1023, %v948, %v1004
        %v1029 = vsel %vm1023, %v954, %v1010
        %v1030 = vsel %vm1023, %v960, %v1016
        %v1031 = vsel %vm1023, %v966, %v1022
        %v1040 = vcombine.low %v1024, %v1025
        %v1041 = vcombine.low %v1026, %v1027
        %v1043 = vunpack.c.l.s4 1983009808
        %v1044 = vunpack.c.0.s8 %v1043
        %v1045 = vlaneseq
        %v1046 = vshrl.u32 %v1045, 7
        %v1047 = vsub.s32 %v1044, %v1046
        %v1048 = vrot.slane %v1040, %v1047
        %v1050 = vunpack.c.l.s4 1983009808
        %v1051 = vunpack.c.0.s8 %v1050
        %v1052 = vlaneseq
        %v1053 = vshrl.u32 %v1052, 7
        %v1054 = vsub.s32 %v1051, %v1053
        %v1055 = vrot.slane %v1041, %v1054
        %v1056 = vcombine.low %v1048, %v1055
        %v1057 = vcombine.low %v1028, %v1029
        %v1058 = vcombine.low %v1030, %v1031
        %v1060 = vunpack.c.l.s4 1983009808
        %v1061 = vunpack.c.0.s8 %v1060
        %v1062 = vlaneseq
        %v1063 = vshrl.u32 %v1062, 7
        %v1064 = vsub.s32 %v1061, %v1063
        %v1065 = vrot.slane %v1057, %v1064
        %v1067 = vunpack.c.l.s4 1983009808
        %v1068 = vunpack.c.0.s8 %v1067
        %v1069 = vlaneseq
        %v1070 = vshrl.u32 %v1069, 7
        %v1071 = vsub.s32 %v1068, %v1070
        %v1072 = vrot.slane %v1058, %v1071
        %v1073 = vcombine.low %v1065, %v1072
        %1076 = vst [vmem:[%s331] sm:$0xff] %v1056
        %1077 = vst [vmem:[%s331 + $0x8] sm:$0xff] %v1073
        %s1078 = smul.u32 8, %s15
        %p1079 = scmp.lt.s32.totalorder %s1078, 15
        %s1080 = scalar_select %p1079, %s1078, 15
        %s1081 = smul.addr %s1080, 4
        %s1082 = scalar_lea.vmem %s2, %s1081
        %s1083 = smul.u32 8, %s15
        %p1084 = scmp.lt.s32.totalorder %s1083, 15
        %s1085 = scalar_select %p1084, %s1083, 15
        %s1086 = smul.addr %s1085, 2
        %s1087 = scalar_lea.vmem %s3, %s1086
        // Predicated region
        $region52: #{decoder_forward.5} parent=46 // pred_check
          %p1088 = pneg %p80
        $region53: #{decoder_forward.5} parent=46 // pred_check_branch
          %1090 = sbr.rel (%p1088) target = $region55
        $region54: #{decoder_forward.5} parent=46 // pred_region
          %s1091 = smul.u32 8, %s15
        $region55: #{decoder_forward.5} parent=46 // pred_fallthru
          _
        // Predicated region
        $region56: #{decoder_forward.5} parent=46 // pred_check
          %p1092 = pneg %p106
        $region57: #{decoder_forward.5} parent=46 // pred_check_branch
          %1094 = sbr.rel (%p1092) target = $region59
        $region58: #{decoder_forward.5} parent=46 // pred_region
          %s1095 = smul.u32 8, %s15
        $region59: #{decoder_forward.5} parent=46 // pred_fallthru
          _
      $region47: #{decoder_forward.5} parent=5 // pred_fallthru
        _
      %p1096 = scmp.le.s32.totalorder 2, %s10
      // Predicated region
      $region60: #{decoder_forward.5} parent=5 // pred_check
        %p1097 = pneg %p1096
      $region61: #{decoder_forward.5} parent=5 // pred_check_branch
        %1099 = sbr.rel (%p1097) target = $region63
      $region62: #{decoder_forward.5} parent=5 // pred_region
        %s1100 = ssub.s32 %s10, 2
        // Predicated region
        $region64: #{decoder_forward.5} parent=62 // pred_check
          %p1101 = pneg %p86
        $region65: #{decoder_forward.5} parent=62 // pred_check_branch
          %1103 = sbr.rel (%p1101) target = $region67
        $region66: #{decoder_forward.5} parent=62 // pred_region
          %s1104 = smul.u32 8, %s16
          %p1105 = scmp.lt.s32.totalorder %s1104, 15
          %s1106 = scalar_select %p1105, %s1104, 15
          %s1107 = smul.addr %s1106, 4
          %s1108 = scalar_lea.vmem %s2, %s1107
        $region67: #{decoder_forward.5} parent=62 // pred_fallthru
          _
        // Predicated region
        $region68: #{decoder_forward.5} parent=62 // pred_check
          %p1109 = pneg %p112
        $region69: #{decoder_forward.5} parent=62 // pred_check_branch
          %1111 = sbr.rel (%p1109) target = $region71
        $region70: #{decoder_forward.5} parent=62 // pred_region
          %s1112 = smul.u32 8, %s16
          %p1113 = scmp.lt.s32.totalorder %s1112, 15
          %s1114 = scalar_select %p1113, %s1112, 15
          %s1115 = smul.addr %s1114, 2
          %s1116 = scalar_lea.vmem %s3, %s1115
        $region71: #{decoder_forward.5} parent=62 // pred_fallthru
          _
      $region63: #{decoder_forward.5} parent=5 // pred_fallthru
        _
    $region6: #{decoder_forward.5} parent=1 // loop_footer
      %s14 = sadd.s32 1, %s10
    $region7: #{decoder_forward.5} parent=1 // loop_footer_branch
      %9 = sbr.rel target = $region3
    $region8: #{decoder_forward.5} parent=1 // loop_exit
      _

// kernel: decoder_forward.7
$region0: #{decoder_forward.7}
  #allocation0 [shape = 'u32[]', space=smem, size = 0x4, offset = 0x4, fixed_abs, tag = 'smem constant byte address 0x4 - core index']
  #allocation1 [shape = 'u32[144,128]{1,0:T(1,128)}', space=vmem, size = 0x12000, scoped, tag = 'internal scratch']
  %s0 = inlined_call_operand.vmem [shape: bf16[2,6,4,384], index: 0, kind: input, shape index: {}]
  %s1 = inlined_call_operand.vmem [shape: bf16[4,2,256,128], index: 1, kind: input, shape index: {}]
  %s2 = inlined_call_operand.vmem [shape: bf16[2,4,2,4,256], index: 2, kind: output, shape index: {0}]
  %s3 = inlined_call_operand.vmem [shape: f32[2,2,128], index: 3, kind: output, shape index: {1}]
  %4 = xla_tuple %s2, %s3
  %s5 = sld [smem:[#allocation0]]
  $region49: #{decoder_forward.7} parent=0
    _
  %s7 = ssub.s32 1, %s5
  %s8 = scalar_select 0, %s7, %s5
  loop: start=0, step=1, limit=4
  $region2: #{decoder_forward.7} parent=0 // loop_pre_header
    _
  $region3: #{decoder_forward.7} parent=0 // loop_header
    %s10 = sphi 0, %s14
    %p11 = scmp.ge.s32.totalorder %s10, 4
    %s20 = sphi 0, %s22
    %s23 = sphi 0, %s20
    %s24 = sphi 0, %s23
    %s40 = sphi 0, %s24
    %s44 = sphi 0, %s44
    %s46 = sphi 0, %s44
    %s47 = sphi 0, %s46
    %s61 = sphi 0, %s47
    %s67 = sphi 0, %s69
    %s70 = sphi 0, %s67
    %s71 = sphi 0, %s70
    %s87 = sphi 0, %s71
    %s93 = sphi 0, %s95
    %s96 = sphi 0, %s93
    %s97 = sphi 0, %s96
    %s113 = sphi 0, %s97
  $region4: #{decoder_forward.7} parent=0 // loop_header_branch
    %13 = sbr.rel (%p11) target = $region8
  $region5: #{decoder_forward.7} parent=0 // loop_body
    %s15 = ssub.s32 %s10, 1
    %s16 = ssub.s32 %s10, 2
    %s17 = sadd.s32 %s10, 1
    %s18 = ssub.s32 %s10, %s17
    %p19 = scmp.eq.s32.totalorder %s18, 0
    %s21 = sadd.s32 %s20, 1
    %s22 = scalar_select %p19, %s20, %s21
    %p25 = pneg %p19
    %p26 = scmp.eq.s32.totalorder %s10, 1
    %p27 = por %p25, %p26
    %p28 = scmp.ne.s32.totalorder %s20, %s23
    %p29 = scmp.eq.s32.totalorder %s10, 0
    %p30 = por %p28, %p29
    %p31 = scmp.ne.s32.totalorder %s20, %s23
    %p32 = scmp.eq.s32.totalorder %s15, 1
    %p33 = por %p31, %p32
    %p34 = scmp.ne.s32.totalorder %s23, %s24
    %p35 = scmp.eq.s32.totalorder %s15, 0
    %p36 = por %p34, %p35
    %p37 = scmp.ne.s32.totalorder %s23, %s24
    %p38 = scmp.eq.s32.totalorder %s16, 1
    %p39 = por %p37, %p38
    %p41 = scmp.ne.s32.totalorder %s24, %s40
    %p42 = scmp.eq.s32.totalorder %s16, 0
    %p43 = por %p41, %p42
    %s45 = sadd.s32 %s44, 1
    %p48 = scmp.eq.s32.totalorder %s10, 1
    %p49 = scmp.ne.s32.totalorder %s44, %s46
    %p50 = scmp.eq.s32.totalorder %s10, 0
    %p51 = por %p49, %p50
    %p52 = scmp.ne.s32.totalorder %s44, %s46
    %p53 = scmp.eq.s32.totalorder %s15, 1
    %p54 = por %p52, %p53
    %p55 = scmp.ne.s32.totalorder %s46, %s47
    %p56 = scmp.eq.s32.totalorder %s15, 0
    %p57 = por %p55, %p56
    %p58 = scmp.ne.s32.totalorder %s46, %s47
    %p59 = scmp.eq.s32.totalorder %s16, 1
    %p60 = por %p58, %p59
    %p62 = scmp.ne.s32.totalorder %s47, %s61
    %p63 = scmp.eq.s32.totalorder %s16, 0
    %p64 = por %p62, %p63
    %s65 = ssub.s32 %s10, %s17
    %p66 = scmp.eq.s32.totalorder %s65, 0
    %s68 = sadd.s32 %s67, 1
    %s69 = scalar_select %p66, %s67, %s68
    %p72 = pneg %p66
    %p73 = scmp.eq.s32.totalorder %s10, 1
    %p74 = por %p72, %p73
    %p75 = scmp.ne.s32.totalorder %s67, %s70
    %p76 = scmp.eq.s32.totalorder %s10, 0
    %p77 = por %p75, %p76
    %p78 = scmp.ne.s32.totalorder %s67, %s70
    %p79 = scmp.eq.s32.totalorder %s15, 1
    %p80 = por %p78, %p79
    %p81 = scmp.ne.s32.totalorder %s70, %s71
    %p82 = scmp.eq.s32.totalorder %s15, 0
    %p83 = por %p81, %p82
    %p84 = scmp.ne.s32.totalorder %s70, %s71
    %p85 = scmp.eq.s32.totalorder %s16, 1
    %p86 = por %p84, %p85
    %p88 = scmp.ne.s32.totalorder %s71, %s87
    %p89 = scmp.eq.s32.totalorder %s16, 0
    %p90 = por %p88, %p89
    %s91 = ssub.s32 %s10, %s17
    %p92 = scmp.eq.s32.totalorder %s91, 0
    %s94 = sadd.s32 %s93, 1
    %s95 = scalar_select %p92, %s93, %s94
    %p98 = pneg %p92
    %p99 = scmp.eq.s32.totalorder %s10, 1
    %p100 = por %p98, %p99
    %p101 = scmp.ne.s32.totalorder %s93, %s96
    %p102 = scmp.eq.s32.totalorder %s10, 0
    %p103 = por %p101, %p102
    %p104 = scmp.ne.s32.totalorder %s93, %s96
    %p105 = scmp.eq.s32.totalorder %s15, 1
    %p106 = por %p104, %p105
    %p107 = scmp.ne.s32.totalorder %s96, %s97
    %p108 = scmp.eq.s32.totalorder %s15, 0
    %p109 = por %p107, %p108
    %p110 = scmp.ne.s32.totalorder %s96, %s97
    %p111 = scmp.eq.s32.totalorder %s16, 1
    %p112 = por %p110, %p111
    %p114 = scmp.ne.s32.totalorder %s97, %s113
    %p115 = scmp.eq.s32.totalorder %s16, 0
    %p116 = por %p114, %p115
    %p117 = scmp.le.s32.totalorder 1, %s10
    %p118 = scmp.lt.s32.totalorder %s10, 3
    %p119 = pnand %p117, %p118
    %p120 = pneg %p119
    // Predicated region
    $region9: #{decoder_forward.7} parent=5 // pred_check
      _
    $region10: #{decoder_forward.7} parent=5 // pred_check_branch
      %122 = sbr.rel (%p119) target = $region12
    $region11: #{decoder_forward.7} parent=5 // pred_region
      %s123 = ssub.s32 %s10, 1
      // Predicated region
      $region13: #{decoder_forward.7} parent=11 // pred_check
        %p124 = pneg %p57
      $region14: #{decoder_forward.7} parent=11 // pred_check_branch
        %126 = sbr.rel (%p124) target = $region16
      $region15: #{decoder_forward.7} parent=11 // pred_region
        _
      $region16: #{decoder_forward.7} parent=11 // pred_fallthru
        _
    $region12: #{decoder_forward.7} parent=5 // pred_fallthru
      _
    %p127 = scmp.lt.s32.totalorder %s10, 2
    // Predicated region
    $region17: #{decoder_forward.7} parent=5 // pred_check
      %p128 = pneg %p127
    $region18: #{decoder_forward.7} parent=5 // pred_check_branch
      %130 = sbr.rel (%p128) target = $region20
    $region19: #{decoder_forward.7} parent=5 // pred_region
      // Predicated region
      $region21: #{decoder_forward.7} parent=19 // pred_check
        %p131 = pneg %p30
      $region22: #{decoder_forward.7} parent=19 // pred_check_branch
        %133 = sbr.rel (%p131) target = $region24
      $region23: #{decoder_forward.7} parent=19 // pred_region
        %p134 = scmp.lt.s32.totalorder %s10, 1
        %s135 = scalar_select %p134, %s10, 1
        %s136 = smul.addr %s135, 18
        %s137 = smul.addr %s136, 2
        %s138 = scalar_lea.vmem %s0, %s137
      $region24: #{decoder_forward.7} parent=19 // pred_fallthru
        _
    $region20: #{decoder_forward.7} parent=5 // pred_fallthru
      _
    %p139 = scmp.le.s32.totalorder 1, %s10
    %p140 = scmp.lt.s32.totalorder %s10, 3
    %p141 = pnand %p139, %p140
    %p142 = pneg %p141
    // Predicated region
    $region25: #{decoder_forward.7} parent=5 // pred_check
      _
    $region26: #{decoder_forward.7} parent=5 // pred_check_branch
      %144 = sbr.rel (%p141) target = $region28
    $region27: #{decoder_forward.7} parent=5 // pred_region
      %s145 = ssub.s32 %s10, 1
      %p146 = scmp.lt.s32.totalorder %s15, 1
      %s147 = scalar_select %p146, %s15, 1
      %s148 = smul.addr %s147, 18
      %s149 = smul.addr %s148, 2
      %s150 = scalar_lea.vmem %s0, %s149
      %p151 = pneg %p36
      %p152 = pneg %p33
      %p153 = pneg %p57
      %p154 = pneg %p54
      %p155 = pneg %p83
      %p156 = pneg %p80
      %p157 = scmp.lt.s32.totalorder %s15, 1
      %s158 = scalar_select %p157, %s15, 1
      %s159 = smul.addr %s158, 16
      %s160 = smul.addr %s159, 2
      %s161 = scalar_lea.vmem %s2, %s160
      %p162 = pneg %p109
      %p163 = pneg %p106
      %p164 = scmp.lt.s32.totalorder %s15, 1
      %s165 = scalar_select %p164, %s15, 1
      %s166 = smul.addr %s165, 2
      %s167 = scalar_lea.vmem %s3, %s166
      %p168 = scmp.lt.s32.totalorder %s15, 1
      %s169 = scalar_select %p168, %s15, 1
      %s170 = smul.addr %s169, 18
      %s171 = smul.addr %s170, 2
      %s172 = scalar_lea.vmem %s0, %s171
      %p173 = scmp.lt.s32.totalorder %s15, 1
      %s174 = scalar_select %p173, %s15, 1
      %s175 = smul.addr %s174, 16
      %s176 = smul.addr %s175, 2
      %s177 = scalar_lea.vmem %s2, %s176
      %p178 = scmp.lt.s32.totalorder %s15, 1
      %s179 = scalar_select %p178, %s15, 1
      %s180 = smul.addr %s179, 2
      %s181 = scalar_lea.vmem %s3, %s180
      %v183 = vld [vmem:[%s172] sm:$0xf]
      %v184 = vld [vmem:[%s172 + $0x6] sm:$0xf]
      %v185 = vld [vmem:[%s172 + $0xc] sm:$0xf]
      %v186 = vld [vmem:[%s172 + $0x12] sm:$0xf]
      %v187 = vld [vmem:[%s1] sm:$0xf]
      %v188 = vld [vmem:[%s1 + $0x4] sm:$0xf]
      %v189 = vld [vmem:[%s1 + $0x8] sm:$0xf]
      %v190 = vld [vmem:[%s1 + $0xc] sm:$0xf]
      %v191 = vld [vmem:[%s1 + $0x10] sm:$0xf]
      %v192 = vld [vmem:[%s1 + $0x14] sm:$0xf]
      %v193 = vld [vmem:[%s1 + $0x18] sm:$0xf]
      %v194 = vld [vmem:[%s1 + $0x1c] sm:$0xf]
      %v195 = vld [vmem:[%s1 + $0x20] sm:$0xf]
      %v196 = vld [vmem:[%s1 + $0x24] sm:$0xf]
      %v197 = vld [vmem:[%s1 + $0x28] sm:$0xf]
      %v198 = vld [vmem:[%s1 + $0x2c] sm:$0xf]
      %v199 = vld [vmem:[%s1 + $0x30] sm:$0xf]
      %v200 = vld [vmem:[%s1 + $0x34] sm:$0xf]
      %v201 = vld [vmem:[%s1 + $0x38] sm:$0xf]
      %v202 = vld [vmem:[%s1 + $0x3c] sm:$0xf]
      %v203 = vld [vmem:[%s1 + $0x40] sm:$0xf]
      %v204 = vld [vmem:[%s1 + $0x44] sm:$0xf]
      %v205 = vld [vmem:[%s1 + $0x48] sm:$0xf]
      %v206 = vld [vmem:[%s1 + $0x4c] sm:$0xf]
      %v207 = vld [vmem:[%s1 + $0x50] sm:$0xf]
      %v208 = vld [vmem:[%s1 + $0x54] sm:$0xf]
      %v209 = vld [vmem:[%s1 + $0x58] sm:$0xf]
      %v210 = vld [vmem:[%s1 + $0x5c] sm:$0xf]
      %v211 = vld [vmem:[%s1 + $0x60] sm:$0xf]
      %v212 = vld [vmem:[%s1 + $0x64] sm:$0xf]
      %v213 = vld [vmem:[%s1 + $0x68] sm:$0xf]
      %v214 = vld [vmem:[%s1 + $0x6c] sm:$0xf]
      %v215 = vld [vmem:[%s1 + $0x70] sm:$0xf]
      %v216 = vld [vmem:[%s1 + $0x74] sm:$0xf]
      %v217 = vld [vmem:[%s1 + $0x78] sm:$0xf]
      %v218 = vld [vmem:[%s1 + $0x7c] sm:$0xf]
      %s219 = scalar_lea.vmem %s172, 6
      %v220 = vld [vmem:[%s219] sm:$0xf]
      %v221 = vld [vmem:[%s219 + $0x6] sm:$0xf]
      %v222 = vld [vmem:[%s219 + $0xc] sm:$0xf]
      %v223 = vld [vmem:[%s219 + $0x12] sm:$0xf]
      %s224 = scalar_lea.vmem %s1, 128
      %v225 = vld [vmem:[%s224] sm:$0xf]
      %v226 = vld [vmem:[%s224 + $0x4] sm:$0xf]
      %v227 = vld [vmem:[%s224 + $0x8] sm:$0xf]
      %v228 = vld [vmem:[%s224 + $0xc] sm:$0xf]
      %v229 = vld [vmem:[%s224 + $0x10] sm:$0xf]
      %v230 = vld [vmem:[%s224 + $0x14] sm:$0xf]
      %v231 = vld [vmem:[%s224 + $0x18] sm:$0xf]
      %v232 = vld [vmem:[%s224 + $0x1c] sm:$0xf]
      %v233 = vld [vmem:[%s224 + $0x20] sm:$0xf]
      %v234 = vld [vmem:[%s224 + $0x24] sm:$0xf]
      %v235 = vld [vmem:[%s224 + $0x28] sm:$0xf]
      %v236 = vld [vmem:[%s224 + $0x2c] sm:$0xf]
      %v237 = vld [vmem:[%s224 + $0x30] sm:$0xf]
      %v238 = vld [vmem:[%s224 + $0x34] sm:$0xf]
      %v239 = vld [vmem:[%s224 + $0x38] sm:$0xf]
      %v240 = vld [vmem:[%s224 + $0x3c] sm:$0xf]
      %v241 = vld [vmem:[%s224 + $0x40] sm:$0xf]
      %v242 = vld [vmem:[%s224 + $0x44] sm:$0xf]
      %v243 = vld [vmem:[%s224 + $0x48] sm:$0xf]
      %v244 = vld [vmem:[%s224 + $0x4c] sm:$0xf]
      %v245 = vld [vmem:[%s224 + $0x50] sm:$0xf]
      %v246 = vld [vmem:[%s224 + $0x54] sm:$0xf]
      %v247 = vld [vmem:[%s224 + $0x58] sm:$0xf]
      %v248 = vld [vmem:[%s224 + $0x5c] sm:$0xf]
      %v249 = vld [vmem:[%s224 + $0x60] sm:$0xf]
      %v250 = vld [vmem:[%s224 + $0x64] sm:$0xf]
      %v251 = vld [vmem:[%s224 + $0x68] sm:$0xf]
      %v252 = vld [vmem:[%s224 + $0x6c] sm:$0xf]
      %v253 = vld [vmem:[%s224 + $0x70] sm:$0xf]
      %v254 = vld [vmem:[%s224 + $0x74] sm:$0xf]
      %v255 = vld [vmem:[%s224 + $0x78] sm:$0xf]
      %v256 = vld [vmem:[%s224 + $0x7c] sm:$0xf]
      %v261 = vcombine.low %v220, %v221
      %v262 = vcombine.low %v222, %v223
      %v264 = vunpack.c.l.s4 1983009808
      %v265 = vunpack.c.0.s8 %v264
      %v266 = vlaneseq
      %v267 = vshrl.u32 %v266, 7
      %v268 = vsub.s32 %v265, %v267
      %v269 = vrot.slane %v261, %v268
      %v271 = vunpack.c.l.s4 1983009808
      %v272 = vunpack.c.0.s8 %v271
      %v273 = vlaneseq
      %v274 = vshrl.u32 %v273, 7
      %v275 = vsub.s32 %v272, %v274
      %v276 = vrot.slane %v262, %v275
      %v277 = vcombine.low %v269, %v276
      %v278 = vcombine.high %v269, %v276
      %v313 = vunpack.c.l.b16 %v225
      %v314 = vunpack.c.l.b16 %v226
      %v315 = vunpack.c.l.b16 %v227
      %v316 = vunpack.c.l.b16 %v228
      %v317 = vunpack.c.l.b16 %v229
      %v318 = vunpack.c.l.b16 %v230
      %v319 = vunpack.c.l.b16 %v231
      %v320 = vunpack.c.l.b16 %v232
      %v321 = vunpack.c.l.b16 %v233
      %v322 = vunpack.c.l.b16 %v234
      %v323 = vunpack.c.l.b16 %v235
      %v324 = vunpack.c.l.b16 %v236
      %v325 = vunpack.c.l.b16 %v237
      %v326 = vunpack.c.l.b16 %v238
      %v327 = vunpack.c.l.b16 %v239
      %v328 = vunpack.c.l.b16 %v240
      %v329 = vunpack.c.l.b16 %v241
      %v330 = vunpack.c.l.b16 %v242
      %v331 = vunpack.c.l.b16 %v243
      %v332 = vunpack.c.l.b16 %v244
      %v333 = vunpack.c.l.b16 %v245
      %v334 = vunpack.c.l.b16 %v246
      %v335 = vunpack.c.l.b16 %v247
      %v336 = vunpack.c.l.b16 %v248
      %v337 = vunpack.c.l.b16 %v249
      %v338 = vunpack.c.l.b16 %v250
      %v339 = vunpack.c.l.b16 %v251
      %v340 = vunpack.c.l.b16 %v252
      %v341 = vunpack.c.l.b16 %v253
      %v342 = vunpack.c.l.b16 %v254
      %v343 = vunpack.c.l.b16 %v255
      %v344 = vunpack.c.l.b16 %v256
      %v345 = vpack.c.b16 %v314, %v313
      %v346 = vpack.c.b16 %v316, %v315
      %v347 = vpack.c.b16 %v318, %v317
      %v348 = vpack.c.b16 %v320, %v319
      %v349 = vpack.c.b16 %v322, %v321
      %v350 = vpack.c.b16 %v324, %v323
      %v351 = vpack.c.b16 %v326, %v325
      %v352 = vpack.c.b16 %v328, %v327
      %v353 = vpack.c.b16 %v330, %v329
      %v354 = vpack.c.b16 %v332, %v331
      %v355 = vpack.c.b16 %v334, %v333
      %v356 = vpack.c.b16 %v336, %v335
      %v357 = vpack.c.b16 %v338, %v337
      %v358 = vpack.c.b16 %v340, %v339
      %v359 = vpack.c.b16 %v342, %v341
      %v360 = vpack.c.b16 %v344, %v343
      %377 = vmatprep.subr.bf16.mxu0 0
      %378 = vmatpush1.bf16.msra.mxu0 %v345
      %379 = vmatprep.subr.bf16.mxu0 0
      %380 = vmatpush1.bf16.msra.mxu0 %v346
      %381 = vmatprep.subr.bf16.mxu0 0
      %382 = vmatpush1.bf16.msra.mxu0 %v347
      %383 = vmatprep.subr.bf16.mxu0 0
      %384 = vmatpush1.bf16.msra.mxu0 %v348
      %385 = vmatprep.subr.bf16.mxu0 0
      %386 = vmatpush1.bf16.msra.mxu0 %v349
      %387 = vmatprep.subr.bf16.mxu0 0
      %388 = vmatpush1.bf16.msra.mxu0 %v350
      %389 = vmatprep.subr.bf16.mxu0 0
      %390 = vmatpush1.bf16.msra.mxu0 %v351
      %391 = vmatprep.subr.bf16.mxu0 0
      %392 = vmatpush1.bf16.msra.mxu0 %v352
      %393 = vmatprep.subr.bf16.mxu0 0
      %394 = vmatpush1.bf16.msra.mxu0 %v353
      %395 = vmatprep.subr.bf16.mxu0 0
      %396 = vmatpush1.bf16.msra.mxu0 %v354
      %397 = vmatprep.subr.bf16.mxu0 0
      %398 = vmatpush1.bf16.msra.mxu0 %v355
      %399 = vmatprep.subr.bf16.mxu0 0
      %400 = vmatpush1.bf16.msra.mxu0 %v356
      %401 = vmatprep.subr.bf16.mxu0 0
      %402 = vmatpush1.bf16.msra.mxu0 %v357
      %403 = vmatprep.subr.bf16.mxu0 0
      %404 = vmatpush1.bf16.msra.mxu0 %v358
      %405 = vmatprep.subr.bf16.mxu0 0
      %406 = vmatpush1.bf16.msra.mxu0 %v359
      %407 = vmatprep.subr.bf16.mxu0 0
      %408 = vmatpush1.bf16.msra.mxu0 %v360
      %409 = vmatprep.mubr.bf16.mxu0 %v278
      %410 = vmatmul.mubr.bf16.gmra.mrb[0].mxu0 %v277
      %v411 = vpop.f32.mrb[0].mxu0
      %v412 = vadd.f32 0.0, %v411
      %v413 = vpop.f32.mrb[0].mxu0
      %v414 = vpop.f32.mrb[0].mxu0
      %v415 = vadd.f32 0.0, %v414
      %v416 = vpop.f32.mrb[0].mxu0
      %417 = vdwg.mxu0
      %v422 = vcombine.low %v183, %v184
      %v423 = vcombine.low %v185, %v186
      %v425 = vunpack.c.l.s4 1983009808
      %v426 = vunpack.c.0.s8 %v425
      %v427 = vlaneseq
      %v428 = vshrl.u32 %v427, 7
      %v429 = vsub.s32 %v426, %v428
      %v430 = vrot.slane %v422, %v429
      %v432 = vunpack.c.l.s4 1983009808
      %v433 = vunpack.c.0.s8 %v432
      %v434 = vlaneseq
      %v435 = vshrl.u32 %v434, 7
      %v436 = vsub.s32 %v433, %v435
      %v437 = vrot.slane %v423, %v436
      %v438 = vcombine.low %v430, %v437
      %v439 = vcombine.high %v430, %v437
      %v474 = vunpack.c.l.b16 %v187
      %v475 = vunpack.c.l.b16 %v188
      %v476 = vunpack.c.l.b16 %v189
      %v477 = vunpack.c.l.b16 %v190
      %v478 = vunpack.c.l.b16 %v191
      %v479 = vunpack.c.l.b16 %v192
      %v480 = vunpack.c.l.b16 %v193
      %v481 = vunpack.c.l.b16 %v194
      %v482 = vunpack.c.l.b16 %v195
      %v483 = vunpack.c.l.b16 %v196
      %v484 = vunpack.c.l.b16 %v197
      %v485 = vunpack.c.l.b16 %v198
      %v486 = vunpack.c.l.b16 %v199
      %v487 = vunpack.c.l.b16 %v200
      %v488 = vunpack.c.l.b16 %v201
      %v489 = vunpack.c.l.b16 %v202
      %v490 = vunpack.c.l.b16 %v203
      %v491 = vunpack.c.l.b16 %v204
      %v492 = vunpack.c.l.b16 %v205
      %v493 = vunpack.c.l.b16 %v206
      %v494 = vunpack.c.l.b16 %v207
      %v495 = vunpack.c.l.b16 %v208
      %v496 = vunpack.c.l.b16 %v209
      %v497 = vunpack.c.l.b16 %v210
      %v498 = vunpack.c.l.b16 %v211
      %v499 = vunpack.c.l.b16 %v212
      %v500 = vunpack.c.l.b16 %v213
      %v501 = vunpack.c.l.b16 %v214
      %v502 = vunpack.c.l.b16 %v215
      %v503 = vunpack.c.l.b16 %v216
      %v504 = vunpack.c.l.b16 %v217
      %v505 = vunpack.c.l.b16 %v218
      %v506 = vpack.c.b16 %v475, %v474
      %v507 = vpack.c.b16 %v477, %v476
      %v508 = vpack.c.b16 %v479, %v478
      %v509 = vpack.c.b16 %v481, %v480
      %v510 = vpack.c.b16 %v483, %v482
      %v511 = vpack.c.b16 %v485, %v484
      %v512 = vpack.c.b16 %v487, %v486
      %v513 = vpack.c.b16 %v489, %v488
      %v514 = vpack.c.b16 %v491, %v490
      %v515 = vpack.c.b16 %v493, %v492
      %v516 = vpack.c.b16 %v495, %v494
      %v517 = vpack.c.b16 %v497, %v496
      %v518 = vpack.c.b16 %v499, %v498
      %v519 = vpack.c.b16 %v501, %v500
      %v520 = vpack.c.b16 %v503, %v502
      %v521 = vpack.c.b16 %v505, %v504
      %538 = vmatprep.subr.bf16.mxu0 0
      %539 = vmatpush1.bf16.msra.mxu0 %v506
      %540 = vmatprep.subr.bf16.mxu0 0
      %541 = vmatpush1.bf16.msra.mxu0 %v507
      %542 = vmatprep.subr.bf16.mxu0 0
      %543 = vmatpush1.bf16.msra.mxu0 %v508
      %544 = vmatprep.subr.bf16.mxu0 0
      %545 = vmatpush1.bf16.msra.mxu0 %v509
      %546 = vmatprep.subr.bf16.mxu0 0
      %547 = vmatpush1.bf16.msra.mxu0 %v510
      %548 = vmatprep.subr.bf16.mxu0 0
      %549 = vmatpush1.bf16.msra.mxu0 %v511
      %550 = vmatprep.subr.bf16.mxu0 0
      %551 = vmatpush1.bf16.msra.mxu0 %v512
      %552 = vmatprep.subr.bf16.mxu0 0
      %553 = vmatpush1.bf16.msra.mxu0 %v513
      %554 = vmatprep.subr.bf16.mxu0 0
      %555 = vmatpush1.bf16.msra.mxu0 %v514
      %556 = vmatprep.subr.bf16.mxu0 0
      %557 = vmatpush1.bf16.msra.mxu0 %v515
      %558 = vmatprep.subr.bf16.mxu0 0
      %559 = vmatpush1.bf16.msra.mxu0 %v516
      %560 = vmatprep.subr.bf16.mxu0 0
      %561 = vmatpush1.bf16.msra.mxu0 %v517
      %562 = vmatprep.subr.bf16.mxu0 0
      %563 = vmatpush1.bf16.msra.mxu0 %v518
      %564 = vmatprep.subr.bf16.mxu0 0
      %565 = vmatpush1.bf16.msra.mxu0 %v519
      %566 = vmatprep.subr.bf16.mxu0 0
      %567 = vmatpush1.bf16.msra.mxu0 %v520
      %568 = vmatprep.subr.bf16.mxu0 0
      %569 = vmatpush1.bf16.msra.mxu0 %v521
      %570 = vmatprep.mubr.bf16.mxu0 %v439
      %571 = vmatmul.mubr.bf16.gmra.mrb[0].mxu0 %v438
      %v572 = vpop.f32.mrb[0].mxu0
      %v573 = vadd.f32 %v412, %v572
      %v574 = vpop.f32.mrb[0].mxu0
      %v575 = vpop.f32.mrb[0].mxu0
      %v576 = vadd.f32 %v415, %v575
      %v577 = vpop.f32.mrb[0].mxu0
      %578 = vdwg.mxu0
      %v579 = vld [vmem:[%s172 + $0x2] sm:$0xf]
      %v580 = vld [vmem:[%s172 + $0x8] sm:$0xf]
      %v581 = vld [vmem:[%s172 + $0xe] sm:$0xf]
      %v582 = vld [vmem:[%s172 + $0x14] sm:$0xf]
      %s583 = scalar_lea.vmem %s1, 256
      %v584 = vld [vmem:[%s583] sm:$0xf]
      %v585 = vld [vmem:[%s583 + $0x4] sm:$0xf]
      %v586 = vld [vmem:[%s583 + $0x8] sm:$0xf]
      %v587 = vld [vmem:[%s583 + $0xc] sm:$0xf]
      %v588 = vld [vmem:[%s583 + $0x10] sm:$0xf]
      %v589 = vld [vmem:[%s583 + $0x14] sm:$0xf]
      %v590 = vld [vmem:[%s583 + $0x18] sm:$0xf]
      %v591 = vld [vmem:[%s583 + $0x1c] sm:$0xf]
      %v592 = vld [vmem:[%s583 + $0x20] sm:$0xf]
      %v593 = vld [vmem:[%s583 + $0x24] sm:$0xf]
      %v594 = vld [vmem:[%s583 + $0x28] sm:$0xf]
      %v595 = vld [vmem:[%s583 + $0x2c] sm:$0xf]
      %v596 = vld [vmem:[%s583 + $0x30] sm:$0xf]
      %v597 = vld [vmem:[%s583 + $0x34] sm:$0xf]
      %v598 = vld [vmem:[%s583 + $0x38] sm:$0xf]
      %v599 = vld [vmem:[%s583 + $0x3c] sm:$0xf]
      %v600 = vld [vmem:[%s583 + $0x40] sm:$0xf]
      %v601 = vld [vmem:[%s583 + $0x44] sm:$0xf]
      %v602 = vld [vmem:[%s583 + $0x48] sm:$0xf]
      %v603 = vld [vmem:[%s583 + $0x4c] sm:$0xf]
      %v604 = vld [vmem:[%s583 + $0x50] sm:$0xf]
      %v605 = vld [vmem:[%s583 + $0x54] sm:$0xf]
      %v606 = vld [vmem:[%s583 + $0x58] sm:$0xf]
      %v607 = vld [vmem:[%s583 + $0x5c] sm:$0xf]
      %v608 = vld [vmem:[%s583 + $0x60] sm:$0xf]
      %v609 = vld [vmem:[%s583 + $0x64] sm:$0xf]
      %v610 = vld [vmem:[%s583 + $0x68] sm:$0xf]
      %v611 = vld [vmem:[%s583 + $0x6c] sm:$0xf]
      %v612 = vld [vmem:[%s583 + $0x70] sm:$0xf]
      %v613 = vld [vmem:[%s583 + $0x74] sm:$0xf]
      %v614 = vld [vmem:[%s583 + $0x78] sm:$0xf]
      %v615 = vld [vmem:[%s583 + $0x7c] sm:$0xf]
      %v616 = vld [vmem:[%s219 + $0x2] sm:$0xf]
      %v617 = vld [vmem:[%s219 + $0x8] sm:$0xf]
      %v618 = vld [vmem:[%s219 + $0xe] sm:$0xf]
      %v619 = vld [vmem:[%s219 + $0x14] sm:$0xf]
      %s620 = scalar_lea.vmem %s1, 384
      %v621 = vld [vmem:[%s620] sm:$0xf]
      %v622 = vld [vmem:[%s620 + $0x4] sm:$0xf]
      %v623 = vld [vmem:[%s620 + $0x8] sm:$0xf]
      %v624 = vld [vmem:[%s620 + $0xc] sm:$0xf]
      %v625 = vld [vmem:[%s620 + $0x10] sm:$0xf]
      %v626 = vld [vmem:[%s620 + $0x14] sm:$0xf]
      %v627 = vld [vmem:[%s620 + $0x18] sm:$0xf]
      %v628 = vld [vmem:[%s620 + $0x1c] sm:$0xf]
      %v629 = vld [vmem:[%s620 + $0x20] sm:$0xf]
      %v630 = vld [vmem:[%s620 + $0x24] sm:$0xf]
      %v631 = vld [vmem:[%s620 + $0x28] sm:$0xf]
      %v632 = vld [vmem:[%s620 + $0x2c] sm:$0xf]
      %v633 = vld [vmem:[%s620 + $0x30] sm:$0xf]
      %v634 = vld [vmem:[%s620 + $0x34] sm:$0xf]
      %v635 = vld [vmem:[%s620 + $0x38] sm:$0xf]
      %v636 = vld [vmem:[%s620 + $0x3c] sm:$0xf]
      %v637 = vld [vmem:[%s620 + $0x40] sm:$0xf]
      %v638 = vld [vmem:[%s620 + $0x44] sm:$0xf]
      %v639 = vld [vmem:[%s620 + $0x48] sm:$0xf]
      %v640 = vld [vmem:[%s620 + $0x4c] sm:$0xf]
      %v641 = vld [vmem:[%s620 + $0x50] sm:$0xf]
      %v642 = vld [vmem:[%s620 + $0x54] sm:$0xf]
      %v643 = vld [vmem:[%s620 + $0x58] sm:$0xf]
      %v644 = vld [vmem:[%s620 + $0x5c] sm:$0xf]
      %v645 = vld [vmem:[%s620 + $0x60] sm:$0xf]
      %v646 = vld [vmem:[%s620 + $0x64] sm:$0xf]
      %v647 = vld [vmem:[%s620 + $0x68] sm:$0xf]
      %v648 = vld [vmem:[%s620 + $0x6c] sm:$0xf]
      %v649 = vld [vmem:[%s620 + $0x70] sm:$0xf]
      %v650 = vld [vmem:[%s620 + $0x74] sm:$0xf]
      %v651 = vld [vmem:[%s620 + $0x78] sm:$0xf]
      %v652 = vld [vmem:[%s620 + $0x7c] sm:$0xf]
      %v657 = vcombine.low %v616, %v617
      %v658 = vcombine.low %v618, %v619
      %v660 = vunpack.c.l.s4 1983009808
      %v661 = vunpack.c.0.s8 %v660
      %v662 = vlaneseq
      %v663 = vshrl.u32 %v662, 7
      %v664 = vsub.s32 %v661, %v663
      %v665 = vrot.slane %v657, %v664
      %v667 = vunpack.c.l.s4 1983009808
      %v668 = vunpack.c.0.s8 %v667
      %v669 = vlaneseq
      %v670 = vshrl.u32 %v669, 7
      %v671 = vsub.s32 %v668, %v670
      %v672 = vrot.slane %v658, %v671
      %v673 = vcombine.low %v665, %v672
      %v674 = vcombine.high %v665, %v672
      %v709 = vunpack.c.l.b16 %v621
      %v710 = vunpack.c.l.b16 %v622
      %v711 = vunpack.c.l.b16 %v623
      %v712 = vunpack.c.l.b16 %v624
      %v713 = vunpack.c.l.b16 %v625
      %v714 = vunpack.c.l.b16 %v626
      %v715 = vunpack.c.l.b16 %v627
      %v716 = vunpack.c.l.b16 %v628
      %v717 = vunpack.c.l.b16 %v629
      %v718 = vunpack.c.l.b16 %v630
      %v719 = vunpack.c.l.b16 %v631
      %v720 = vunpack.c.l.b16 %v632
      %v721 = vunpack.c.l.b16 %v633
      %v722 = vunpack.c.l.b16 %v634
      %v723 = vunpack.c.l.b16 %v635
      %v724 = vunpack.c.l.b16 %v636
      %v725 = vunpack.c.l.b16 %v637
      %v726 = vunpack.c.l.b16 %v638
      %v727 = vunpack.c.l.b16 %v639
      %v728 = vunpack.c.l.b16 %v640
      %v729 = vunpack.c.l.b16 %v641
      %v730 = vunpack.c.l.b16 %v642
      %v731 = vunpack.c.l.b16 %v643
      %v732 = vunpack.c.l.b16 %v644
      %v733 = vunpack.c.l.b16 %v645
      %v734 = vunpack.c.l.b16 %v646
      %v735 = vunpack.c.l.b16 %v647
      %v736 = vunpack.c.l.b16 %v648
      %v737 = vunpack.c.l.b16 %v649
      %v738 = vunpack.c.l.b16 %v650
      %v739 = vunpack.c.l.b16 %v651
      %v740 = vunpack.c.l.b16 %v652
      %v741 = vpack.c.b16 %v710, %v709
      %v742 = vpack.c.b16 %v712, %v711
      %v743 = vpack.c.b16 %v714, %v713
      %v744 = vpack.c.b16 %v716, %v715
      %v745 = vpack.c.b16 %v718, %v717
      %v746 = vpack.c.b16 %v720, %v719
      %v747 = vpack.c.b16 %v722, %v721
      %v748 = vpack.c.b16 %v724, %v723
      %v749 = vpack.c.b16 %v726, %v725
      %v750 = vpack.c.b16 %v728, %v727
      %v751 = vpack.c.b16 %v730, %v729
      %v752 = vpack.c.b16 %v732, %v731
      %v753 = vpack.c.b16 %v734, %v733
      %v754 = vpack.c.b16 %v736, %v735
      %v755 = vpack.c.b16 %v738, %v737
      %v756 = vpack.c.b16 %v740, %v739
      %773 = vmatprep.subr.bf16.mxu0 0
      %774 = vmatpush1.bf16.msra.mxu0 %v741
      %775 = vmatprep.subr.bf16.mxu0 0
      %776 = vmatpush1.bf16.msra.mxu0 %v742
      %777 = vmatprep.subr.bf16.mxu0 0
      %778 = vmatpush1.bf16.msra.mxu0 %v743
      %779 = vmatprep.subr.bf16.mxu0 0
      %780 = vmatpush1.bf16.msra.mxu0 %v744
      %781 = vmatprep.subr.bf16.mxu0 0
      %782 = vmatpush1.bf16.msra.mxu0 %v745
      %783 = vmatprep.subr.bf16.mxu0 0
      %784 = vmatpush1.bf16.msra.mxu0 %v746
      %785 = vmatprep.subr.bf16.mxu0 0
      %786 = vmatpush1.bf16.msra.mxu0 %v747
      %787 = vmatprep.subr.bf16.mxu0 0
      %788 = vmatpush1.bf16.msra.mxu0 %v748
      %789 = vmatprep.subr.bf16.mxu0 0
      %790 = vmatpush1.bf16.msra.mxu0 %v749
      %791 = vmatprep.subr.bf16.mxu0 0
      %792 = vmatpush1.bf16.msra.mxu0 %v750
      %793 = vmatprep.subr.bf16.mxu0 0
      %794 = vmatpush1.bf16.msra.mxu0 %v751
      %795 = vmatprep.subr.bf16.mxu0 0
      %796 = vmatpush1.bf16.msra.mxu0 %v752
      %797 = vmatprep.subr.bf16.mxu0 0
      %798 = vmatpush1.bf16.msra.mxu0 %v753
      %799 = vmatprep.subr.bf16.mxu0 0
      %800 = vmatpush1.bf16.msra.mxu0 %v754
      %801 = vmatprep.subr.bf16.mxu0 0
      %802 = vmatpush1.bf16.msra.mxu0 %v755
      %803 = vmatprep.subr.bf16.mxu0 0
      %804 = vmatpush1.bf16.msra.mxu0 %v756
      %805 = vmatprep.mubr.bf16.mxu0 %v674
      %806 = vmatmul.mubr.bf16.gmra.mrb[0].mxu0 %v673
      %v807 = vpop.f32.mrb[0].mxu0
      %v808 = vadd.f32 0.0, %v807
      %v809 = vpop.f32.mrb[0].mxu0
      %v810 = vpop.f32.mrb[0].mxu0
      %v811 = vadd.f32 0.0, %v810
      %v812 = vpop.f32.mrb[0].mxu0
      %813 = vdwg.mxu0
      %v818 = vcombine.low %v579, %v580
      %v819 = vcombine.low %v581, %v582
      %v821 = vunpack.c.l.s4 1983009808
      %v822 = vunpack.c.0.s8 %v821
      %v823 = vlaneseq
      %v824 = vshrl.u32 %v823, 7
      %v825 = vsub.s32 %v822, %v824
      %v826 = vrot.slane %v818, %v825
      %v828 = vunpack.c.l.s4 1983009808
      %v829 = vunpack.c.0.s8 %v828
      %v830 = vlaneseq
      %v831 = vshrl.u32 %v830, 7
      %v832 = vsub.s32 %v829, %v831
      %v833 = vrot.slane %v819, %v832
      %v834 = vcombine.low %v826, %v833
      %v835 = vcombine.high %v826, %v833
      %v870 = vunpack.c.l.b16 %v584
      %v871 = vunpack.c.l.b16 %v585
      %v872 = vunpack.c.l.b16 %v586
      %v873 = vunpack.c.l.b16 %v587
      %v874 = vunpack.c.l.b16 %v588
      %v875 = vunpack.c.l.b16 %v589
      %v876 = vunpack.c.l.b16 %v590
      %v877 = vunpack.c.l.b16 %v591
      %v878 = vunpack.c.l.b16 %v592
      %v879 = vunpack.c.l.b16 %v593
      %v880 = vunpack.c.l.b16 %v594
      %v881 = vunpack.c.l.b16 %v595
      %v882 = vunpack.c.l.b16 %v596
      %v883 = vunpack.c.l.b16 %v597
      %v884 = vunpack.c.l.b16 %v598
      %v885 = vunpack.c.l.b16 %v599
      %v886 = vunpack.c.l.b16 %v600
      %v887 = vunpack.c.l.b16 %v601
      %v888 = vunpack.c.l.b16 %v602
      %v889 = vunpack.c.l.b16 %v603
      %v890 = vunpack.c.l.b16 %v604
      %v891 = vunpack.c.l.b16 %v605
      %v892 = vunpack.c.l.b16 %v606
      %v893 = vunpack.c.l.b16 %v607
      %v894 = vunpack.c.l.b16 %v608
      %v895 = vunpack.c.l.b16 %v609
      %v896 = vunpack.c.l.b16 %v610
      %v897 = vunpack.c.l.b16 %v611
      %v898 = vunpack.c.l.b16 %v612
      %v899 = vunpack.c.l.b16 %v613
      %v900 = vunpack.c.l.b16 %v614
      %v901 = vunpack.c.l.b16 %v615
      %v902 = vpack.c.b16 %v871, %v870
      %v903 = vpack.c.b16 %v873, %v872
      %v904 = vpack.c.b16 %v875, %v874
      %v905 = vpack.c.b16 %v877, %v876
      %v906 = vpack.c.b16 %v879, %v878
      %v907 = vpack.c.b16 %v881, %v880
      %v908 = vpack.c.b16 %v883, %v882
      %v909 = vpack.c.b16 %v885, %v884
      %v910 = vpack.c.b16 %v887, %v886
      %v911 = vpack.c.b16 %v889, %v888
      %v912 = vpack.c.b16 %v891, %v890
      %v913 = vpack.c.b16 %v893, %v892
      %v914 = vpack.c.b16 %v895, %v894
      %v915 = vpack.c.b16 %v897, %v896
      %v916 = vpack.c.b16 %v899, %v898
      %v917 = vpack.c.b16 %v901, %v900
      %934 = vmatprep.subr.bf16.mxu0 0
      %935 = vmatpush1.bf16.msra.mxu0 %v902
      %936 = vmatprep.subr.bf16.mxu0 0
      %937 = vmatpush1.bf16.msra.mxu0 %v903
      %938 = vmatprep.subr.bf16.mxu0 0
      %939 = vmatpush1.bf16.msra.mxu0 %v904
      %940 = vmatprep.subr.bf16.mxu0 0
      %941 = vmatpush1.bf16.msra.mxu0 %v905
      %942 = vmatprep.subr.bf16.mxu0 0
      %943 = vmatpush1.bf16.msra.mxu0 %v906
      %944 = vmatprep.subr.bf16.mxu0 0
      %945 = vmatpush1.bf16.msra.mxu0 %v907
      %946 = vmatprep.subr.bf16.mxu0 0
      %947 = vmatpush1.bf16.msra.mxu0 %v908
      %948 = vmatprep.subr.bf16.mxu0 0
      %949 = vmatpush1.bf16.msra.mxu0 %v909
      %950 = vmatprep.subr.bf16.mxu0 0
      %951 = vmatpush1.bf16.msra.mxu0 %v910
      %952 = vmatprep.subr.bf16.mxu0 0
      %953 = vmatpush1.bf16.msra.mxu0 %v911
      %954 = vmatprep.subr.bf16.mxu0 0
      %955 = vmatpush1.bf16.msra.mxu0 %v912
      %956 = vmatprep.subr.bf16.mxu0 0
      %957 = vmatpush1.bf16.msra.mxu0 %v913
      %958 = vmatprep.subr.bf16.mxu0 0
      %959 = vmatpush1.bf16.msra.mxu0 %v914
      %960 = vmatprep.subr.bf16.mxu0 0
      %961 = vmatpush1.bf16.msra.mxu0 %v915
      %962 = vmatprep.subr.bf16.mxu0 0
      %963 = vmatpush1.bf16.msra.mxu0 %v916
      %964 = vmatprep.subr.bf16.mxu0 0
      %965 = vmatpush1.bf16.msra.mxu0 %v917
      %966 = vmatprep.mubr.bf16.mxu0 %v835
      %967 = vmatmul.mubr.bf16.gmra.mrb[0].mxu0 %v834
      %v968 = vpop.f32.mrb[0].mxu0
      %v969 = vadd.f32 %v808, %v968
      %v970 = vpop.f32.mrb[0].mxu0
      %v971 = vpop.f32.mrb[0].mxu0
      %v972 = vadd.f32 %v811, %v971
      %v973 = vpop.f32.mrb[0].mxu0
      %974 = vdwg.mxu0
      %s975 = scalar_lea.vmem %s1, 512
      %v976 = vld [vmem:[%s975] sm:$0xf]
      %v977 = vld [vmem:[%s975 + $0x4] sm:$0xf]
      %v978 = vld [vmem:[%s975 + $0x8] sm:$0xf]
      %v979 = vld [vmem:[%s975 + $0xc] sm:$0xf]
      %v980 = vld [vmem:[%s975 + $0x10] sm:$0xf]
      %v981 = vld [vmem:[%s975 + $0x14] sm:$0xf]
      %v982 = vld [vmem:[%s975 + $0x18] sm:$0xf]
      %v983 = vld [vmem:[%s975 + $0x1c] sm:$0xf]
      %v984 = vld [vmem:[%s975 + $0x20] sm:$0xf]
      %v985 = vld [vmem:[%s975 + $0x24] sm:$0xf]
      %v986 = vld [vmem:[%s975 + $0x28] sm:$0xf]
      %v987 = vld [vmem:[%s975 + $0x2c] sm:$0xf]
      %v988 = vld [vmem:[%s975 + $0x30] sm:$0xf]
      %v989 = vld [vmem:[%s975 + $0x34] sm:$0xf]
      %v990 = vld [vmem:[%s975 + $0x38] sm:$0xf]
      %v991 = vld [vmem:[%s975 + $0x3c] sm:$0xf]
      %v992 = vld [vmem:[%s975 + $0x40] sm:$0xf]
      %v993 = vld [vmem:[%s975 + $0x44] sm:$0xf]
      %v994 = vld [vmem:[%s975 + $0x48] sm:$0xf]
      %v995 = vld [vmem:[%s975 + $0x4c] sm:$0xf]
      %v996 = vld [vmem:[%s975 + $0x50] sm:$0xf]
      %v997 = vld [vmem:[%s975 + $0x54] sm:$0xf]
      %v998 = vld [vmem:[%s975 + $0x58] sm:$0xf]
      %v999 = vld [vmem:[%s975 + $0x5c] sm:$0xf]
      %v1000 = vld [vmem:[%s975 + $0x60] sm:$0xf]
      %v1001 = vld [vmem:[%s975 + $0x64] sm:$0xf]
      %v1002 = vld [vmem:[%s975 + $0x68] sm:$0xf]
      %v1003 = vld [vmem:[%s975 + $0x6c] sm:$0xf]
      %v1004 = vld [vmem:[%s975 + $0x70] sm:$0xf]
      %v1005 = vld [vmem:[%s975 + $0x74] sm:$0xf]
      %v1006 = vld [vmem:[%s975 + $0x78] sm:$0xf]
      %v1007 = vld [vmem:[%s975 + $0x7c] sm:$0xf]
      %s1008 = scalar_lea.vmem %s172, 12
      %v1009 = vld [vmem:[%s1008] sm:$0xf]
      %v1010 = vld [vmem:[%s1008 + $0x6] sm:$0xf]
      %v1011 = vld [vmem:[%s1008 + $0xc] sm:$0xf]
      %v1012 = vld [vmem:[%s1008 + $0x12] sm:$0xf]
      %s1013 = scalar_lea.vmem %s1, 640
      %v1014 = vld [vmem:[%s1013] sm:$0xf]
      %v1015 = vld [vmem:[%s1013 + $0x4] sm:$0xf]
      %v1016 = vld [vmem:[%s1013 + $0x8] sm:$0xf]
      %v1017 = vld [vmem:[%s1013 + $0xc] sm:$0xf]
      %v1018 = vld [vmem:[%s1013 + $0x10] sm:$0xf]
      %v1019 = vld [vmem:[%s1013 + $0x14] sm:$0xf]
      %v1020 = vld [vmem:[%s1013 + $0x18] sm:$0xf]
      %v1021 = vld [vmem:[%s1013 + $0x1c] sm:$0xf]
      %v1022 = vld [vmem:[%s1013 + $0x20] sm:$0xf]
      %v1023 = vld [vmem:[%s1013 + $0x24] sm:$0xf]
      %v1024 = vld [vmem:[%s1013 + $0x28] sm:$0xf]
      %v1025 = vld [vmem:[%s1013 + $0x2c] sm:$0xf]
      %v1026 = vld [vmem:[%s1013 + $0x30] sm:$0xf]
      %v1027 = vld [vmem:[%s1013 + $0x34] sm:$0xf]
      %v1028 = vld [vmem:[%s1013 + $0x38] sm:$0xf]
      %v1029 = vld [vmem:[%s1013 + $0x3c] sm:$0xf]
      %v1030 = vld [vmem:[%s1013 + $0x40] sm:$0xf]
      %v1031 = vld [vmem:[%s1013 + $0x44] sm:$0xf]
      %v1032 = vld [vmem:[%s1013 + $0x48] sm:$0xf]
      %v1033 = vld [vmem:[%s1013 + $0x4c] sm:$0xf]
      %v1034 = vld [vmem:[%s1013 + $0x50] sm:$0xf]
      %v1035 = vld [vmem:[%s1013 + $0x54] sm:$0xf]
      %v1036 = vld [vmem:[%s1013 + $0x58] sm:$0xf]
      %v1037 = vld [vmem:[%s1013 + $0x5c] sm:$0xf]
      %v1038 = vld [vmem:[%s1013 + $0x60] sm:$0xf]
      %v1039 = vld [vmem:[%s1013 + $0x64] sm:$0xf]
      %v1040 = vld [vmem:[%s1013 + $0x68] sm:$0xf]
      %v1041 = vld [vmem:[%s1013 + $0x6c] sm:$0xf]
      %v1042 = vld [vmem:[%s1013 + $0x70] sm:$0xf]
      %v1043 = vld [vmem:[%s1013 + $0x74] sm:$0xf]
      %v1044 = vld [vmem:[%s1013 + $0x78] sm:$0xf]
      %v1045 = vld [vmem:[%s1013 + $0x7c] sm:$0xf]
      %v1050 = vcombine.low %v1009, %v1010
      %v1051 = vcombine.low %v1011, %v1012
      %v1053 = vunpack.c.l.s4 1983009808
      %v1054 = vunpack.c.0.s8 %v1053
      %v1055 = vlaneseq
      %v1056 = vshrl.u32 %v1055, 7
      %v1057 = vsub.s32 %v1054, %v1056
      %v1058 = vrot.slane %v1050, %v1057
      %v1060 = vunpack.c.l.s4 1983009808
      %v1061 = vunpack.c.0.s8 %v1060
      %v1062 = vlaneseq
      %v1063 = vshrl.u32 %v1062, 7
      %v1064 = vsub.s32 %v1061, %v1063
      %v1065 = vrot.slane %v1051, %v1064
      %v1066 = vcombine.low %v1058, %v1065
      %v1067 = vcombine.high %v1058, %v1065
      %v1102 = vunpack.c.l.b16 %v1014
      %v1103 = vunpack.c.l.b16 %v1015
      %v1104 = vunpack.c.l.b16 %v1016
      %v1105 = vunpack.c.l.b16 %v1017
      %v1106 = vunpack.c.l.b16 %v1018
      %v1107 = vunpack.c.l.b16 %v1019
      %v1108 = vunpack.c.l.b16 %v1020
      %v1109 = vunpack.c.l.b16 %v1021
      %v1110 = vunpack.c.l.b16 %v1022
      %v1111 = vunpack.c.l.b16 %v1023
      %v1112 = vunpack.c.l.b16 %v1024
      %v1113 = vunpack.c.l.b16 %v1025
      %v1114 = vunpack.c.l.b16 %v1026
      %v1115 = vunpack.c.l.b16 %v1027
      %v1116 = vunpack.c.l.b16 %v1028
      %v1117 = vunpack.c.l.b16 %v1029
      %v1118 = vunpack.c.l.b16 %v1030
      %v1119 = vunpack.c.l.b16 %v1031
      %v1120 = vunpack.c.l.b16 %v1032
      %v1121 = vunpack.c.l.b16 %v1033
      %v1122 = vunpack.c.l.b16 %v1034
      %v1123 = vunpack.c.l.b16 %v1035
      %v1124 = vunpack.c.l.b16 %v1036
      %v1125 = vunpack.c.l.b16 %v1037
      %v1126 = vunpack.c.l.b16 %v1038
      %v1127 = vunpack.c.l.b16 %v1039
      %v1128 = vunpack.c.l.b16 %v1040
      %v1129 = vunpack.c.l.b16 %v1041
      %v1130 = vunpack.c.l.b16 %v1042
      %v1131 = vunpack.c.l.b16 %v1043
      %v1132 = vunpack.c.l.b16 %v1044
      %v1133 = vunpack.c.l.b16 %v1045
      %v1134 = vpack.c.b16 %v1103, %v1102
      %v1135 = vpack.c.b16 %v1105, %v1104
      %v1136 = vpack.c.b16 %v1107, %v1106
      %v1137 = vpack.c.b16 %v1109, %v1108
      %v1138 = vpack.c.b16 %v1111, %v1110
      %v1139 = vpack.c.b16 %v1113, %v1112
      %v1140 = vpack.c.b16 %v1115, %v1114
      %v1141 = vpack.c.b16 %v1117, %v1116
      %v1142 = vpack.c.b16 %v1119, %v1118
      %v1143 = vpack.c.b16 %v1121, %v1120
      %v1144 = vpack.c.b16 %v1123, %v1122
      %v1145 = vpack.c.b16 %v1125, %v1124
      %v1146 = vpack.c.b16 %v1127, %v1126
      %v1147 = vpack.c.b16 %v1129, %v1128
      %v1148 = vpack.c.b16 %v1131, %v1130
      %v1149 = vpack.c.b16 %v1133, %v1132
      %1166 = vmatprep.subr.bf16.mxu0 0
      %1167 = vmatpush1.bf16.msra.mxu0 %v1134
      %1168 = vmatprep.subr.bf16.mxu0 0
      %1169 = vmatpush1.bf16.msra.mxu0 %v1135
      %1170 = vmatprep.subr.bf16.mxu0 0
      %1171 = vmatpush1.bf16.msra.mxu0 %v1136
      %1172 = vmatprep.subr.bf16.mxu0 0
      %1173 = vmatpush1.bf16.msra.mxu0 %v1137
      %1174 = vmatprep.subr.bf16.mxu0 0
      %1175 = vmatpush1.bf16.msra.mxu0 %v1138
      %1176 = vmatprep.subr.bf16.mxu0 0
      %1177 = vmatpush1.bf16.msra.mxu0 %v1139
      %1178 = vmatprep.subr.bf16.mxu0 0
      %1179 = vmatpush1.bf16.msra.mxu0 %v1140
      %1180 = vmatprep.subr.bf16.mxu0 0
      %1181 = vmatpush1.bf16.msra.mxu0 %v1141
      %1182 = vmatprep.subr.bf16.mxu0 0
      %1183 = vmatpush1.bf16.msra.mxu0 %v1142
      %1184 = vmatprep.subr.bf16.mxu0 0
      %1185 = vmatpush1.bf16.msra.mxu0 %v1143
      %1186 = vmatprep.subr.bf16.mxu0 0
      %1187 = vmatpush1.bf16.msra.mxu0 %v1144
      %1188 = vmatprep.subr.bf16.mxu0 0
      %1189 = vmatpush1.bf16.msra.mxu0 %v1145
      %1190 = vmatprep.subr.bf16.mxu0 0
      %1191 = vmatpush1.bf16.msra.mxu0 %v1146
      %1192 = vmatprep.subr.bf16.mxu0 0
      %1193 = vmatpush1.bf16.msra.mxu0 %v1147
      %1194 = vmatprep.subr.bf16.mxu0 0
      %1195 = vmatpush1.bf16.msra.mxu0 %v1148
      %1196 = vmatprep.subr.bf16.mxu0 0
      %1197 = vmatpush1.bf16.msra.mxu0 %v1149
      %1198 = vmatprep.mubr.bf16.mxu0 %v1067
      %1199 = vmatmul.mubr.bf16.gmra.mrb[0].mxu0 %v1066
      %v1200 = vpop.f32.mrb[0].mxu0
      %v1201 = vadd.f32 0.0, %v1200
      %v1202 = vpop.f32.mrb[0].mxu0
      %v1203 = vpop.f32.mrb[0].mxu0
      %v1204 = vadd.f32 0.0, %v1203
      %v1205 = vpop.f32.mrb[0].mxu0
      %1206 = vdwg.mxu0
      %v1239 = vunpack.c.l.b16 %v976
      %v1240 = vunpack.c.l.b16 %v977
      %v1241 = vunpack.c.l.b16 %v978
      %v1242 = vunpack.c.l.b16 %v979
      %v1243 = vunpack.c.l.b16 %v980
      %v1244 = vunpack.c.l.b16 %v981
      %v1245 = vunpack.c.l.b16 %v982
      %v1246 = vunpack.c.l.b16 %v983
      %v1247 = vunpack.c.l.b16 %v984
      %v1248 = vunpack.c.l.b16 %v985
      %v1249 = vunpack.c.l.b16 %v986
      %v1250 = vunpack.c.l.b16 %v987
      %v1251 = vunpack.c.l.b16 %v988
      %v1252 = vunpack.c.l.b16 %v989
      %v1253 = vunpack.c.l.b16 %v990
      %v1254 = vunpack.c.l.b16 %v991
      %v1255 = vunpack.c.l.b16 %v992
      %v1256 = vunpack.c.l.b16 %v993
      %v1257 = vunpack.c.l.b16 %v994
      %v1258 = vunpack.c.l.b16 %v995
      %v1259 = vunpack.c.l.b16 %v996
      %v1260 = vunpack.c.l.b16 %v997
      %v1261 = vunpack.c.l.b16 %v998
      %v1262 = vunpack.c.l.b16 %v999
      %v1263 = vunpack.c.l.b16 %v1000
      %v1264 = vunpack.c.l.b16 %v1001
      %v1265 = vunpack.c.l.b16 %v1002
      %v1266 = vunpack.c.l.b16 %v1003
      %v1267 = vunpack.c.l.b16 %v1004
      %v1268 = vunpack.c.l.b16 %v1005
      %v1269 = vunpack.c.l.b16 %v1006
      %v1270 = vunpack.c.l.b16 %v1007
      %v1271 = vpack.c.b16 %v1240, %v1239
      %v1272 = vpack.c.b16 %v1242, %v1241
      %v1273 = vpack.c.b16 %v1244, %v1243
      %v1274 = vpack.c.b16 %v1246, %v1245
      %v1275 = vpack.c.b16 %v1248, %v1247
      %v1276 = vpack.c.b16 %v1250, %v1249
      %v1277 = vpack.c.b16 %v1252, %v1251
      %v1278 = vpack.c.b16 %v1254, %v1253
      %v1279 = vpack.c.b16 %v1256, %v1255
      %v1280 = vpack.c.b16 %v1258, %v1257
      %v1281 = vpack.c.b16 %v1260, %v1259
      %v1282 = vpack.c.b16 %v1262, %v1261
      %v1283 = vpack.c.b16 %v1264, %v1263
      %v1284 = vpack.c.b16 %v1266, %v1265
      %v1285 = vpack.c.b16 %v1268, %v1267
      %v1286 = vpack.c.b16 %v1270, %v1269
      %1303 = vmatprep.subr.bf16.mxu0 0
      %1304 = vmatpush1.bf16.msra.mxu0 %v1271
      %1305 = vmatprep.subr.bf16.mxu0 0
      %1306 = vmatpush1.bf16.msra.mxu0 %v1272
      %1307 = vmatprep.subr.bf16.mxu0 0
      %1308 = vmatpush1.bf16.msra.mxu0 %v1273
      %1309 = vmatprep.subr.bf16.mxu0 0
      %1310 = vmatpush1.bf16.msra.mxu0 %v1274
      %1311 = vmatprep.subr.bf16.mxu0 0
      %1312 = vmatpush1.bf16.msra.mxu0 %v1275
      %1313 = vmatprep.subr.bf16.mxu0 0
      %1314 = vmatpush1.bf16.msra.mxu0 %v1276
      %1315 = vmatprep.subr.bf16.mxu0 0
      %1316 = vmatpush1.bf16.msra.mxu0 %v1277
      %1317 = vmatprep.subr.bf16.mxu0 0
      %1318 = vmatpush1.bf16.msra.mxu0 %v1278
      %1319 = vmatprep.subr.bf16.mxu0 0
      %1320 = vmatpush1.bf16.msra.mxu0 %v1279
      %1321 = vmatprep.subr.bf16.mxu0 0
      %1322 = vmatpush1.bf16.msra.mxu0 %v1280
      %1323 = vmatprep.subr.bf16.mxu0 0
      %1324 = vmatpush1.bf16.msra.mxu0 %v1281
      %1325 = vmatprep.subr.bf16.mxu0 0
      %1326 = vmatpush1.bf16.msra.mxu0 %v1282
      %1327 = vmatprep.subr.bf16.mxu0 0
      %1328 = vmatpush1.bf16.msra.mxu0 %v1283
      %1329 = vmatprep.subr.bf16.mxu0 0
      %1330 = vmatpush1.bf16.msra.mxu0 %v1284
      %1331 = vmatprep.subr.bf16.mxu0 0
      %1332 = vmatpush1.bf16.msra.mxu0 %v1285
      %1333 = vmatprep.subr.bf16.mxu0 0
      %1334 = vmatpush1.bf16.msra.mxu0 %v1286
      %1335 = vmatprep.mubr.bf16.mxu0 %v278
      %1336 = vmatmul.mubr.bf16.gmra.mrb[0].mxu0 %v277
      %v1337 = vpop.f32.mrb[0].mxu0
      %v1338 = vadd.f32 %v1201, %v1337
      %v1339 = vpop.f32.mrb[0].mxu0
      %v1340 = vpop.f32.mrb[0].mxu0
      %v1341 = vadd.f32 %v1204, %v1340
      %v1342 = vpop.f32.mrb[0].mxu0
      %1343 = vdwg.mxu0
      %s1344 = scalar_lea.vmem %s1, 768
      %v1345 = vld [vmem:[%s1344] sm:$0xf]
      %v1346 = vld [vmem:[%s1344 + $0x4] sm:$0xf]
      %v1347 = vld [vmem:[%s1344 + $0x8] sm:$0xf]
      %v1348 = vld [vmem:[%s1344 + $0xc] sm:$0xf]
      %v1349 = vld [vmem:[%s1344 + $0x10] sm:$0xf]
      %v1350 = vld [vmem:[%s1344 + $0x14] sm:$0xf]
      %v1351 = vld [vmem:[%s1344 + $0x18] sm:$0xf]
      %v1352 = vld [vmem:[%s1344 + $0x1c] sm:$0xf]
      %v1353 = vld [vmem:[%s1344 + $0x20] sm:$0xf]
      %v1354 = vld [vmem:[%s1344 + $0x24] sm:$0xf]
      %v1355 = vld [vmem:[%s1344 + $0x28] sm:$0xf]
      %v1356 = vld [vmem:[%s1344 + $0x2c] sm:$0xf]
      %v1357 = vld [vmem:[%s1344 + $0x30] sm:$0xf]
      %v1358 = vld [vmem:[%s1344 + $0x34] sm:$0xf]
      %v1359 = vld [vmem:[%s1344 + $0x38] sm:$0xf]
      %v1360 = vld [vmem:[%s1344 + $0x3c] sm:$0xf]
      %v1361 = vld [vmem:[%s1344 + $0x40] sm:$0xf]
      %v1362 = vld [vmem:[%s1344 + $0x44] sm:$0xf]
      %v1363 = vld [vmem:[%s1344 + $0x48] sm:$0xf]
      %v1364 = vld [vmem:[%s1344 + $0x4c] sm:$0xf]
      %v1365 = vld [vmem:[%s1344 + $0x50] sm:$0xf]
      %v1366 = vld [vmem:[%s1344 + $0x54] sm:$0xf]
      %v1367 = vld [vmem:[%s1344 + $0x58] sm:$0xf]
      %v1368 = vld [vmem:[%s1344 + $0x5c] sm:$0xf]
      %v1369 = vld [vmem:[%s1344 + $0x60] sm:$0xf]
      %v1370 = vld [vmem:[%s1344 + $0x64] sm:$0xf]
      %v1371 = vld [vmem:[%s1344 + $0x68] sm:$0xf]
      %v1372 = vld [vmem:[%s1344 + $0x6c] sm:$0xf]
      %v1373 = vld [vmem:[%s1344 + $0x70] sm:$0xf]
      %v1374 = vld [vmem:[%s1344 + $0x74] sm:$0xf]
      %v1375 = vld [vmem:[%s1344 + $0x78] sm:$0xf]
      %v1376 = vld [vmem:[%s1344 + $0x7c] sm:$0xf]
      %v1377 = vld [vmem:[%s1008 + $0x2] sm:$0xf]
      %v1378 = vld [vmem:[%s1008 + $0x8] sm:$0xf]
      %v1379 = vld [vmem:[%s1008 + $0xe] sm:$0xf]
      %v1380 = vld [vmem:[%s1008 + $0x14] sm:$0xf]
      %s1381 = scalar_lea.vmem %s1, 896
      %v1382 = vld [vmem:[%s1381] sm:$0xf]
      %v1383 = vld [vmem:[%s1381 + $0x4] sm:$0xf]
      %v1384 = vld [vmem:[%s1381 + $0x8] sm:$0xf]
      %v1385 = vld [vmem:[%s1381 + $0xc] sm:$0xf]
      %v1386 = vld [vmem:[%s1381 + $0x10] sm:$0xf]
      %v1387 = vld [vmem:[%s1381 + $0x14] sm:$0xf]
      %v1388 = vld [vmem:[%s1381 + $0x18] sm:$0xf]
      %v1389 = vld [vmem:[%s1381 + $0x1c] sm:$0xf]
      %v1390 = vld [vmem:[%s1381 + $0x20] sm:$0xf]
      %v1391 = vld [vmem:[%s1381 + $0x24] sm:$0xf]
      %v1392 = vld [vmem:[%s1381 + $0x28] sm:$0xf]
      %v1393 = vld [vmem:[%s1381 + $0x2c] sm:$0xf]
      %v1394 = vld [vmem:[%s1381 + $0x30] sm:$0xf]
      %v1395 = vld [vmem:[%s1381 + $0x34] sm:$0xf]
      %v1396 = vld [vmem:[%s1381 + $0x38] sm:$0xf]
      %v1397 = vld [vmem:[%s1381 + $0x3c] sm:$0xf]
      %v1398 = vld [vmem:[%s1381 + $0x40] sm:$0xf]
      %v1399 = vld [vmem:[%s1381 + $0x44] sm:$0xf]
      %v1400 = vld [vmem:[%s1381 + $0x48] sm:$0xf]
      %v1401 = vld [vmem:[%s1381 + $0x4c] sm:$0xf]
      %v1402 = vld [vmem:[%s1381 + $0x50] sm:$0xf]
      %v1403 = vld [vmem:[%s1381 + $0x54] sm:$0xf]
      %v1404 = vld [vmem:[%s1381 + $0x58] sm:$0xf]
      %v1405 = vld [vmem:[%s1381 + $0x5c] sm:$0xf]
      %v1406 = vld [vmem:[%s1381 + $0x60] sm:$0xf]
      %v1407 = vld [vmem:[%s1381 + $0x64] sm:$0xf]
      %v1408 = vld [vmem:[%s1381 + $0x68] sm:$0xf]
      %v1409 = vld [vmem:[%s1381 + $0x6c] sm:$0xf]
      %v1410 = vld [vmem:[%s1381 + $0x70] sm:$0xf]
      %v1411 = vld [vmem:[%s1381 + $0x74] sm:$0xf]
      %v1412 = vld [vmem:[%s1381 + $0x78] sm:$0xf]
      %v1413 = vld [vmem:[%s1381 + $0x7c] sm:$0xf]
      %v1418 = vcombine.low %v1377, %v1378
      %v1419 = vcombine.low %v1379, %v1380
      %v1421 = vunpack.c.l.s4 1983009808
      %v1422 = vunpack.c.0.s8 %v1421
      %v1423 = vlaneseq
      %v1424 = vshrl.u32 %v1423, 7
      %v1425 = vsub.s32 %v1422, %v1424
      %v1426 = vrot.slane %v1418, %v1425
      %v1428 = vunpack.c.l.s4 1983009808
      %v1429 = vunpack.c.0.s8 %v1428
      %v1430 = vlaneseq
      %v1431 = vshrl.u32 %v1430, 7
      %v1432 = vsub.s32 %v1429, %v1431
      %v1433 = vrot.slane %v1419, %v1432
      %v1434 = vcombine.low %v1426, %v1433
      %v1435 = vcombine.high %v1426, %v1433
      %v1470 = vunpack.c.l.b16 %v1382
      %v1471 = vunpack.c.l.b16 %v1383
      %v1472 = vunpack.c.l.b16 %v1384
      %v1473 = vunpack.c.l.b16 %v1385
      %v1474 = vunpack.c.l.b16 %v1386
      %v1475 = vunpack.c.l.b16 %v1387
      %v1476 = vunpack.c.l.b16 %v1388
      %v1477 = vunpack.c.l.b16 %v1389
      %v1478 = vunpack.c.l.b16 %v1390
      %v1479 = vunpack.c.l.b16 %v1391
      %v1480 = vunpack.c.l.b16 %v1392
      %v1481 = vunpack.c.l.b16 %v1393
      %v1482 = vunpack.c.l.b16 %v1394
      %v1483 = vunpack.c.l.b16 %v1395
      %v1484 = vunpack.c.l.b16 %v1396
      %v1485 = vunpack.c.l.b16 %v1397
      %v1486 = vunpack.c.l.b16 %v1398
      %v1487 = vunpack.c.l.b16 %v1399
      %v1488 = vunpack.c.l.b16 %v1400
      %v1489 = vunpack.c.l.b16 %v1401
      %v1490 = vunpack.c.l.b16 %v1402
      %v1491 = vunpack.c.l.b16 %v1403
      %v1492 = vunpack.c.l.b16 %v1404
      %v1493 = vunpack.c.l.b16 %v1405
      %v1494 = vunpack.c.l.b16 %v1406
      %v1495 = vunpack.c.l.b16 %v1407
      %v1496 = vunpack.c.l.b16 %v1408
      %v1497 = vunpack.c.l.b16 %v1409
      %v1498 = vunpack.c.l.b16 %v1410
      %v1499 = vunpack.c.l.b16 %v1411
      %v1500 = vunpack.c.l.b16 %v1412
      %v1501 = vunpack.c.l.b16 %v1413
      %v1502 = vpack.c.b16 %v1471, %v1470
      %v1503 = vpack.c.b16 %v1473, %v1472
      %v1504 = vpack.c.b16 %v1475, %v1474
      %v1505 = vpack.c.b16 %v1477, %v1476
      %v1506 = vpack.c.b16 %v1479, %v1478
      %v1507 = vpack.c.b16 %v1481, %v1480
      %v1508 = vpack.c.b16 %v1483, %v1482
      %v1509 = vpack.c.b16 %v1485, %v1484
      %v1510 = vpack.c.b16 %v1487, %v1486
      %v1511 = vpack.c.b16 %v1489, %v1488
      %v1512 = vpack.c.b16 %v1491, %v1490
      %v1513 = vpack.c.b16 %v1493, %v1492
      %v1514 = vpack.c.b16 %v1495, %v1494
      %v1515 = vpack.c.b16 %v1497, %v1496
      %v1516 = vpack.c.b16 %v1499, %v1498
      %v1517 = vpack.c.b16 %v1501, %v1500
      %1534 = vmatprep.subr.bf16.mxu0 0
      %1535 = vmatpush1.bf16.msra.mxu0 %v1502
      %1536 = vmatprep.subr.bf16.mxu0 0
      %1537 = vmatpush1.bf16.msra.mxu0 %v1503
      %1538 = vmatprep.subr.bf16.mxu0 0
      %1539 = vmatpush1.bf16.msra.mxu0 %v1504
      %1540 = vmatprep.subr.bf16.mxu0 0
      %1541 = vmatpush1.bf16.msra.mxu0 %v1505
      %1542 = vmatprep.subr.bf16.mxu0 0
      %1543 = vmatpush1.bf16.msra.mxu0 %v1506
      %1544 = vmatprep.subr.bf16.mxu0 0
      %1545 = vmatpush1.bf16.msra.mxu0 %v1507
      %1546 = vmatprep.subr.bf16.mxu0 0
      %1547 = vmatpush1.bf16.msra.mxu0 %v1508
      %1548 = vmatprep.subr.bf16.mxu0 0
      %1549 = vmatpush1.bf16.msra.mxu0 %v1509
      %1550 = vmatprep.subr.bf16.mxu0 0
      %1551 = vmatpush1.bf16.msra.mxu0 %v1510
      %1552 = vmatprep.subr.bf16.mxu0 0
      %1553 = vmatpush1.bf16.msra.mxu0 %v1511
      %1554 = vmatprep.subr.bf16.mxu0 0
      %1555 = vmatpush1.bf16.msra.mxu0 %v1512
      %1556 = vmatprep.subr.bf16.mxu0 0
      %1557 = vmatpush1.bf16.msra.mxu0 %v1513
      %1558 = vmatprep.subr.bf16.mxu0 0
      %1559 = vmatpush1.bf16.msra.mxu0 %v1514
      %1560 = vmatprep.subr.bf16.mxu0 0
      %1561 = vmatpush1.bf16.msra.mxu0 %v1515
      %1562 = vmatprep.subr.bf16.mxu0 0
      %1563 = vmatpush1.bf16.msra.mxu0 %v1516
      %1564 = vmatprep.subr.bf16.mxu0 0
      %1565 = vmatpush1.bf16.msra.mxu0 %v1517
      %1566 = vmatprep.mubr.bf16.mxu0 %v1435
      %1567 = vmatmul.mubr.bf16.gmra.mrb[0].mxu0 %v1434
      %v1568 = vpop.f32.mrb[0].mxu0
      %v1569 = vadd.f32 0.0, %v1568
      %v1570 = vpop.f32.mrb[0].mxu0
      %v1571 = vpop.f32.mrb[0].mxu0
      %v1572 = vadd.f32 0.0, %v1571
      %v1573 = vpop.f32.mrb[0].mxu0
      %1574 = vdwg.mxu0
      %v1607 = vunpack.c.l.b16 %v1345
      %v1608 = vunpack.c.l.b16 %v1346
      %v1609 = vunpack.c.l.b16 %v1347
      %v1610 = vunpack.c.l.b16 %v1348
      %v1611 = vunpack.c.l.b16 %v1349
      %v1612 = vunpack.c.l.b16 %v1350
      %v1613 = vunpack.c.l.b16 %v1351
      %v1614 = vunpack.c.l.b16 %v1352
      %v1615 = vunpack.c.l.b16 %v1353
      %v1616 = vunpack.c.l.b16 %v1354
      %v1617 = vunpack.c.l.b16 %v1355
      %v1618 = vunpack.c.l.b16 %v1356
      %v1619 = vunpack.c.l.b16 %v1357
      %v1620 = vunpack.c.l.b16 %v1358
      %v1621 = vunpack.c.l.b16 %v1359
      %v1622 = vunpack.c.l.b16 %v1360
      %v1623 = vunpack.c.l.b16 %v1361
      %v1624 = vunpack.c.l.b16 %v1362
      %v1625 = vunpack.c.l.b16 %v1363
      %v1626 = vunpack.c.l.b16 %v1364
      %v1627 = vunpack.c.l.b16 %v1365
      %v1628 = vunpack.c.l.b16 %v1366
      %v1629 = vunpack.c.l.b16 %v1367
      %v1630 = vunpack.c.l.b16 %v1368
      %v1631 = vunpack.c.l.b16 %v1369
      %v1632 = vunpack.c.l.b16 %v1370
      %v1633 = vunpack.c.l.b16 %v1371
      %v1634 = vunpack.c.l.b16 %v1372
      %v1635 = vunpack.c.l.b16 %v1373
      %v1636 = vunpack.c.l.b16 %v1374
      %v1637 = vunpack.c.l.b16 %v1375
      %v1638 = vunpack.c.l.b16 %v1376
      %v1639 = vpack.c.b16 %v1608, %v1607
      %v1640 = vpack.c.b16 %v1610, %v1609
      %v1641 = vpack.c.b16 %v1612, %v1611
      %v1642 = vpack.c.b16 %v1614, %v1613
      %v1643 = vpack.c.b16 %v1616, %v1615
      %v1644 = vpack.c.b16 %v1618, %v1617
      %v1645 = vpack.c.b16 %v1620, %v1619
      %v1646 = vpack.c.b16 %v1622, %v1621
      %v1647 = vpack.c.b16 %v1624, %v1623
      %v1648 = vpack.c.b16 %v1626, %v1625
      %v1649 = vpack.c.b16 %v1628, %v1627
      %v1650 = vpack.c.b16 %v1630, %v1629
      %v1651 = vpack.c.b16 %v1632, %v1631
      %v1652 = vpack.c.b16 %v1634, %v1633
      %v1653 = vpack.c.b16 %v1636, %v1635
      %v1654 = vpack.c.b16 %v1638, %v1637
      %1671 = vmatprep.subr.bf16.mxu0 0
      %1672 = vmatpush1.bf16.msra.mxu0 %v1639
      %1673 = vmatprep.subr.bf16.mxu0 0
      %1674 = vmatpush1.bf16.msra.mxu0 %v1640
      %1675 = vmatprep.subr.bf16.mxu0 0
      %1676 = vmatpush1.bf16.msra.mxu0 %v1641
      %1677 = vmatprep.subr.bf16.mxu0 0
      %1678 = vmatpush1.bf16.msra.mxu0 %v1642
      %1679 = vmatprep.subr.bf16.mxu0 0
      %1680 = vmatpush1.bf16.msra.mxu0 %v1643
      %1681 = vmatprep.subr.bf16.mxu0 0
      %1682 = vmatpush1.bf16.msra.mxu0 %v1644
      %1683 = vmatprep.subr.bf16.mxu0 0
      %1684 = vmatpush1.bf16.msra.mxu0 %v1645
      %1685 = vmatprep.subr.bf16.mxu0 0
      %1686 = vmatpush1.bf16.msra.mxu0 %v1646
      %1687 = vmatprep.subr.bf16.mxu0 0
      %1688 = vmatpush1.bf16.msra.mxu0 %v1647
      %1689 = vmatprep.subr.bf16.mxu0 0
      %1690 = vmatpush1.bf16.msra.mxu0 %v1648
      %1691 = vmatprep.subr.bf16.mxu0 0
      %1692 = vmatpush1.bf16.msra.mxu0 %v1649
      %1693 = vmatprep.subr.bf16.mxu0 0
      %1694 = vmatpush1.bf16.msra.mxu0 %v1650
      %1695 = vmatprep.subr.bf16.mxu0 0
      %1696 = vmatpush1.bf16.msra.mxu0 %v1651
      %1697 = vmatprep.subr.bf16.mxu0 0
      %1698 = vmatpush1.bf16.msra.mxu0 %v1652
      %1699 = vmatprep.subr.bf16.mxu0 0
      %1700 = vmatpush1.bf16.msra.mxu0 %v1653
      %1701 = vmatprep.subr.bf16.mxu0 0
      %1702 = vmatpush1.bf16.msra.mxu0 %v1654
      %1703 = vmatprep.mubr.bf16.mxu0 %v674
      %1704 = vmatmul.mubr.bf16.gmra.mrb[0].mxu0 %v673
      %v1705 = vpop.f32.mrb[0].mxu0
      %v1706 = vadd.f32 %v1569, %v1705
      %v1707 = vpop.f32.mrb[0].mxu0
      %v1708 = vpop.f32.mrb[0].mxu0
      %v1709 = vadd.f32 %v1572, %v1708
      %v1710 = vpop.f32.mrb[0].mxu0
      %1711 = vdwg.mxu0
      %v1712 = vadd.f32 %v573, %v576
      %v1713 = vrot.slane %v1712, 4
      %v1714 = vadd.f32 %v1712, %v1713
      %v1715 = vrot.slane %v1714, 2
      %v1716 = vadd.f32 %v1714, %v1715
      %v1717 = vrot.slane %v1716, 1
      %v1718 = vadd.f32 %v1716, %v1717
      %v1719 = vadd.f32 %v1718, 0.0
      %v1720 = vmul.f32 %v573, %v573
      %v1721 = vmul.f32 %v576, %v576
      %v1722 = vadd.f32 %v1720, %v1721
      %v1723 = vrot.slane %v1722, 4
      %v1724 = vadd.f32 %v1722, %v1723
      %v1725 = vrot.slane %v1724, 2
      %v1726 = vadd.f32 %v1724, %v1725
      %v1727 = vrot.slane %v1726, 1
      %v1728 = vadd.f32 %v1726, %v1727
      %v1729 = vadd.f32 %v1728, 0.0
      %v1730 = vadd.f32 %v969, %v972
      %v1731 = vrot.slane %v1730, 4
      %v1732 = vadd.f32 %v1730, %v1731
      %v1733 = vrot.slane %v1732, 2
      %v1734 = vadd.f32 %v1732, %v1733
      %v1735 = vrot.slane %v1734, 1
      %v1736 = vadd.f32 %v1734, %v1735
      %v1737 = vadd.f32 %v1719, %v1736
      %v1738 = vmul.f32 %v969, %v969
      %v1739 = vmul.f32 %v972, %v972
      %v1740 = vadd.f32 %v1738, %v1739
      %v1741 = vrot.slane %v1740, 4
      %v1742 = vadd.f32 %v1740, %v1741
      %v1743 = vrot.slane %v1742, 2
      %v1744 = vadd.f32 %v1742, %v1743
      %v1745 = vrot.slane %v1744, 1
      %v1746 = vadd.f32 %v1744, %v1745
      %v1747 = vadd.f32 %v1729, %v1746
      %v1748 = vadd.f32 %v1338, %v1341
      %v1749 = vrot.slane %v1748, 4
      %v1750 = vadd.f32 %v1748, %v1749
      %v1751 = vrot.slane %v1750, 2
      %v1752 = vadd.f32 %v1750, %v1751
      %v1753 = vrot.slane %v1752, 1
      %v1754 = vadd.f32 %v1752, %v1753
      %v1755 = vadd.f32 %v1737, %v1754
      %v1756 = vmul.f32 %v1338, %v1338
      %v1757 = vmul.f32 %v1341, %v1341
      %v1758 = vadd.f32 %v1756, %v1757
      %v1759 = vrot.slane %v1758, 4
      %v1760 = vadd.f32 %v1758, %v1759
      %v1761 = vrot.slane %v1760, 2
      %v1762 = vadd.f32 %v1760, %v1761
      %v1763 = vrot.slane %v1762, 1
      %v1764 = vadd.f32 %v1762, %v1763
      %v1765 = vadd.f32 %v1747, %v1764
      %v1766 = vadd.f32 %v1706, %v1709
      %v1767 = vrot.slane %v1766, 4
      %v1768 = vadd.f32 %v1766, %v1767
      %v1769 = vrot.slane %v1768, 2
      %v1770 = vadd.f32 %v1768, %v1769
      %v1771 = vrot.slane %v1770, 1
      %v1772 = vadd.f32 %v1770, %v1771
      %v1773 = vadd.f32 %v1755, %v1772
      %v1774 = vmul.f32 %v1706, %v1706
      %v1775 = vmul.f32 %v1709, %v1709
      %v1776 = vadd.f32 %v1774, %v1775
      %v1777 = vrot.slane %v1776, 4
      %v1778 = vadd.f32 %v1776, %v1777
      %v1779 = vrot.slane %v1778, 2
      %v1780 = vadd.f32 %v1778, %v1779
      %v1781 = vrot.slane %v1780, 1
      %v1782 = vadd.f32 %v1780, %v1781
      %v1783 = vadd.f32 %v1765, %v1782
      %vm1784 = vcmask 1040384
      %v1785 = vsel %vm1784, %v1773, %v1783
      %1786 = vst [vmem:[%s181] sm:$0x3] %v1785
      %v1787 = vpack.c.bf16 %v576, %v573
      %v1789 = vcombine.high %v1787, %v1787
      %v1791 = vunpack.c.l.s4 1983009808
      %v1792 = vunpack.c.0.s8 %v1791
      %v1793 = vlaneseq
      %v1794 = vshrl.u32 %v1793, 7
      %v1795 = vsub.s32 %v1792, %v1794
      %v1796 = vrot.slane %v1787, %v1795
      %v1798 = vunpack.c.l.s4 1983009808
      %v1799 = vunpack.c.0.s8 %v1798
      %v1800 = vlaneseq
      %v1801 = vshrl.u32 %v1800, 7
      %v1802 = vsub.s32 %v1799, %v1801
      %v1803 = vrot.slane %v1789, %v1802
      %v1804 = vcombine.high %v1796, %v1796
      %v1805 = vcombine.high %v1803, %v1803
      %v1806 = vpack.c.bf16 %v972, %v969
      %v1808 = vcombine.high %v1806, %v1806
      %v1810 = vunpack.c.l.s4 1983009808
      %v1811 = vunpack.c.0.s8 %v1810
      %v1812 = vlaneseq
      %v1813 = vshrl.u32 %v1812, 7
      %v1814 = vsub.s32 %v1811, %v1813
      %v1815 = vrot.slane %v1806, %v1814
      %v1817 = vunpack.c.l.s4 1983009808
      %v1818 = vunpack.c.0.s8 %v1817
      %v1819 = vlaneseq
      %v1820 = vshrl.u32 %v1819, 7
      %v1821 = vsub.s32 %v1818, %v1820
      %v1822 = vrot.slane %v1808, %v1821
      %v1823 = vcombine.high %v1815, %v1815
      %v1824 = vcombine.high %v1822, %v1822
      %v1825 = vpack.c.bf16 %v1341, %v1338
      %v1827 = vcombine.high %v1825, %v1825
      %v1829 = vunpack.c.l.s4 1983009808
      %v1830 = vunpack.c.0.s8 %v1829
      %v1831 = vlaneseq
      %v1832 = vshrl.u32 %v1831, 7
      %v1833 = vsub.s32 %v1830, %v1832
      %v1834 = vrot.slane %v1825, %v1833
      %v1836 = vunpack.c.l.s4 1983009808
      %v1837 = vunpack.c.0.s8 %v1836
      %v1838 = vlaneseq
      %v1839 = vshrl.u32 %v1838, 7
      %v1840 = vsub.s32 %v1837, %v1839
      %v1841 = vrot.slane %v1827, %v1840
      %v1842 = vcombine.high %v1834, %v1834
      %v1843 = vcombine.high %v1841, %v1841
      %v1844 = vpack.c.bf16 %v1709, %v1706
      %v1846 = vcombine.high %v1844, %v1844
      %v1848 = vunpack.c.l.s4 1983009808
      %v1849 = vunpack.c.0.s8 %v1848
      %v1850 = vlaneseq
      %v1851 = vshrl.u32 %v1850, 7
      %v1852 = vsub.s32 %v1849, %v1851
      %v1853 = vrot.slane %v1844, %v1852
      %v1855 = vunpack.c.l.s4 1983009808
      %v1856 = vunpack.c.0.s8 %v1855
      %v1857 = vlaneseq
      %v1858 = vshrl.u32 %v1857, 7
      %v1859 = vsub.s32 %v1856, %v1858
      %v1860 = vrot.slane %v1846, %v1859
      %v1861 = vcombine.high %v1853, %v1853
      %v1862 = vcombine.high %v1860, %v1860
      %v1863 = vcombine.low %v1796, %v1815
      %v1865 = vunpack.c.l.s4 1983009808
      %v1866 = vunpack.c.0.s8 %v1865
      %v1867 = vlaneseq
      %v1868 = vshrl.u32 %v1867, 7
      %v1869 = vsub.s32 %v1866, %v1868
      %v1870 = vrot.slane %v1863, %v1869
      %v1871 = vcombine.low %v1834, %v1853
      %v1873 = vunpack.c.l.s4 1983009808
      %v1874 = vunpack.c.0.s8 %v1873
      %v1875 = vlaneseq
      %v1876 = vshrl.u32 %v1875, 7
      %v1877 = vsub.s32 %v1874, %v1876
      %v1878 = vrot.slane %v1871, %v1877
      %v1879 = vcombine.low %v1804, %v1823
      %v1881 = vunpack.c.l.s4 1983009808
      %v1882 = vunpack.c.0.s8 %v1881
      %v1883 = vlaneseq
      %v1884 = vshrl.u32 %v1883, 7
      %v1885 = vsub.s32 %v1882, %v1884
      %v1886 = vrot.slane %v1879, %v1885
      %v1887 = vcombine.low %v1842, %v1861
      %v1889 = vunpack.c.l.s4 1983009808
      %v1890 = vunpack.c.0.s8 %v1889
      %v1891 = vlaneseq
      %v1892 = vshrl.u32 %v1891, 7
      %v1893 = vsub.s32 %v1890, %v1892
      %v1894 = vrot.slane %v1887, %v1893
      %v1895 = vcombine.low %v1803, %v1822
      %v1897 = vunpack.c.l.s4 1983009808
      %v1898 = vunpack.c.0.s8 %v1897
      %v1899 = vlaneseq
      %v1900 = vshrl.u32 %v1899, 7
      %v1901 = vsub.s32 %v1898, %v1900
      %v1902 = vrot.slane %v1895, %v1901
      %v1903 = vcombine.low %v1841, %v1860
      %v1905 = vunpack.c.l.s4 1983009808
      %v1906 = vunpack.c.0.s8 %v1905
      %v1907 = vlaneseq
      %v1908 = vshrl.u32 %v1907, 7
      %v1909 = vsub.s32 %v1906, %v1908
      %v1910 = vrot.slane %v1903, %v1909
      %v1911 = vcombine.low %v1805, %v1824
      %v1913 = vunpack.c.l.s4 1983009808
      %v1914 = vunpack.c.0.s8 %v1913
      %v1915 = vlaneseq
      %v1916 = vshrl.u32 %v1915, 7
      %v1917 = vsub.s32 %v1914, %v1916
      %v1918 = vrot.slane %v1911, %v1917
      %v1919 = vcombine.low %v1843, %v1862
      %v1921 = vunpack.c.l.s4 1983009808
      %v1922 = vunpack.c.0.s8 %v1921
      %v1923 = vlaneseq
      %v1924 = vshrl.u32 %v1923, 7
      %v1925 = vsub.s32 %v1922, %v1924
      %v1926 = vrot.slane %v1919, %v1925
      %1935 = vst [vmem:[%s177] sm:$0xf] %v1870
      %1936 = vst [vmem:[%s177 + $0x4] sm:$0xf] %v1878
      %1937 = vst [vmem:[%s177 + $0x8] sm:$0xf] %v1886
      %1938 = vst [vmem:[%s177 + $0xc] sm:$0xf] %v1894
      %1939 = vst [vmem:[%s177 + $0x10] sm:$0xf] %v1902
      %1940 = vst [vmem:[%s177 + $0x14] sm:$0xf] %v1910
      %1941 = vst [vmem:[%s177 + $0x18] sm:$0xf] %v1918
      %1942 = vst [vmem:[%s177 + $0x1c] sm:$0xf] %v1926
      %p1943 = scmp.lt.s32.totalorder %s15, 1
      %s1944 = scalar_select %p1943, %s15, 1
      %s1945 = smul.addr %s1944, 16
      %s1946 = smul.addr %s1945, 2
      %s1947 = scalar_lea.vmem %s2, %s1946
      %p1948 = scmp.lt.s32.totalorder %s15, 1
      %s1949 = scalar_select %p1948, %s15, 1
      %s1950 = smul.addr %s1949, 2
      %s1951 = scalar_lea.vmem %s3, %s1950
      // Predicated region
      $region29: #{decoder_forward.7} parent=27 // pred_check
        %p1952 = pneg %p80
      $region30: #{decoder_forward.7} parent=27 // pred_check_branch
        %1954 = sbr.rel (%p1952) target = $region32
      $region31: #{decoder_forward.7} parent=27 // pred_region
        _
      $region32: #{decoder_forward.7} parent=27 // pred_fallthru
        _
      // Predicated region
      $region33: #{decoder_forward.7} parent=27 // pred_check
        %p1955 = pneg %p106
      $region34: #{decoder_forward.7} parent=27 // pred_check_branch
        %1957 = sbr.rel (%p1955) target = $region36
      $region35: #{decoder_forward.7} parent=27 // pred_region
        _
      $region36: #{decoder_forward.7} parent=27 // pred_fallthru
        _
    $region28: #{decoder_forward.7} parent=5 // pred_fallthru
      _
    %p1958 = scmp.le.s32.totalorder 2, %s10
    // Predicated region
    $region37: #{decoder_forward.7} parent=5 // pred_check
      %p1959 = pneg %p1958
    $region38: #{decoder_forward.7} parent=5 // pred_check_branch
      %1961 = sbr.rel (%p1959) target = $region40
    $region39: #{decoder_forward.7} parent=5 // pred_region
      %s1962 = ssub.s32 %s10, 2
      // Predicated region
      $region41: #{decoder_forward.7} parent=39 // pred_check
        %p1963 = pneg %p86
      $region42: #{decoder_forward.7} parent=39 // pred_check_branch
        %1965 = sbr.rel (%p1963) target = $region44
      $region43: #{decoder_forward.7} parent=39 // pred_region
        %p1966 = scmp.lt.s32.totalorder %s16, 1
        %s1967 = scalar_select %p1966, %s16, 1
        %s1968 = smul.addr %s1967, 16
        %s1969 = smul.addr %s1968, 2
        %s1970 = scalar_lea.vmem %s2, %s1969
      $region44: #{decoder_forward.7} parent=39 // pred_fallthru
        _
      // Predicated region
      $region45: #{decoder_forward.7} parent=39 // pred_check
        %p1971 = pneg %p112
      $region46: #{decoder_forward.7} parent=39 // pred_check_branch
        %1973 = sbr.rel (%p1971) target = $region48
      $region47: #{decoder_forward.7} parent=39 // pred_region
        %p1974 = scmp.lt.s32.totalorder %s16, 1
        %s1975 = scalar_select %p1974, %s16, 1
        %s1976 = smul.addr %s1975, 2
        %s1977 = scalar_lea.vmem %s3, %s1976
      $region48: #{decoder_forward.7} parent=39 // pred_fallthru
        _
    $region40: #{decoder_forward.7} parent=5 // pred_fallthru
      _
  $region6: #{decoder_forward.7} parent=0 // loop_footer
    %s14 = sadd.s32 1, %s10
  $region7: #{decoder_forward.7} parent=0 // loop_footer_branch
    %9 = sbr.rel target = $region3
  $region8: #{decoder_forward.7} parent=0 // loop_exit
    _

// kernel: decoder_forward.8
$region0: #{decoder_forward.8}
  #allocation0 [shape = 'u32[]', space=smem, size = 0x4, offset = 0x4, fixed_abs, tag = 'smem constant byte address 0x4 - core index']
  #allocation1 [shape = 'u32[144,128]{1,0:T(1,128)}', space=vmem, size = 0x12000, scoped, tag = 'internal scratch']
  %s0 = inlined_call_operand.vmem [shape: bf16[2,8,8,128], index: 0, kind: input, shape index: {}]
  %s1 = inlined_call_operand.vmem [shape: f32[1,128], index: 1, kind: input, shape index: {}]
  %s2 = inlined_call_operand.vmem [shape: f32[1,128], index: 2, kind: input, shape index: {}]
  %s3 = inlined_call_operand.vmem [shape: bf16[2,10,8,384], index: 3, kind: output, shape index: {}]
  %s4 = sld [smem:[#allocation0]]
  $region45: #{decoder_forward.8} parent=0
    _
  %s6 = ssub.s32 1, %s4
  %s7 = scalar_select 0, %s6, %s4
  loop: start=0, step=1, limit=4
  $region2: #{decoder_forward.8} parent=0 // loop_pre_header
    _
  $region3: #{decoder_forward.8} parent=0 // loop_header
    %s9 = sphi 0, %s13
    %p10 = scmp.ge.s32.totalorder %s9, 4
    %s19 = sphi 0, %s21
    %s22 = sphi 0, %s19
    %s23 = sphi 0, %s22
    %s39 = sphi 0, %s23
    %s43 = sphi 0, %s43
    %s45 = sphi 0, %s43
    %s46 = sphi 0, %s45
    %s60 = sphi 0, %s46
    %s64 = sphi 0, %s64
    %s66 = sphi 0, %s64
    %s67 = sphi 0, %s66
    %s81 = sphi 0, %s67
    %s87 = sphi 0, %s89
    %s90 = sphi 0, %s87
    %s91 = sphi 0, %s90
    %s107 = sphi 0, %s91
  $region4: #{decoder_forward.8} parent=0 // loop_header_branch
    %12 = sbr.rel (%p10) target = $region8
  $region5: #{decoder_forward.8} parent=0 // loop_body
    %s14 = ssub.s32 %s9, 1
    %s15 = ssub.s32 %s9, 2
    %s16 = sadd.s32 %s9, 1
    %s17 = ssub.s32 %s9, %s16
    %p18 = scmp.eq.s32.totalorder %s17, 0
    %s20 = sadd.s32 %s19, 1
    %s21 = scalar_select %p18, %s19, %s20
    %p24 = pneg %p18
    %p25 = scmp.eq.s32.totalorder %s9, 1
    %p26 = por %p24, %p25
    %p27 = scmp.ne.s32.totalorder %s19, %s22
    %p28 = scmp.eq.s32.totalorder %s9, 0
    %p29 = por %p27, %p28
    %p30 = scmp.ne.s32.totalorder %s19, %s22
    %p31 = scmp.eq.s32.totalorder %s14, 1
    %p32 = por %p30, %p31
    %p33 = scmp.ne.s32.totalorder %s22, %s23
    %p34 = scmp.eq.s32.totalorder %s14, 0
    %p35 = por %p33, %p34
    %p36 = scmp.ne.s32.totalorder %s22, %s23
    %p37 = scmp.eq.s32.totalorder %s15, 1
    %p38 = por %p36, %p37
    %p40 = scmp.ne.s32.totalorder %s23, %s39
    %p41 = scmp.eq.s32.totalorder %s15, 0
    %p42 = por %p40, %p41
    %s44 = sadd.s32 %s43, 1
    %p47 = scmp.eq.s32.totalorder %s9, 1
    %p48 = scmp.ne.s32.totalorder %s43, %s45
    %p49 = scmp.eq.s32.totalorder %s9, 0
    %p50 = por %p48, %p49
    %p51 = scmp.ne.s32.totalorder %s43, %s45
    %p52 = scmp.eq.s32.totalorder %s14, 1
    %p53 = por %p51, %p52
    %p54 = scmp.ne.s32.totalorder %s45, %s46
    %p55 = scmp.eq.s32.totalorder %s14, 0
    %p56 = por %p54, %p55
    %p57 = scmp.ne.s32.totalorder %s45, %s46
    %p58 = scmp.eq.s32.totalorder %s15, 1
    %p59 = por %p57, %p58
    %p61 = scmp.ne.s32.totalorder %s46, %s60
    %p62 = scmp.eq.s32.totalorder %s15, 0
    %p63 = por %p61, %p62
    %s65 = sadd.s32 %s64, 1
    %p68 = scmp.eq.s32.totalorder %s9, 1
    %p69 = scmp.ne.s32.totalorder %s64, %s66
    %p70 = scmp.eq.s32.totalorder %s9, 0
    %p71 = por %p69, %p70
    %p72 = scmp.ne.s32.totalorder %s64, %s66
    %p73 = scmp.eq.s32.totalorder %s14, 1
    %p74 = por %p72, %p73
    %p75 = scmp.ne.s32.totalorder %s66, %s67
    %p76 = scmp.eq.s32.totalorder %s14, 0
    %p77 = por %p75, %p76
    %p78 = scmp.ne.s32.totalorder %s66, %s67
    %p79 = scmp.eq.s32.totalorder %s15, 1
    %p80 = por %p78, %p79
    %p82 = scmp.ne.s32.totalorder %s67, %s81
    %p83 = scmp.eq.s32.totalorder %s15, 0
    %p84 = por %p82, %p83
    %s85 = ssub.s32 %s9, %s16
    %p86 = scmp.eq.s32.totalorder %s85, 0
    %s88 = sadd.s32 %s87, 1
    %s89 = scalar_select %p86, %s87, %s88
    %p92 = pneg %p86
    %p93 = scmp.eq.s32.totalorder %s9, 1
    %p94 = por %p92, %p93
    %p95 = scmp.ne.s32.totalorder %s87, %s90
    %p96 = scmp.eq.s32.totalorder %s9, 0
    %p97 = por %p95, %p96
    %p98 = scmp.ne.s32.totalorder %s87, %s90
    %p99 = scmp.eq.s32.totalorder %s14, 1
    %p100 = por %p98, %p99
    %p101 = scmp.ne.s32.totalorder %s90, %s91
    %p102 = scmp.eq.s32.totalorder %s14, 0
    %p103 = por %p101, %p102
    %p104 = scmp.ne.s32.totalorder %s90, %s91
    %p105 = scmp.eq.s32.totalorder %s15, 1
    %p106 = por %p104, %p105
    %p108 = scmp.ne.s32.totalorder %s91, %s107
    %p109 = scmp.eq.s32.totalorder %s15, 0
    %p110 = por %p108, %p109
    %p111 = scmp.le.s32.totalorder 1, %s9
    %p112 = scmp.lt.s32.totalorder %s9, 3
    %p113 = pnand %p111, %p112
    %p114 = pneg %p113
    // Predicated region
    $region9: #{decoder_forward.8} parent=5 // pred_check
      _
    $region10: #{decoder_forward.8} parent=5 // pred_check_branch
      %116 = sbr.rel (%p113) target = $region12
    $region11: #{decoder_forward.8} parent=5 // pred_region
      %s117 = ssub.s32 %s9, 1
      // Predicated region
      $region13: #{decoder_forward.8} parent=11 // pred_check
        %p118 = pneg %p56
      $region14: #{decoder_forward.8} parent=11 // pred_check_branch
        %120 = sbr.rel (%p118) target = $region16
      $region15: #{decoder_forward.8} parent=11 // pred_region
        _
      $region16: #{decoder_forward.8} parent=11 // pred_fallthru
        _
      // Predicated region
      $region17: #{decoder_forward.8} parent=11 // pred_check
        %p121 = pneg %p77
      $region18: #{decoder_forward.8} parent=11 // pred_check_branch
        %123 = sbr.rel (%p121) target = $region20
      $region19: #{decoder_forward.8} parent=11 // pred_region
        _
      $region20: #{decoder_forward.8} parent=11 // pred_fallthru
        _
    $region12: #{decoder_forward.8} parent=5 // pred_fallthru
      _
    %p124 = scmp.lt.s32.totalorder %s9, 2
    // Predicated region
    $region21: #{decoder_forward.8} parent=5 // pred_check
      %p125 = pneg %p124
    $region22: #{decoder_forward.8} parent=5 // pred_check_branch
      %127 = sbr.rel (%p125) target = $region24
    $region23: #{decoder_forward.8} parent=5 // pred_region
      // Predicated region
      $region25: #{decoder_forward.8} parent=23 // pred_check
        %p128 = pneg %p29
      $region26: #{decoder_forward.8} parent=23 // pred_check_branch
        %130 = sbr.rel (%p128) target = $region28
      $region27: #{decoder_forward.8} parent=23 // pred_region
        %p131 = scmp.lt.s32.totalorder %s9, 1
        %s132 = scalar_select %p131, %s9, 1
        %s133 = smul.addr %s132, 8
        %s134 = smul.addr %s133, 4
        %s135 = scalar_lea.vmem %s0, %s134
      $region28: #{decoder_forward.8} parent=23 // pred_fallthru
        _
    $region24: #{decoder_forward.8} parent=5 // pred_fallthru
      _
    %p136 = scmp.le.s32.totalorder 1, %s9
    %p137 = scmp.lt.s32.totalorder %s9, 3
    %p138 = pnand %p136, %p137
    %p139 = pneg %p138
    // Predicated region
    $region29: #{decoder_forward.8} parent=5 // pred_check
      _
    $region30: #{decoder_forward.8} parent=5 // pred_check_branch
      %141 = sbr.rel (%p138) target = $region32
    $region31: #{decoder_forward.8} parent=5 // pred_region
      %s142 = ssub.s32 %s9, 1
      %p143 = scmp.lt.s32.totalorder %s14, 1
      %s144 = scalar_select %p143, %s14, 1
      %s145 = smul.addr %s144, 8
      %s146 = smul.addr %s145, 4
      %s147 = scalar_lea.vmem %s0, %s146
      %p148 = pneg %p35
      %p149 = pneg %p32
      %p150 = pneg %p56
      %p151 = pneg %p53
      %p152 = pneg %p77
      %p153 = pneg %p74
      %p154 = pneg %p103
      %p155 = pneg %p100
      %p156 = scmp.lt.s32.totalorder %s14, 1
      %s157 = scalar_select %p156, %s14, 1
      %s158 = smul.addr %s157, 30
      %s159 = smul.addr %s158, 4
      %s160 = scalar_lea.vmem %s3, %s159
      %p161 = scmp.lt.s32.totalorder %s14, 1
      %s162 = scalar_select %p161, %s14, 1
      %s163 = smul.addr %s162, 8
      %s164 = smul.addr %s163, 4
      %s165 = scalar_lea.vmem %s0, %s164
      %p166 = scmp.lt.s32.totalorder %s14, 1
      %s167 = scalar_select %p166, %s14, 1
      %s168 = smul.addr %s167, 30
      %s169 = smul.addr %s168, 4
      %s170 = scalar_lea.vmem %s3, %s169
      %v172 = vld [vmem:[%s1] sm:$0x1]
      %v173 = vld [vmem:[%s2] sm:$0x1]
      %v174 = vld [vmem:[%s165] sm:$0xf]
      %v175 = vld [vmem:[%s165 + $0x4] sm:$0xf]
      %v176 = vld [vmem:[%s165 + $0x8] sm:$0xf]
      %v177 = vld [vmem:[%s165 + $0xc] sm:$0xf]
      %v178 = vld [vmem:[%s165 + $0x10] sm:$0xf]
      %v179 = vld [vmem:[%s165 + $0x14] sm:$0xf]
      %v180 = vld [vmem:[%s165 + $0x18] sm:$0xf]
      %v181 = vld [vmem:[%s165 + $0x1c] sm:$0xf]
      %v182 = vunpack.c.l.bf16 %v174
      %v183 = vunpack.c.l.bf16 %v175
      %v184 = vunpack.c.l.bf16 %v176
      %v185 = vunpack.c.l.bf16 %v177
      %v186 = vunpack.c.l.bf16 %v178
      %v187 = vunpack.c.l.bf16 %v179
      %v188 = vunpack.c.l.bf16 %v180
      %v189 = vunpack.c.l.bf16 %v181
      %v191 = vlaneseq
      %v192 = vshrl.u32 %v191, 7
      %v193 = vsub.s32 0, %v192
      %v194 = vrot.slane %v172, %v193
      %v196 = vmul.f32 %v182, %v194
      %v197 = vmul.f32 %v183, %v194
      %v198 = vmul.f32 %v184, %v194
      %v199 = vmul.f32 %v185, %v194
      %v200 = vmul.f32 %v186, %v194
      %v201 = vmul.f32 %v187, %v194
      %v202 = vmul.f32 %v188, %v194
      %v203 = vmul.f32 %v189, %v194
      %v205 = vlaneseq
      %v206 = vshrl.u32 %v205, 7
      %v207 = vsub.s32 0, %v206
      %v208 = vrot.slane %v173, %v207
      %v210 = vadd.f32 %v196, %v208
      %v211 = vadd.f32 %v197, %v208
      %v212 = vadd.f32 %v198, %v208
      %v213 = vadd.f32 %v199, %v208
      %v214 = vadd.f32 %v200, %v208
      %v215 = vadd.f32 %v201, %v208
      %v216 = vadd.f32 %v202, %v208
      %v217 = vadd.f32 %v203, %v208
      %v218 = vmax.f32 %v210, 0.0
      %v219 = vmax.f32 %v211, 0.0
      %v220 = vmax.f32 %v212, 0.0
      %v221 = vmax.f32 %v213, 0.0
      %v222 = vmax.f32 %v214, 0.0
      %v223 = vmax.f32 %v215, 0.0
      %v224 = vmax.f32 %v216, 0.0
      %v225 = vmax.f32 %v217, 0.0
      %v226 = vpack.c.bf16 %v218, %v218
      %v227 = vpack.c.bf16 %v219, %v219
      %v228 = vpack.c.bf16 %v220, %v220
      %v229 = vpack.c.bf16 %v221, %v221
      %v230 = vpack.c.bf16 %v222, %v222
      %v231 = vpack.c.bf16 %v223, %v223
      %v232 = vpack.c.bf16 %v224, %v224
      %v233 = vpack.c.bf16 %v225, %v225
      %v235 = vshrl.u32 %v226, 16
      %v237 = vrot.slane %v235, 7
      %v238 = vshll.u32 %v226, 16
      %v240 = vor.u32 %v237, %v238
      %v242 = vshrl.u32 %v227, 16
      %v244 = vrot.slane %v242, 7
      %v245 = vshll.u32 %v227, 16
      %v247 = vor.u32 %v244, %v245
      %v249 = vshrl.u32 %v228, 16
      %v251 = vrot.slane %v249, 7
      %v252 = vshll.u32 %v228, 16
      %v254 = vor.u32 %v251, %v252
      %v256 = vshrl.u32 %v229, 16
      %v258 = vrot.slane %v256, 7
      %v259 = vshll.u32 %v229, 16
      %v261 = vor.u32 %v258, %v259
      %v263 = vshrl.u32 %v230, 16
      %v265 = vrot.slane %v263, 7
      %v266 = vshll.u32 %v230, 16
      %v268 = vor.u32 %v265, %v266
      %v270 = vshrl.u32 %v231, 16
      %v272 = vrot.slane %v270, 7
      %v273 = vshll.u32 %v231, 16
      %v275 = vor.u32 %v272, %v273
      %v277 = vshrl.u32 %v232, 16
      %v279 = vrot.slane %v277, 7
      %v280 = vshll.u32 %v232, 16
      %v282 = vor.u32 %v279, %v280
      %v284 = vshrl.u32 %v233, 16
      %v286 = vrot.slane %v284, 7
      %v287 = vshll.u32 %v233, 16
      %v289 = vor.u32 %v286, %v287
      %vm298 = vcmask 1040384
      %vm299 = vsmask.f32 256
      %vm300 = vmand %vm298, %vm299
      %v301 = vsel %vm300, 0, %v240
      %v302 = vsel %vm300, 0, %v247
      %v303 = vsel %vm300, 0, %v254
      %v304 = vsel %vm300, 0, %v261
      %v305 = vsel %vm300, 0, %v268
      %v306 = vsel %vm300, 0, %v275
      %v307 = vsel %vm300, 0, %v282
      %v308 = vsel %vm300, 0, %v289
      %v309 = vrot.slane %v238, 1
      %v310 = vor.u32 %v235, %v309
      %v311 = vrot.slane %v245, 1
      %v312 = vor.u32 %v242, %v311
      %v313 = vrot.slane %v252, 1
      %v314 = vor.u32 %v249, %v313
      %v315 = vrot.slane %v259, 1
      %v316 = vor.u32 %v256, %v315
      %v317 = vrot.slane %v266, 1
      %v318 = vor.u32 %v263, %v317
      %v319 = vrot.slane %v273, 1
      %v320 = vor.u32 %v270, %v319
      %v321 = vrot.slane %v280, 1
      %v322 = vor.u32 %v277, %v321
      %v323 = vrot.slane %v287, 1
      %v324 = vor.u32 %v284, %v323
      %vm333 = vcmask 1043456
      %vm334 = vsmask.f32 3328
      %vm335 = vmand %vm333, %vm334
      %v336 = vsel %vm335, %v310, 0
      %v337 = vsel %vm335, %v312, 0
      %v338 = vsel %vm335, %v314, 0
      %v339 = vsel %vm335, %v316, 0
      %v340 = vsel %vm335, %v318, 0
      %v341 = vsel %vm335, %v320, 0
      %v342 = vsel %vm335, %v322, 0
      %v343 = vsel %vm335, %v324, 0
      %v369 = vunpack.c.l.b16 0
      %v370 = vunpack.c.l.b16 %v301
      %v371 = vunpack.c.l.b16 %v226
      %v372 = vunpack.c.l.b16 %v336
      %v373 = vunpack.c.l.b16 %v302
      %v374 = vunpack.c.l.b16 %v227
      %v375 = vunpack.c.l.b16 %v337
      %v376 = vunpack.c.l.b16 %v303
      %v377 = vunpack.c.l.b16 %v228
      %v378 = vunpack.c.l.b16 %v338
      %v379 = vunpack.c.l.b16 %v304
      %v380 = vunpack.c.l.b16 %v229
      %v381 = vunpack.c.l.b16 %v339
      %v382 = vunpack.c.l.b16 %v305
      %v383 = vunpack.c.l.b16 %v230
      %v384 = vunpack.c.l.b16 %v340
      %v385 = vunpack.c.l.b16 %v306
      %v386 = vunpack.c.l.b16 %v231
      %v387 = vunpack.c.l.b16 %v341
      %v388 = vunpack.c.l.b16 %v307
      %v389 = vunpack.c.l.b16 %v232
      %v390 = vunpack.c.l.b16 %v342
      %v391 = vunpack.c.l.b16 %v308
      %v392 = vunpack.c.l.b16 %v233
      %v393 = vunpack.c.l.b16 %v343
      %v394 = vpack.c.b16 %v369, %v369
      %v395 = vpack.c.b16 %v371, %v370
      %v396 = vpack.c.b16 %v372, %v372
      %v397 = vpack.c.b16 %v374, %v373
      %v398 = vpack.c.b16 %v375, %v375
      %v399 = vpack.c.b16 %v377, %v376
      %v400 = vpack.c.b16 %v378, %v378
      %v401 = vpack.c.b16 %v380, %v379
      %v402 = vpack.c.b16 %v381, %v381
      %v403 = vpack.c.b16 %v383, %v382
      %v404 = vpack.c.b16 %v384, %v384
      %v405 = vpack.c.b16 %v386, %v385
      %v406 = vpack.c.b16 %v387, %v387
      %v407 = vpack.c.b16 %v389, %v388
      %v408 = vpack.c.b16 %v390, %v390
      %v409 = vpack.c.b16 %v392, %v391
      %v410 = vpack.c.b16 %v393, %v393
      %428 = vst [vmem:[%s170] sm:$0xff] %v394
      %429 = vst [vmem:[%s170 + $0x8] sm:$0xf] %v394
      %430 = vst [vmem:[%s170 + $0xc] sm:$0xff] %v395
      %431 = vst [vmem:[%s170 + $0x14] sm:$0xf] %v396
      %432 = vst [vmem:[%s170 + $0x18] sm:$0xff] %v397
      %433 = vst [vmem:[%s170 + $0x20] sm:$0xf] %v398
      %434 = vst [vmem:[%s170 + $0x24] sm:$0xff] %v399
      %435 = vst [vmem:[%s170 + $0x2c] sm:$0xf] %v400
      %436 = vst [vmem:[%s170 + $0x30] sm:$0xff] %v401
      %437 = vst [vmem:[%s170 + $0x38] sm:$0xf] %v402
      %438 = vst [vmem:[%s170 + $0x3c] sm:$0xff] %v403
      %439 = vst [vmem:[%s170 + $0x44] sm:$0xf] %v404
      %440 = vst [vmem:[%s170 + $0x48] sm:$0xff] %v405
      %441 = vst [vmem:[%s170 + $0x50] sm:$0xf] %v406
      %442 = vst [vmem:[%s170 + $0x54] sm:$0xff] %v407
      %443 = vst [vmem:[%s170 + $0x5c] sm:$0xf] %v408
      %444 = vst [vmem:[%s170 + $0x60] sm:$0xff] %v409
      %445 = vst [vmem:[%s170 + $0x68] sm:$0xf] %v410
      %446 = vst [vmem:[%s170 + $0x6c] sm:$0xff] %v394
      %447 = vst [vmem:[%s170 + $0x74] sm:$0xf] %v394
      %p448 = scmp.lt.s32.totalorder %s14, 1
      %s449 = scalar_select %p448, %s14, 1
      %s450 = smul.addr %s449, 30
      %s451 = smul.addr %s450, 4
      %s452 = scalar_lea.vmem %s3, %s451
      // Predicated region
      $region33: #{decoder_forward.8} parent=31 // pred_check
        %p453 = pneg %p100
      $region34: #{decoder_forward.8} parent=31 // pred_check_branch
        %455 = sbr.rel (%p453) target = $region36
      $region35: #{decoder_forward.8} parent=31 // pred_region
        _
      $region36: #{decoder_forward.8} parent=31 // pred_fallthru
        _
    $region32: #{decoder_forward.8} parent=5 // pred_fallthru
      _
    %p456 = scmp.le.s32.totalorder 2, %s9
    // Predicated region
    $region37: #{decoder_forward.8} parent=5 // pred_check
      %p457 = pneg %p456
    $region38: #{decoder_forward.8} parent=5 // pred_check_branch
      %459 = sbr.rel (%p457) target = $region40
    $region39: #{decoder_forward.8} parent=5 // pred_region
      %s460 = ssub.s32 %s9, 2
      // Predicated region
      $region41: #{decoder_forward.8} parent=39 // pred_check
        %p461 = pneg %p106
      $region42: #{decoder_forward.8} parent=39 // pred_check_branch
        %463 = sbr.rel (%p461) target = $region44
      $region43: #{decoder_forward.8} parent=39 // pred_region
        %p464 = scmp.lt.s32.totalorder %s15, 1
        %s465 = scalar_select %p464, %s15, 1
        %s466 = smul.addr %s465, 30
        %s467 = smul.addr %s466, 4
        %s468 = scalar_lea.vmem %s3, %s467
      $region44: #{decoder_forward.8} parent=39 // pred_fallthru
        _
    $region40: #{decoder_forward.8} parent=5 // pred_fallthru
      _
  $region6: #{decoder_forward.8} parent=0 // loop_footer
    %s13 = sadd.s32 1, %s9
  $region7: #{decoder_forward.8} parent=0 // loop_footer_branch
    %8 = sbr.rel target = $region3
  $region8: #{decoder_forward.8} parent=0 // loop_exit
    _

// kernel: decoder_forward.9
$region0: #{decoder_forward.9}
  #allocation0 [shape = 'u32[]', space=smem, size = 0x4, offset = 0x4, fixed_abs, tag = 'smem constant byte address 0x4 - core index']
  #allocation1 [shape = 'u32[144,128]{1,0:T(1,128)}', space=vmem, size = 0x12000, scoped, tag = 'internal scratch']
  %s0 = inlined_call_operand.vmem [shape: bf16[2,10,8,384], index: 0, kind: input, shape index: {}]
  %s1 = inlined_call_operand.vmem [shape: bf16[4,2,256,128], index: 1, kind: input, shape index: {}]
  %s2 = inlined_call_operand.vmem [shape: bf16[2,8,2,8,256], index: 2, kind: output, shape index: {}]
  %s3 = sld [smem:[#allocation0]]
  $region41: #{decoder_forward.9} parent=0
    _
  %s5 = ssub.s32 1, %s3
  %s6 = scalar_select 0, %s5, %s3
  loop: start=0, step=1, limit=4
  $region2: #{decoder_forward.9} parent=0 // loop_pre_header
    _
  $region3: #{decoder_forward.9} parent=0 // loop_header
    %s8 = sphi 0, %s12
    %p9 = scmp.ge.s32.totalorder %s8, 4
    %s18 = sphi 0, %s20
    %s21 = sphi 0, %s18
    %s22 = sphi 0, %s21
    %s38 = sphi 0, %s22
    %s42 = sphi 0, %s42
    %s44 = sphi 0, %s42
    %s45 = sphi 0, %s44
    %s59 = sphi 0, %s45
    %s65 = sphi 0, %s67
    %s68 = sphi 0, %s65
    %s69 = sphi 0, %s68
    %s85 = sphi 0, %s69
  $region4: #{decoder_forward.9} parent=0 // loop_header_branch
    %11 = sbr.rel (%p9) target = $region8
  $region5: #{decoder_forward.9} parent=0 // loop_body
    %s13 = ssub.s32 %s8, 1
    %s14 = ssub.s32 %s8, 2
    %s15 = sadd.s32 %s8, 1
    %s16 = ssub.s32 %s8, %s15
    %p17 = scmp.eq.s32.totalorder %s16, 0
    %s19 = sadd.s32 %s18, 1
    %s20 = scalar_select %p17, %s18, %s19
    %p23 = pneg %p17
    %p24 = scmp.eq.s32.totalorder %s8, 1
    %p25 = por %p23, %p24
    %p26 = scmp.ne.s32.totalorder %s18, %s21
    %p27 = scmp.eq.s32.totalorder %s8, 0
    %p28 = por %p26, %p27
    %p29 = scmp.ne.s32.totalorder %s18, %s21
    %p30 = scmp.eq.s32.totalorder %s13, 1
    %p31 = por %p29, %p30
    %p32 = scmp.ne.s32.totalorder %s21, %s22
    %p33 = scmp.eq.s32.totalorder %s13, 0
    %p34 = por %p32, %p33
    %p35 = scmp.ne.s32.totalorder %s21, %s22
    %p36 = scmp.eq.s32.totalorder %s14, 1
    %p37 = por %p35, %p36
    %p39 = scmp.ne.s32.totalorder %s22, %s38
    %p40 = scmp.eq.s32.totalorder %s14, 0
    %p41 = por %p39, %p40
    %s43 = sadd.s32 %s42, 1
    %p46 = scmp.eq.s32.totalorder %s8, 1
    %p47 = scmp.ne.s32.totalorder %s42, %s44
    %p48 = scmp.eq.s32.totalorder %s8, 0
    %p49 = por %p47, %p48
    %p50 = scmp.ne.s32.totalorder %s42, %s44
    %p51 = scmp.eq.s32.totalorder %s13, 1
    %p52 = por %p50, %p51
    %p53 = scmp.ne.s32.totalorder %s44, %s45
    %p54 = scmp.eq.s32.totalorder %s13, 0
    %p55 = por %p53, %p54
    %p56 = scmp.ne.s32.totalorder %s44, %s45
    %p57 = scmp.eq.s32.totalorder %s14, 1
    %p58 = por %p56, %p57
    %p60 = scmp.ne.s32.totalorder %s45, %s59
    %p61 = scmp.eq.s32.totalorder %s14, 0
    %p62 = por %p60, %p61
    %s63 = ssub.s32 %s8, %s15
    %p64 = scmp.eq.s32.totalorder %s63, 0
    %s66 = sadd.s32 %s65, 1
    %s67 = scalar_select %p64, %s65, %s66
    %p70 = pneg %p64
    %p71 = scmp.eq.s32.totalorder %s8, 1
    %p72 = por %p70, %p71
    %p73 = scmp.ne.s32.totalorder %s65, %s68
    %p74 = scmp.eq.s32.totalorder %s8, 0
    %p75 = por %p73, %p74
    %p76 = scmp.ne.s32.totalorder %s65, %s68
    %p77 = scmp.eq.s32.totalorder %s13, 1
    %p78 = por %p76, %p77
    %p79 = scmp.ne.s32.totalorder %s68, %s69
    %p80 = scmp.eq.s32.totalorder %s13, 0
    %p81 = por %p79, %p80
    %p82 = scmp.ne.s32.totalorder %s68, %s69
    %p83 = scmp.eq.s32.totalorder %s14, 1
    %p84 = por %p82, %p83
    %p86 = scmp.ne.s32.totalorder %s69, %s85
    %p87 = scmp.eq.s32.totalorder %s14, 0
    %p88 = por %p86, %p87
    %p89 = scmp.le.s32.totalorder 1, %s8
    %p90 = scmp.lt.s32.totalorder %s8, 3
    %p91 = pnand %p89, %p90
    %p92 = pneg %p91
    // Predicated region
    $region9: #{decoder_forward.9} parent=5 // pred_check
      _
    $region10: #{decoder_forward.9} parent=5 // pred_check_branch
      %94 = sbr.rel (%p91) target = $region12
    $region11: #{decoder_forward.9} parent=5 // pred_region
      %s95 = ssub.s32 %s8, 1
      // Predicated region
      $region13: #{decoder_forward.9} parent=11 // pred_check
        %p96 = pneg %p55
      $region14: #{decoder_forward.9} parent=11 // pred_check_branch
        %98 = sbr.rel (%p96) target = $region16
      $region15: #{decoder_forward.9} parent=11 // pred_region
        _
      $region16: #{decoder_forward.9} parent=11 // pred_fallthru
        _
    $region12: #{decoder_forward.9} parent=5 // pred_fallthru
      _
    %p99 = scmp.lt.s32.totalorder %s8, 2
    // Predicated region
    $region17: #{decoder_forward.9} parent=5 // pred_check
      %p100 = pneg %p99
    $region18: #{decoder_forward.9} parent=5 // pred_check_branch
      %102 = sbr.rel (%p100) target = $region20
    $region19: #{decoder_forward.9} parent=5 // pred_region
      // Predicated region
      $region21: #{decoder_forward.9} parent=19 // pred_check
        %p103 = pneg %p28
      $region22: #{decoder_forward.9} parent=19 // pred_check_branch
        %105 = sbr.rel (%p103) target = $region24
      $region23: #{decoder_forward.9} parent=19 // pred_region
        %p106 = scmp.lt.s32.totalorder %s8, 1
        %s107 = scalar_select %p106, %s8, 1
        %s108 = smul.addr %s107, 30
        %s109 = smul.addr %s108, 4
        %s110 = scalar_lea.vmem %s0, %s109
      $region24: #{decoder_forward.9} parent=19 // pred_fallthru
        _
    $region20: #{decoder_forward.9} parent=5 // pred_fallthru
      _
    %p111 = scmp.le.s32.totalorder 1, %s8
    %p112 = scmp.lt.s32.totalorder %s8, 3
    %p113 = pnand %p111, %p112
    %p114 = pneg %p113
    // Predicated region
    $region25: #{decoder_forward.9} parent=5 // pred_check
      _
    $region26: #{decoder_forward.9} parent=5 // pred_check_branch
      %116 = sbr.rel (%p113) target = $region28
    $region27: #{decoder_forward.9} parent=5 // pred_region
      %s117 = ssub.s32 %s8, 1
      %p118 = scmp.lt.s32.totalorder %s13, 1
      %s119 = scalar_select %p118, %s13, 1
      %s120 = smul.addr %s119, 30
      %s121 = smul.addr %s120, 4
      %s122 = scalar_lea.vmem %s0, %s121
      %p123 = pneg %p34
      %p124 = pneg %p31
      %p125 = pneg %p55
      %p126 = pneg %p52
      %p127 = pneg %p81
      %p128 = pneg %p78
      %p129 = scmp.lt.s32.totalorder %s13, 1
      %s130 = scalar_select %p129, %s13, 1
      %s131 = smul.addr %s130, 32
      %s132 = smul.addr %s131, 4
      %s133 = scalar_lea.vmem %s2, %s132
      %p134 = scmp.lt.s32.totalorder %s13, 1
      %s135 = scalar_select %p134, %s13, 1
      %s136 = smul.addr %s135, 30
      %s137 = smul.addr %s136, 4
      %s138 = scalar_lea.vmem %s0, %s137
      %p139 = scmp.lt.s32.totalorder %s13, 1
      %s140 = scalar_select %p139, %s13, 1
      %s141 = smul.addr %s140, 32
      %s142 = smul.addr %s141, 4
      %s143 = scalar_lea.vmem %s2, %s142
      %v145 = vld [vmem:[%s138] sm:$0xff]
      %v146 = vld [vmem:[%s138 + $0xc] sm:$0xff]
      %v147 = vld [vmem:[%s138 + $0x18] sm:$0xff]
      %v148 = vld [vmem:[%s138 + $0x24] sm:$0xff]
      %v149 = vld [vmem:[%s138 + $0x30] sm:$0xff]
      %v150 = vld [vmem:[%s138 + $0x3c] sm:$0xff]
      %v151 = vld [vmem:[%s138 + $0x48] sm:$0xff]
      %v152 = vld [vmem:[%s138 + $0x54] sm:$0xff]
      %v153 = vld [vmem:[%s1] sm:$0xf]
      %v154 = vld [vmem:[%s1 + $0x4] sm:$0xf]
      %v155 = vld [vmem:[%s1 + $0x8] sm:$0xf]
      %v156 = vld [vmem:[%s1 + $0xc] sm:$0xf]
      %v157 = vld [vmem:[%s1 + $0x10] sm:$0xf]
      %v158 = vld [vmem:[%s1 + $0x14] sm:$0xf]
      %v159 = vld [vmem:[%s1 + $0x18] sm:$0xf]
      %v160 = vld [vmem:[%s1 + $0x1c] sm:$0xf]
      %v161 = vld [vmem:[%s1 + $0x20] sm:$0xf]
      %v162 = vld [vmem:[%s1 + $0x24] sm:$0xf]
      %v163 = vld [vmem:[%s1 + $0x28] sm:$0xf]
      %v164 = vld [vmem:[%s1 + $0x2c] sm:$0xf]
      %v165 = vld [vmem:[%s1 + $0x30] sm:$0xf]
      %v166 = vld [vmem:[%s1 + $0x34] sm:$0xf]
      %v167 = vld [vmem:[%s1 + $0x38] sm:$0xf]
      %v168 = vld [vmem:[%s1 + $0x3c] sm:$0xf]
      %v169 = vld [vmem:[%s1 + $0x40] sm:$0xf]
      %v170 = vld [vmem:[%s1 + $0x44] sm:$0xf]
      %v171 = vld [vmem:[%s1 + $0x48] sm:$0xf]
      %v172 = vld [vmem:[%s1 + $0x4c] sm:$0xf]
      %v173 = vld [vmem:[%s1 + $0x50] sm:$0xf]
      %v174 = vld [vmem:[%s1 + $0x54] sm:$0xf]
      %v175 = vld [vmem:[%s1 + $0x58] sm:$0xf]
      %v176 = vld [vmem:[%s1 + $0x5c] sm:$0xf]
      %v177 = vld [vmem:[%s1 + $0x60] sm:$0xf]
      %v178 = vld [vmem:[%s1 + $0x64] sm:$0xf]
      %v179 = vld [vmem:[%s1 + $0x68] sm:$0xf]
      %v180 = vld [vmem:[%s1 + $0x6c] sm:$0xf]
      %v181 = vld [vmem:[%s1 + $0x70] sm:$0xf]
      %v182 = vld [vmem:[%s1 + $0x74] sm:$0xf]
      %v183 = vld [vmem:[%s1 + $0x78] sm:$0xf]
      %v184 = vld [vmem:[%s1 + $0x7c] sm:$0xf]
      %s185 = scalar_lea.vmem %s138, 12
      %v186 = vld [vmem:[%s185] sm:$0xff]
      %v187 = vld [vmem:[%s185 + $0xc] sm:$0xff]
      %v188 = vld [vmem:[%s185 + $0x18] sm:$0xff]
      %v189 = vld [vmem:[%s185 + $0x24] sm:$0xff]
      %v190 = vld [vmem:[%s185 + $0x30] sm:$0xff]
      %v191 = vld [vmem:[%s185 + $0x3c] sm:$0xff]
      %v192 = vld [vmem:[%s185 + $0x48] sm:$0xff]
      %v193 = vld [vmem:[%s185 + $0x54] sm:$0xff]
      %s194 = scalar_lea.vmem %s1, 128
      %v195 = vld [vmem:[%s194] sm:$0xf]
      %v196 = vld [vmem:[%s194 + $0x4] sm:$0xf]
      %v197 = vld [vmem:[%s194 + $0x8] sm:$0xf]
      %v198 = vld [vmem:[%s194 + $0xc] sm:$0xf]
      %v199 = vld [vmem:[%s194 + $0x10] sm:$0xf]
      %v200 = vld [vmem:[%s194 + $0x14] sm:$0xf]
      %v201 = vld [vmem:[%s194 + $0x18] sm:$0xf]
      %v202 = vld [vmem:[%s194 + $0x1c] sm:$0xf]
      %v203 = vld [vmem:[%s194 + $0x20] sm:$0xf]
      %v204 = vld [vmem:[%s194 + $0x24] sm:$0xf]
      %v205 = vld [vmem:[%s194 + $0x28] sm:$0xf]
      %v206 = vld [vmem:[%s194 + $0x2c] sm:$0xf]
      %v207 = vld [vmem:[%s194 + $0x30] sm:$0xf]
      %v208 = vld [vmem:[%s194 + $0x34] sm:$0xf]
      %v209 = vld [vmem:[%s194 + $0x38] sm:$0xf]
      %v210 = vld [vmem:[%s194 + $0x3c] sm:$0xf]
      %v211 = vld [vmem:[%s194 + $0x40] sm:$0xf]
      %v212 = vld [vmem:[%s194 + $0x44] sm:$0xf]
      %v213 = vld [vmem:[%s194 + $0x48] sm:$0xf]
      %v214 = vld [vmem:[%s194 + $0x4c] sm:$0xf]
      %v215 = vld [vmem:[%s194 + $0x50] sm:$0xf]
      %v216 = vld [vmem:[%s194 + $0x54] sm:$0xf]
      %v217 = vld [vmem:[%s194 + $0x58] sm:$0xf]
      %v218 = vld [vmem:[%s194 + $0x5c] sm:$0xf]
      %v219 = vld [vmem:[%s194 + $0x60] sm:$0xf]
      %v220 = vld [vmem:[%s194 + $0x64] sm:$0xf]
      %v221 = vld [vmem:[%s194 + $0x68] sm:$0xf]
      %v222 = vld [vmem:[%s194 + $0x6c] sm:$0xf]
      %v223 = vld [vmem:[%s194 + $0x70] sm:$0xf]
      %v224 = vld [vmem:[%s194 + $0x74] sm:$0xf]
      %v225 = vld [vmem:[%s194 + $0x78] sm:$0xf]
      %v226 = vld [vmem:[%s194 + $0x7c] sm:$0xf]
      %v235 = vunpack.c.l.b16 %v186
      %v236 = vunpack.c.h.b16 %v186
      %v237 = vunpack.c.l.b16 %v187
      %v238 = vunpack.c.h.b16 %v187
      %v239 = vunpack.c.l.b16 %v188
      %v240 = vunpack.c.h.b16 %v188
      %v241 = vunpack.c.l.b16 %v189
      %v242 = vunpack.c.h.b16 %v189
      %v243 = vunpack.c.l.b16 %v190
      %v244 = vunpack.c.h.b16 %v190
      %v245 = vunpack.c.l.b16 %v191
      %v246 = vunpack.c.h.b16 %v191
      %v247 = vunpack.c.l.b16 %v192
      %v248 = vunpack.c.h.b16 %v192
      %v249 = vunpack.c.l.b16 %v193
      %v250 = vunpack.c.h.b16 %v193
      %v251 = vpack.c.b16 %v237, %v235
      %v252 = vpack.c.b16 %v238, %v236
      %v253 = vpack.c.b16 %v241, %v239
      %v254 = vpack.c.b16 %v242, %v240
      %v255 = vpack.c.b16 %v245, %v243
      %v256 = vpack.c.b16 %v246, %v244
      %v257 = vpack.c.b16 %v249, %v247
      %v258 = vpack.c.b16 %v250, %v248
      %v299 = vunpack.c.l.b16 %v195
      %v300 = vunpack.c.l.b16 %v196
      %v301 = vunpack.c.l.b16 %v197
      %v302 = vunpack.c.l.b16 %v198
      %v303 = vunpack.c.l.b16 %v199
      %v304 = vunpack.c.l.b16 %v200
      %v305 = vunpack.c.l.b16 %v201
      %v306 = vunpack.c.l.b16 %v202
      %v307 = vunpack.c.l.b16 %v203
      %v308 = vunpack.c.l.b16 %v204
      %v309 = vunpack.c.l.b16 %v205
      %v310 = vunpack.c.l.b16 %v206
      %v311 = vunpack.c.l.b16 %v207
      %v312 = vunpack.c.l.b16 %v208
      %v313 = vunpack.c.l.b16 %v209
      %v314 = vunpack.c.l.b16 %v210
      %v315 = vunpack.c.l.b16 %v211
      %v316 = vunpack.c.l.b16 %v212
      %v317 = vunpack.c.l.b16 %v213
      %v318 = vunpack.c.l.b16 %v214
      %v319 = vunpack.c.l.b16 %v215
      %v320 = vunpack.c.l.b16 %v216
      %v321 = vunpack.c.l.b16 %v217
      %v322 = vunpack.c.l.b16 %v218
      %v323 = vunpack.c.l.b16 %v219
      %v324 = vunpack.c.l.b16 %v220
      %v325 = vunpack.c.l.b16 %v221
      %v326 = vunpack.c.l.b16 %v222
      %v327 = vunpack.c.l.b16 %v223
      %v328 = vunpack.c.l.b16 %v224
      %v329 = vunpack.c.l.b16 %v225
      %v330 = vunpack.c.l.b16 %v226
      %v331 = vpack.c.b16 %v300, %v299
      %v332 = vpack.c.b16 %v302, %v301
      %v333 = vpack.c.b16 %v304, %v303
      %v334 = vpack.c.b16 %v306, %v305
      %v335 = vpack.c.b16 %v308, %v307
      %v336 = vpack.c.b16 %v310, %v309
      %v337 = vpack.c.b16 %v312, %v311
      %v338 = vpack.c.b16 %v314, %v313
      %v339 = vpack.c.b16 %v316, %v315
      %v340 = vpack.c.b16 %v318, %v317
      %v341 = vpack.c.b16 %v320, %v319
      %v342 = vpack.c.b16 %v322, %v321
      %v343 = vpack.c.b16 %v324, %v323
      %v344 = vpack.c.b16 %v326, %v325
      %v345 = vpack.c.b16 %v328, %v327
      %v346 = vpack.c.b16 %v330, %v329
      %363 = vmatprep.subr.bf16.mxu0 0
      %364 = vmatpush1.bf16.msra.mxu0 %v331
      %365 = vmatprep.subr.bf16.mxu0 0
      %366 = vmatpush1.bf16.msra.mxu0 %v332
      %367 = vmatprep.subr.bf16.mxu0 0
      %368 = vmatpush1.bf16.msra.mxu0 %v333
      %369 = vmatprep.subr.bf16.mxu0 0
      %370 = vmatpush1.bf16.msra.mxu0 %v334
      %371 = vmatprep.subr.bf16.mxu0 0
      %372 = vmatpush1.bf16.msra.mxu0 %v335
      %373 = vmatprep.subr.bf16.mxu0 0
      %374 = vmatpush1.bf16.msra.mxu0 %v336
      %375 = vmatprep.subr.bf16.mxu0 0
      %376 = vmatpush1.bf16.msra.mxu0 %v337
      %377 = vmatprep.subr.bf16.mxu0 0
      %378 = vmatpush1.bf16.msra.mxu0 %v338
      %379 = vmatprep.subr.bf16.mxu0 0
      %380 = vmatpush1.bf16.msra.mxu0 %v339
      %381 = vmatprep.subr.bf16.mxu0 0
      %382 = vmatpush1.bf16.msra.mxu0 %v340
      %383 = vmatprep.subr.bf16.mxu0 0
      %384 = vmatpush1.bf16.msra.mxu0 %v341
      %385 = vmatprep.subr.bf16.mxu0 0
      %386 = vmatpush1.bf16.msra.mxu0 %v342
      %387 = vmatprep.subr.bf16.mxu0 0
      %388 = vmatpush1.bf16.msra.mxu0 %v343
      %389 = vmatprep.subr.bf16.mxu0 0
      %390 = vmatpush1.bf16.msra.mxu0 %v344
      %391 = vmatprep.subr.bf16.mxu0 0
      %392 = vmatpush1.bf16.msra.mxu0 %v345
      %393 = vmatprep.subr.bf16.mxu0 0
      %394 = vmatpush1.bf16.msra.mxu0 %v346
      %395 = vmatprep.mubr.bf16.mxu0 %v252
      %396 = vmatmul.mubr.bf16.gmra.mrb[0].mxu0 %v251
      %v397 = vpop.f32.mrb[0].mxu0
      %v398 = vadd.f32 0.0, %v397
      %v399 = vpop.f32.mrb[0].mxu0
      %v400 = vpop.f32.mrb[0].mxu0
      %v401 = vadd.f32 0.0, %v400
      %v402 = vpop.f32.mrb[0].mxu0
      %403 = vmatprep.mubr.bf16.mxu0 %v254
      %404 = vmatmul.mubr.bf16.gmra.mrb[0].mxu0 %v253
      %v405 = vpop.f32.mrb[0].mxu0
      %v406 = vadd.f32 0.0, %v405
      %v407 = vpop.f32.mrb[0].mxu0
      %v408 = vpop.f32.mrb[0].mxu0
      %v409 = vadd.f32 0.0, %v408
      %v410 = vpop.f32.mrb[0].mxu0
      %411 = vmatprep.mubr.bf16.mxu0 %v256
      %412 = vmatmul.mubr.bf16.gmra.mrb[0].mxu0 %v255
      %v413 = vpop.f32.mrb[0].mxu0
      %v414 = vadd.f32 0.0, %v413
      %v415 = vpop.f32.mrb[0].mxu0
      %v416 = vpop.f32.mrb[0].mxu0
      %v417 = vadd.f32 0.0, %v416
      %v418 = vpop.f32.mrb[0].mxu0
      %419 = vmatprep.mubr.bf16.mxu0 %v258
      %420 = vmatmul.mubr.bf16.gmra.mrb[0].mxu0 %v257
      %v421 = vpop.f32.mrb[0].mxu0
      %v422 = vadd.f32 0.0, %v421
      %v423 = vpop.f32.mrb[0].mxu0
      %v424 = vpop.f32.mrb[0].mxu0
      %v425 = vadd.f32 0.0, %v424
      %v426 = vpop.f32.mrb[0].mxu0
      %427 = vdwg.mxu0
      %v436 = vunpack.c.l.b16 %v145
      %v437 = vunpack.c.h.b16 %v145
      %v438 = vunpack.c.l.b16 %v146
      %v439 = vunpack.c.h.b16 %v146
      %v440 = vunpack.c.l.b16 %v147
      %v441 = vunpack.c.h.b16 %v147
      %v442 = vunpack.c.l.b16 %v148
      %v443 = vunpack.c.h.b16 %v148
      %v444 = vunpack.c.l.b16 %v149
      %v445 = vunpack.c.h.b16 %v149
      %v446 = vunpack.c.l.b16 %v150
      %v447 = vunpack.c.h.b16 %v150
      %v448 = vunpack.c.l.b16 %v151
      %v449 = vunpack.c.h.b16 %v151
      %v450 = vunpack.c.l.b16 %v152
      %v451 = vunpack.c.h.b16 %v152
      %v452 = vpack.c.b16 %v438, %v436
      %v453 = vpack.c.b16 %v439, %v437
      %v454 = vpack.c.b16 %v442, %v440
      %v455 = vpack.c.b16 %v443, %v441
      %v456 = vpack.c.b16 %v446, %v444
      %v457 = vpack.c.b16 %v447, %v445
      %v458 = vpack.c.b16 %v450, %v448
      %v459 = vpack.c.b16 %v451, %v449
      %v500 = vunpack.c.l.b16 %v153
      %v501 = vunpack.c.l.b16 %v154
      %v502 = vunpack.c.l.b16 %v155
      %v503 = vunpack.c.l.b16 %v156
      %v504 = vunpack.c.l.b16 %v157
      %v505 = vunpack.c.l.b16 %v158
      %v506 = vunpack.c.l.b16 %v159
      %v507 = vunpack.c.l.b16 %v160
      %v508 = vunpack.c.l.b16 %v161
      %v509 = vunpack.c.l.b16 %v162
      %v510 = vunpack.c.l.b16 %v163
      %v511 = vunpack.c.l.b16 %v164
      %v512 = vunpack.c.l.b16 %v165
      %v513 = vunpack.c.l.b16 %v166
      %v514 = vunpack.c.l.b16 %v167
      %v515 = vunpack.c.l.b16 %v168
      %v516 = vunpack.c.l.b16 %v169
      %v517 = vunpack.c.l.b16 %v170
      %v518 = vunpack.c.l.b16 %v171
      %v519 = vunpack.c.l.b16 %v172
      %v520 = vunpack.c.l.b16 %v173
      %v521 = vunpack.c.l.b16 %v174
      %v522 = vunpack.c.l.b16 %v175
      %v523 = vunpack.c.l.b16 %v176
      %v524 = vunpack.c.l.b16 %v177
      %v525 = vunpack.c.l.b16 %v178
      %v526 = vunpack.c.l.b16 %v179
      %v527 = vunpack.c.l.b16 %v180
      %v528 = vunpack.c.l.b16 %v181
      %v529 = vunpack.c.l.b16 %v182
      %v530 = vunpack.c.l.b16 %v183
      %v531 = vunpack.c.l.b16 %v184
      %v532 = vpack.c.b16 %v501, %v500
      %v533 = vpack.c.b16 %v503, %v502
      %v534 = vpack.c.b16 %v505, %v504
      %v535 = vpack.c.b16 %v507, %v506
      %v536 = vpack.c.b16 %v509, %v508
      %v537 = vpack.c.b16 %v511, %v510
      %v538 = vpack.c.b16 %v513, %v512
      %v539 = vpack.c.b16 %v515, %v514
      %v540 = vpack.c.b16 %v517, %v516
      %v541 = vpack.c.b16 %v519, %v518
      %v542 = vpack.c.b16 %v521, %v520
      %v543 = vpack.c.b16 %v523, %v522
      %v544 = vpack.c.b16 %v525, %v524
      %v545 = vpack.c.b16 %v527, %v526
      %v546 = vpack.c.b16 %v529, %v528
      %v547 = vpack.c.b16 %v531, %v530
      %564 = vmatprep.subr.bf16.mxu0 0
      %565 = vmatpush1.bf16.msra.mxu0 %v532
      %566 = vmatprep.subr.bf16.mxu0 0
      %567 = vmatpush1.bf16.msra.mxu0 %v533
      %568 = vmatprep.subr.bf16.mxu0 0
      %569 = vmatpush1.bf16.msra.mxu0 %v534
      %570 = vmatprep.subr.bf16.mxu0 0
      %571 = vmatpush1.bf16.msra.mxu0 %v535
      %572 = vmatprep.subr.bf16.mxu0 0
      %573 = vmatpush1.bf16.msra.mxu0 %v536
      %574 = vmatprep.subr.bf16.mxu0 0
      %575 = vmatpush1.bf16.msra.mxu0 %v537
      %576 = vmatprep.subr.bf16.mxu0 0
      %577 = vmatpush1.bf16.msra.mxu0 %v538
      %578 = vmatprep.subr.bf16.mxu0 0
      %579 = vmatpush1.bf16.msra.mxu0 %v539
      %580 = vmatprep.subr.bf16.mxu0 0
      %581 = vmatpush1.bf16.msra.mxu0 %v540
      %582 = vmatprep.subr.bf16.mxu0 0
      %583 = vmatpush1.bf16.msra.mxu0 %v541
      %584 = vmatprep.subr.bf16.mxu0 0
      %585 = vmatpush1.bf16.msra.mxu0 %v542
      %586 = vmatprep.subr.bf16.mxu0 0
      %587 = vmatpush1.bf16.msra.mxu0 %v543
      %588 = vmatprep.subr.bf16.mxu0 0
      %589 = vmatpush1.bf16.msra.mxu0 %v544
      %590 = vmatprep.subr.bf16.mxu0 0
      %591 = vmatpush1.bf16.msra.mxu0 %v545
      %592 = vmatprep.subr.bf16.mxu0 0
      %593 = vmatpush1.bf16.msra.mxu0 %v546
      %594 = vmatprep.subr.bf16.mxu0 0
      %595 = vmatpush1.bf16.msra.mxu0 %v547
      %596 = vmatprep.mubr.bf16.mxu0 %v453
      %597 = vmatmul.mubr.bf16.gmra.mrb[0].mxu0 %v452
      %v598 = vpop.f32.mrb[0].mxu0
      %v599 = vadd.f32 %v398, %v598
      %v600 = vpop.f32.mrb[0].mxu0
      %v601 = vpop.f32.mrb[0].mxu0
      %v602 = vadd.f32 %v401, %v601
      %v603 = vpop.f32.mrb[0].mxu0
      %604 = vmatprep.mubr.bf16.mxu0 %v455
      %605 = vmatmul.mubr.bf16.gmra.mrb[0].mxu0 %v454
      %v606 = vpop.f32.mrb[0].mxu0
      %v607 = vadd.f32 %v406, %v606
      %v608 = vpop.f32.mrb[0].mxu0
      %v609 = vpop.f32.mrb[0].mxu0
      %v610 = vadd.f32 %v409, %v609
      %v611 = vpop.f32.mrb[0].mxu0
      %612 = vmatprep.mubr.bf16.mxu0 %v457
      %613 = vmatmul.mubr.bf16.gmra.mrb[0].mxu0 %v456
      %v614 = vpop.f32.mrb[0].mxu0
      %v615 = vadd.f32 %v414, %v614
      %v616 = vpop.f32.mrb[0].mxu0
      %v617 = vpop.f32.mrb[0].mxu0
      %v618 = vadd.f32 %v417, %v617
      %v619 = vpop.f32.mrb[0].mxu0
      %620 = vmatprep.mubr.bf16.mxu0 %v459
      %621 = vmatmul.mubr.bf16.gmra.mrb[0].mxu0 %v458
      %v622 = vpop.f32.mrb[0].mxu0
      %v623 = vadd.f32 %v422, %v622
      %v624 = vpop.f32.mrb[0].mxu0
      %v625 = vpop.f32.mrb[0].mxu0
      %v626 = vadd.f32 %v425, %v625
      %v627 = vpop.f32.mrb[0].mxu0
      %628 = vdwg.mxu0
      %v629 = vld [vmem:[%s138 + $0x4] sm:$0xff]
      %v630 = vld [vmem:[%s138 + $0x10] sm:$0xff]
      %v631 = vld [vmem:[%s138 + $0x1c] sm:$0xff]
      %v632 = vld [vmem:[%s138 + $0x28] sm:$0xff]
      %v633 = vld [vmem:[%s138 + $0x34] sm:$0xff]
      %v634 = vld [vmem:[%s138 + $0x40] sm:$0xff]
      %v635 = vld [vmem:[%s138 + $0x4c] sm:$0xff]
      %v636 = vld [vmem:[%s138 + $0x58] sm:$0xff]
      %s637 = scalar_lea.vmem %s1, 256
      %v638 = vld [vmem:[%s637] sm:$0xf]
      %v639 = vld [vmem:[%s637 + $0x4] sm:$0xf]
      %v640 = vld [vmem:[%s637 + $0x8] sm:$0xf]
      %v641 = vld [vmem:[%s637 + $0xc] sm:$0xf]
      %v642 = vld [vmem:[%s637 + $0x10] sm:$0xf]
      %v643 = vld [vmem:[%s637 + $0x14] sm:$0xf]
      %v644 = vld [vmem:[%s637 + $0x18] sm:$0xf]
      %v645 = vld [vmem:[%s637 + $0x1c] sm:$0xf]
      %v646 = vld [vmem:[%s637 + $0x20] sm:$0xf]
      %v647 = vld [vmem:[%s637 + $0x24] sm:$0xf]
      %v648 = vld [vmem:[%s637 + $0x28] sm:$0xf]
      %v649 = vld [vmem:[%s637 + $0x2c] sm:$0xf]
      %v650 = vld [vmem:[%s637 + $0x30] sm:$0xf]
      %v651 = vld [vmem:[%s637 + $0x34] sm:$0xf]
      %v652 = vld [vmem:[%s637 + $0x38] sm:$0xf]
      %v653 = vld [vmem:[%s637 + $0x3c] sm:$0xf]
      %v654 = vld [vmem:[%s637 + $0x40] sm:$0xf]
      %v655 = vld [vmem:[%s637 + $0x44] sm:$0xf]
      %v656 = vld [vmem:[%s637 + $0x48] sm:$0xf]
      %v657 = vld [vmem:[%s637 + $0x4c] sm:$0xf]
      %v658 = vld [vmem:[%s637 + $0x50] sm:$0xf]
      %v659 = vld [vmem:[%s637 + $0x54] sm:$0xf]
      %v660 = vld [vmem:[%s637 + $0x58] sm:$0xf]
      %v661 = vld [vmem:[%s637 + $0x5c] sm:$0xf]
      %v662 = vld [vmem:[%s637 + $0x60] sm:$0xf]
      %v663 = vld [vmem:[%s637 + $0x64] sm:$0xf]
      %v664 = vld [vmem:[%s637 + $0x68] sm:$0xf]
      %v665 = vld [vmem:[%s637 + $0x6c] sm:$0xf]
      %v666 = vld [vmem:[%s637 + $0x70] sm:$0xf]
      %v667 = vld [vmem:[%s637 + $0x74] sm:$0xf]
      %v668 = vld [vmem:[%s637 + $0x78] sm:$0xf]
      %v669 = vld [vmem:[%s637 + $0x7c] sm:$0xf]
      %v670 = vld [vmem:[%s185 + $0x4] sm:$0xff]
      %v671 = vld [vmem:[%s185 + $0x10] sm:$0xff]
      %v672 = vld [vmem:[%s185 + $0x1c] sm:$0xff]
      %v673 = vld [vmem:[%s185 + $0x28] sm:$0xff]
      %v674 = vld [vmem:[%s185 + $0x34] sm:$0xff]
      %v675 = vld [vmem:[%s185 + $0x40] sm:$0xff]
      %v676 = vld [vmem:[%s185 + $0x4c] sm:$0xff]
      %v677 = vld [vmem:[%s185 + $0x58] sm:$0xff]
      %s678 = scalar_lea.vmem %s1, 384
      %v679 = vld [vmem:[%s678] sm:$0xf]
      %v680 = vld [vmem:[%s678 + $0x4] sm:$0xf]
      %v681 = vld [vmem:[%s678 + $0x8] sm:$0xf]
      %v682 = vld [vmem:[%s678 + $0xc] sm:$0xf]
      %v683 = vld [vmem:[%s678 + $0x10] sm:$0xf]
      %v684 = vld [vmem:[%s678 + $0x14] sm:$0xf]
      %v685 = vld [vmem:[%s678 + $0x18] sm:$0xf]
      %v686 = vld [vmem:[%s678 + $0x1c] sm:$0xf]
      %v687 = vld [vmem:[%s678 + $0x20] sm:$0xf]
      %v688 = vld [vmem:[%s678 + $0x24] sm:$0xf]
      %v689 = vld [vmem:[%s678 + $0x28] sm:$0xf]
      %v690 = vld [vmem:[%s678 + $0x2c] sm:$0xf]
      %v691 = vld [vmem:[%s678 + $0x30] sm:$0xf]
      %v692 = vld [vmem:[%s678 + $0x34] sm:$0xf]
      %v693 = vld [vmem:[%s678 + $0x38] sm:$0xf]
      %v694 = vld [vmem:[%s678 + $0x3c] sm:$0xf]
      %v695 = vld [vmem:[%s678 + $0x40] sm:$0xf]
      %v696 = vld [vmem:[%s678 + $0x44] sm:$0xf]
      %v697 = vld [vmem:[%s678 + $0x48] sm:$0xf]
      %v698 = vld [vmem:[%s678 + $0x4c] sm:$0xf]
      %v699 = vld [vmem:[%s678 + $0x50] sm:$0xf]
      %v700 = vld [vmem:[%s678 + $0x54] sm:$0xf]
      %v701 = vld [vmem:[%s678 + $0x58] sm:$0xf]
      %v702 = vld [vmem:[%s678 + $0x5c] sm:$0xf]
      %v703 = vld [vmem:[%s678 + $0x60] sm:$0xf]
      %v704 = vld [vmem:[%s678 + $0x64] sm:$0xf]
      %v705 = vld [vmem:[%s678 + $0x68] sm:$0xf]
      %v706 = vld [vmem:[%s678 + $0x6c] sm:$0xf]
      %v707 = vld [vmem:[%s678 + $0x70] sm:$0xf]
      %v708 = vld [vmem:[%s678 + $0x74] sm:$0xf]
      %v709 = vld [vmem:[%s678 + $0x78] sm:$0xf]
      %v710 = vld [vmem:[%s678 + $0x7c] sm:$0xf]
      %v719 = vunpack.c.l.b16 %v670
      %v720 = vunpack.c.h.b16 %v670
      %v721 = vunpack.c.l.b16 %v671
      %v722 = vunpack.c.h.b16 %v671
      %v723 = vunpack.c.l.b16 %v672
      %v724 = vunpack.c.h.b16 %v672
      %v725 = vunpack.c.l.b16 %v673
      %v726 = vunpack.c.h.b16 %v673
      %v727 = vunpack.c.l.b16 %v674
      %v728 = vunpack.c.h.b16 %v674
      %v729 = vunpack.c.l.b16 %v675
      %v730 = vunpack.c.h.b16 %v675
      %v731 = vunpack.c.l.b16 %v676
      %v732 = vunpack.c.h.b16 %v676
      %v733 = vunpack.c.l.b16 %v677
      %v734 = vunpack.c.h.b16 %v677
      %v735 = vpack.c.b16 %v721, %v719
      %v736 = vpack.c.b16 %v722, %v720
      %v737 = vpack.c.b16 %v725, %v723
      %v738 = vpack.c.b16 %v726, %v724
      %v739 = vpack.c.b16 %v729, %v727
      %v740 = vpack.c.b16 %v730, %v728
      %v741 = vpack.c.b16 %v733, %v731
      %v742 = vpack.c.b16 %v734, %v732
      %v783 = vunpack.c.l.b16 %v679
      %v784 = vunpack.c.l.b16 %v680
      %v785 = vunpack.c.l.b16 %v681
      %v786 = vunpack.c.l.b16 %v682
      %v787 = vunpack.c.l.b16 %v683
      %v788 = vunpack.c.l.b16 %v684
      %v789 = vunpack.c.l.b16 %v685
      %v790 = vunpack.c.l.b16 %v686
      %v791 = vunpack.c.l.b16 %v687
      %v792 = vunpack.c.l.b16 %v688
      %v793 = vunpack.c.l.b16 %v689
      %v794 = vunpack.c.l.b16 %v690
      %v795 = vunpack.c.l.b16 %v691
      %v796 = vunpack.c.l.b16 %v692
      %v797 = vunpack.c.l.b16 %v693
      %v798 = vunpack.c.l.b16 %v694
      %v799 = vunpack.c.l.b16 %v695
      %v800 = vunpack.c.l.b16 %v696
      %v801 = vunpack.c.l.b16 %v697
      %v802 = vunpack.c.l.b16 %v698
      %v803 = vunpack.c.l.b16 %v699
      %v804 = vunpack.c.l.b16 %v700
      %v805 = vunpack.c.l.b16 %v701
      %v806 = vunpack.c.l.b16 %v702
      %v807 = vunpack.c.l.b16 %v703
      %v808 = vunpack.c.l.b16 %v704
      %v809 = vunpack.c.l.b16 %v705
      %v810 = vunpack.c.l.b16 %v706
      %v811 = vunpack.c.l.b16 %v707
      %v812 = vunpack.c.l.b16 %v708
      %v813 = vunpack.c.l.b16 %v709
      %v814 = vunpack.c.l.b16 %v710
      %v815 = vpack.c.b16 %v784, %v783
      %v816 = vpack.c.b16 %v786, %v785
      %v817 = vpack.c.b16 %v788, %v787
      %v818 = vpack.c.b16 %v790, %v789
      %v819 = vpack.c.b16 %v792, %v791
      %v820 = vpack.c.b16 %v794, %v793
      %v821 = vpack.c.b16 %v796, %v795
      %v822 = vpack.c.b16 %v798, %v797
      %v823 = vpack.c.b16 %v800, %v799
      %v824 = vpack.c.b16 %v802, %v801
      %v825 = vpack.c.b16 %v804, %v803
      %v826 = vpack.c.b16 %v806, %v805
      %v827 = vpack.c.b16 %v808, %v807
      %v828 = vpack.c.b16 %v810, %v809
      %v829 = vpack.c.b16 %v812, %v811
      %v830 = vpack.c.b16 %v814, %v813
      %847 = vmatprep.subr.bf16.mxu0 0
      %848 = vmatpush1.bf16.msra.mxu0 %v815
      %849 = vmatprep.subr.bf16.mxu0 0
      %850 = vmatpush1.bf16.msra.mxu0 %v816
      %851 = vmatprep.subr.bf16.mxu0 0
      %852 = vmatpush1.bf16.msra.mxu0 %v817
      %853 = vmatprep.subr.bf16.mxu0 0
      %854 = vmatpush1.bf16.msra.mxu0 %v818
      %855 = vmatprep.subr.bf16.mxu0 0
      %856 = vmatpush1.bf16.msra.mxu0 %v819
      %857 = vmatprep.subr.bf16.mxu0 0
      %858 = vmatpush1.bf16.msra.mxu0 %v820
      %859 = vmatprep.subr.bf16.mxu0 0
      %860 = vmatpush1.bf16.msra.mxu0 %v821
      %861 = vmatprep.subr.bf16.mxu0 0
      %862 = vmatpush1.bf16.msra.mxu0 %v822
      %863 = vmatprep.subr.bf16.mxu0 0
      %864 = vmatpush1.bf16.msra.mxu0 %v823
      %865 = vmatprep.subr.bf16.mxu0 0
      %866 = vmatpush1.bf16.msra.mxu0 %v824
      %867 = vmatprep.subr.bf16.mxu0 0
      %868 = vmatpush1.bf16.msra.mxu0 %v825
      %869 = vmatprep.subr.bf16.mxu0 0
      %870 = vmatpush1.bf16.msra.mxu0 %v826
      %871 = vmatprep.subr.bf16.mxu0 0
      %872 = vmatpush1.bf16.msra.mxu0 %v827
      %873 = vmatprep.subr.bf16.mxu0 0
      %874 = vmatpush1.bf16.msra.mxu0 %v828
      %875 = vmatprep.subr.bf16.mxu0 0
      %876 = vmatpush1.bf16.msra.mxu0 %v829
      %877 = vmatprep.subr.bf16.mxu0 0
      %878 = vmatpush1.bf16.msra.mxu0 %v830
      %879 = vmatprep.mubr.bf16.mxu0 %v736
      %880 = vmatmul.mubr.bf16.gmra.mrb[0].mxu0 %v735
      %v881 = vpop.f32.mrb[0].mxu0
      %v882 = vadd.f32 0.0, %v881
      %v883 = vpop.f32.mrb[0].mxu0
      %v884 = vpop.f32.mrb[0].mxu0
      %v885 = vadd.f32 0.0, %v884
      %v886 = vpop.f32.mrb[0].mxu0
      %887 = vmatprep.mubr.bf16.mxu0 %v738
      %888 = vmatmul.mubr.bf16.gmra.mrb[0].mxu0 %v737
      %v889 = vpop.f32.mrb[0].mxu0
      %v890 = vadd.f32 0.0, %v889
      %v891 = vpop.f32.mrb[0].mxu0
      %v892 = vpop.f32.mrb[0].mxu0
      %v893 = vadd.f32 0.0, %v892
      %v894 = vpop.f32.mrb[0].mxu0
      %895 = vmatprep.mubr.bf16.mxu0 %v740
      %896 = vmatmul.mubr.bf16.gmra.mrb[0].mxu0 %v739
      %v897 = vpop.f32.mrb[0].mxu0
      %v898 = vadd.f32 0.0, %v897
      %v899 = vpop.f32.mrb[0].mxu0
      %v900 = vpop.f32.mrb[0].mxu0
      %v901 = vadd.f32 0.0, %v900
      %v902 = vpop.f32.mrb[0].mxu0
      %903 = vmatprep.mubr.bf16.mxu0 %v742
      %904 = vmatmul.mubr.bf16.gmra.mrb[0].mxu0 %v741
      %v905 = vpop.f32.mrb[0].mxu0
      %v906 = vadd.f32 0.0, %v905
      %v907 = vpop.f32.mrb[0].mxu0
      %v908 = vpop.f32.mrb[0].mxu0
      %v909 = vadd.f32 0.0, %v908
      %v910 = vpop.f32.mrb[0].mxu0
      %911 = vdwg.mxu0
      %v920 = vunpack.c.l.b16 %v629
      %v921 = vunpack.c.h.b16 %v629
      %v922 = vunpack.c.l.b16 %v630
      %v923 = vunpack.c.h.b16 %v630
      %v924 = vunpack.c.l.b16 %v631
      %v925 = vunpack.c.h.b16 %v631
      %v926 = vunpack.c.l.b16 %v632
      %v927 = vunpack.c.h.b16 %v632
      %v928 = vunpack.c.l.b16 %v633
      %v929 = vunpack.c.h.b16 %v633
      %v930 = vunpack.c.l.b16 %v634
      %v931 = vunpack.c.h.b16 %v634
      %v932 = vunpack.c.l.b16 %v635
      %v933 = vunpack.c.h.b16 %v635
      %v934 = vunpack.c.l.b16 %v636
      %v935 = vunpack.c.h.b16 %v636
      %v936 = vpack.c.b16 %v922, %v920
      %v937 = vpack.c.b16 %v923, %v921
      %v938 = vpack.c.b16 %v926, %v924
      %v939 = vpack.c.b16 %v927, %v925
      %v940 = vpack.c.b16 %v930, %v928
      %v941 = vpack.c.b16 %v931, %v929
      %v942 = vpack.c.b16 %v934, %v932
      %v943 = vpack.c.b16 %v935, %v933
      %v984 = vunpack.c.l.b16 %v638
      %v985 = vunpack.c.l.b16 %v639
      %v986 = vunpack.c.l.b16 %v640
      %v987 = vunpack.c.l.b16 %v641
      %v988 = vunpack.c.l.b16 %v642
      %v989 = vunpack.c.l.b16 %v643
      %v990 = vunpack.c.l.b16 %v644
      %v991 = vunpack.c.l.b16 %v645
      %v992 = vunpack.c.l.b16 %v646
      %v993 = vunpack.c.l.b16 %v647
      %v994 = vunpack.c.l.b16 %v648
      %v995 = vunpack.c.l.b16 %v649
      %v996 = vunpack.c.l.b16 %v650
      %v997 = vunpack.c.l.b16 %v651
      %v998 = vunpack.c.l.b16 %v652
      %v999 = vunpack.c.l.b16 %v653
      %v1000 = vunpack.c.l.b16 %v654
      %v1001 = vunpack.c.l.b16 %v655
      %v1002 = vunpack.c.l.b16 %v656
      %v1003 = vunpack.c.l.b16 %v657
      %v1004 = vunpack.c.l.b16 %v658
      %v1005 = vunpack.c.l.b16 %v659
      %v1006 = vunpack.c.l.b16 %v660
      %v1007 = vunpack.c.l.b16 %v661
      %v1008 = vunpack.c.l.b16 %v662
      %v1009 = vunpack.c.l.b16 %v663
      %v1010 = vunpack.c.l.b16 %v664
      %v1011 = vunpack.c.l.b16 %v665
      %v1012 = vunpack.c.l.b16 %v666
      %v1013 = vunpack.c.l.b16 %v667
      %v1014 = vunpack.c.l.b16 %v668
      %v1015 = vunpack.c.l.b16 %v669
      %v1016 = vpack.c.b16 %v985, %v984
      %v1017 = vpack.c.b16 %v987, %v986
      %v1018 = vpack.c.b16 %v989, %v988
      %v1019 = vpack.c.b16 %v991, %v990
      %v1020 = vpack.c.b16 %v993, %v992
      %v1021 = vpack.c.b16 %v995, %v994
      %v1022 = vpack.c.b16 %v997, %v996
      %v1023 = vpack.c.b16 %v999, %v998
      %v1024 = vpack.c.b16 %v1001, %v1000
      %v1025 = vpack.c.b16 %v1003, %v1002
      %v1026 = vpack.c.b16 %v1005, %v1004
      %v1027 = vpack.c.b16 %v1007, %v1006
      %v1028 = vpack.c.b16 %v1009, %v1008
      %v1029 = vpack.c.b16 %v1011, %v1010
      %v1030 = vpack.c.b16 %v1013, %v1012
      %v1031 = vpack.c.b16 %v1015, %v1014
      %1048 = vmatprep.subr.bf16.mxu0 0
      %1049 = vmatpush1.bf16.msra.mxu0 %v1016
      %1050 = vmatprep.subr.bf16.mxu0 0
      %1051 = vmatpush1.bf16.msra.mxu0 %v1017
      %1052 = vmatprep.subr.bf16.mxu0 0
      %1053 = vmatpush1.bf16.msra.mxu0 %v1018
      %1054 = vmatprep.subr.bf16.mxu0 0
      %1055 = vmatpush1.bf16.msra.mxu0 %v1019
      %1056 = vmatprep.subr.bf16.mxu0 0
      %1057 = vmatpush1.bf16.msra.mxu0 %v1020
      %1058 = vmatprep.subr.bf16.mxu0 0
      %1059 = vmatpush1.bf16.msra.mxu0 %v1021
      %1060 = vmatprep.subr.bf16.mxu0 0
      %1061 = vmatpush1.bf16.msra.mxu0 %v1022
      %1062 = vmatprep.subr.bf16.mxu0 0
      %1063 = vmatpush1.bf16.msra.mxu0 %v1023
      %1064 = vmatprep.subr.bf16.mxu0 0
      %1065 = vmatpush1.bf16.msra.mxu0 %v1024
      %1066 = vmatprep.subr.bf16.mxu0 0
      %1067 = vmatpush1.bf16.msra.mxu0 %v1025
      %1068 = vmatprep.subr.bf16.mxu0 0
      %1069 = vmatpush1.bf16.msra.mxu0 %v1026
      %1070 = vmatprep.subr.bf16.mxu0 0
      %1071 = vmatpush1.bf16.msra.mxu0 %v1027
      %1072 = vmatprep.subr.bf16.mxu0 0
      %1073 = vmatpush1.bf16.msra.mxu0 %v1028
      %1074 = vmatprep.subr.bf16.mxu0 0
      %1075 = vmatpush1.bf16.msra.mxu0 %v1029
      %1076 = vmatprep.subr.bf16.mxu0 0
      %1077 = vmatpush1.bf16.msra.mxu0 %v1030
      %1078 = vmatprep.subr.bf16.mxu0 0
      %1079 = vmatpush1.bf16.msra.mxu0 %v1031
      %1080 = vmatprep.mubr.bf16.mxu0 %v937
      %1081 = vmatmul.mubr.bf16.gmra.mrb[0].mxu0 %v936
      %v1082 = vpop.f32.mrb[0].mxu0
      %v1083 = vadd.f32 %v882, %v1082
      %v1084 = vpop.f32.mrb[0].mxu0
      %v1085 = vpop.f32.mrb[0].mxu0
      %v1086 = vadd.f32 %v885, %v1085
      %v1087 = vpop.f32.mrb[0].mxu0
      %1088 = vmatprep.mubr.bf16.mxu0 %v939
      %1089 = vmatmul.mubr.bf16.gmra.mrb[0].mxu0 %v938
      %v1090 = vpop.f32.mrb[0].mxu0
      %v1091 = vadd.f32 %v890, %v1090
      %v1092 = vpop.f32.mrb[0].mxu0
      %v1093 = vpop.f32.mrb[0].mxu0
      %v1094 = vadd.f32 %v893, %v1093
      %v1095 = vpop.f32.mrb[0].mxu0
      %1096 = vmatprep.mubr.bf16.mxu0 %v941
      %1097 = vmatmul.mubr.bf16.gmra.mrb[0].mxu0 %v940
      %v1098 = vpop.f32.mrb[0].mxu0
      %v1099 = vadd.f32 %v898, %v1098
      %v1100 = vpop.f32.mrb[0].mxu0
      %v1101 = vpop.f32.mrb[0].mxu0
      %v1102 = vadd.f32 %v901, %v1101
      %v1103 = vpop.f32.mrb[0].mxu0
      %1104 = vmatprep.mubr.bf16.mxu0 %v943
      %1105 = vmatmul.mubr.bf16.gmra.mrb[0].mxu0 %v942
      %v1106 = vpop.f32.mrb[0].mxu0
      %v1107 = vadd.f32 %v906, %v1106
      %v1108 = vpop.f32.mrb[0].mxu0
      %v1109 = vpop.f32.mrb[0].mxu0
      %v1110 = vadd.f32 %v909, %v1109
      %v1111 = vpop.f32.mrb[0].mxu0
      %1112 = vdwg.mxu0
      %s1113 = scalar_lea.vmem %s1, 512
      %v1114 = vld [vmem:[%s1113] sm:$0xf]
      %v1115 = vld [vmem:[%s1113 + $0x4] sm:$0xf]
      %v1116 = vld [vmem:[%s1113 + $0x8] sm:$0xf]
      %v1117 = vld [vmem:[%s1113 + $0xc] sm:$0xf]
      %v1118 = vld [vmem:[%s1113 + $0x10] sm:$0xf]
      %v1119 = vld [vmem:[%s1113 + $0x14] sm:$0xf]
      %v1120 = vld [vmem:[%s1113 + $0x18] sm:$0xf]
      %v1121 = vld [vmem:[%s1113 + $0x1c] sm:$0xf]
      %v1122 = vld [vmem:[%s1113 + $0x20] sm:$0xf]
      %v1123 = vld [vmem:[%s1113 + $0x24] sm:$0xf]
      %v1124 = vld [vmem:[%s1113 + $0x28] sm:$0xf]
      %v1125 = vld [vmem:[%s1113 + $0x2c] sm:$0xf]
      %v1126 = vld [vmem:[%s1113 + $0x30] sm:$0xf]
      %v1127 = vld [vmem:[%s1113 + $0x34] sm:$0xf]
      %v1128 = vld [vmem:[%s1113 + $0x38] sm:$0xf]
      %v1129 = vld [vmem:[%s1113 + $0x3c] sm:$0xf]
      %v1130 = vld [vmem:[%s1113 + $0x40] sm:$0xf]
      %v1131 = vld [vmem:[%s1113 + $0x44] sm:$0xf]
      %v1132 = vld [vmem:[%s1113 + $0x48] sm:$0xf]
      %v1133 = vld [vmem:[%s1113 + $0x4c] sm:$0xf]
      %v1134 = vld [vmem:[%s1113 + $0x50] sm:$0xf]
      %v1135 = vld [vmem:[%s1113 + $0x54] sm:$0xf]
      %v1136 = vld [vmem:[%s1113 + $0x58] sm:$0xf]
      %v1137 = vld [vmem:[%s1113 + $0x5c] sm:$0xf]
      %v1138 = vld [vmem:[%s1113 + $0x60] sm:$0xf]
      %v1139 = vld [vmem:[%s1113 + $0x64] sm:$0xf]
      %v1140 = vld [vmem:[%s1113 + $0x68] sm:$0xf]
      %v1141 = vld [vmem:[%s1113 + $0x6c] sm:$0xf]
      %v1142 = vld [vmem:[%s1113 + $0x70] sm:$0xf]
      %v1143 = vld [vmem:[%s1113 + $0x74] sm:$0xf]
      %v1144 = vld [vmem:[%s1113 + $0x78] sm:$0xf]
      %v1145 = vld [vmem:[%s1113 + $0x7c] sm:$0xf]
      %s1146 = scalar_lea.vmem %s138, 24
      %v1147 = vld [vmem:[%s1146] sm:$0xff]
      %v1148 = vld [vmem:[%s1146 + $0xc] sm:$0xff]
      %v1149 = vld [vmem:[%s1146 + $0x18] sm:$0xff]
      %v1150 = vld [vmem:[%s1146 + $0x24] sm:$0xff]
      %v1151 = vld [vmem:[%s1146 + $0x30] sm:$0xff]
      %v1152 = vld [vmem:[%s1146 + $0x3c] sm:$0xff]
      %v1153 = vld [vmem:[%s1146 + $0x48] sm:$0xff]
      %v1154 = vld [vmem:[%s1146 + $0x54] sm:$0xff]
      %s1155 = scalar_lea.vmem %s1, 640
      %v1156 = vld [vmem:[%s1155] sm:$0xf]
      %v1157 = vld [vmem:[%s1155 + $0x4] sm:$0xf]
      %v1158 = vld [vmem:[%s1155 + $0x8] sm:$0xf]
      %v1159 = vld [vmem:[%s1155 + $0xc] sm:$0xf]
      %v1160 = vld [vmem:[%s1155 + $0x10] sm:$0xf]
      %v1161 = vld [vmem:[%s1155 + $0x14] sm:$0xf]
      %v1162 = vld [vmem:[%s1155 + $0x18] sm:$0xf]
      %v1163 = vld [vmem:[%s1155 + $0x1c] sm:$0xf]
      %v1164 = vld [vmem:[%s1155 + $0x20] sm:$0xf]
      %v1165 = vld [vmem:[%s1155 + $0x24] sm:$0xf]
      %v1166 = vld [vmem:[%s1155 + $0x28] sm:$0xf]
      %v1167 = vld [vmem:[%s1155 + $0x2c] sm:$0xf]
      %v1168 = vld [vmem:[%s1155 + $0x30] sm:$0xf]
      %v1169 = vld [vmem:[%s1155 + $0x34] sm:$0xf]
      %v1170 = vld [vmem:[%s1155 + $0x38] sm:$0xf]
      %v1171 = vld [vmem:[%s1155 + $0x3c] sm:$0xf]
      %v1172 = vld [vmem:[%s1155 + $0x40] sm:$0xf]
      %v1173 = vld [vmem:[%s1155 + $0x44] sm:$0xf]
      %v1174 = vld [vmem:[%s1155 + $0x48] sm:$0xf]
      %v1175 = vld [vmem:[%s1155 + $0x4c] sm:$0xf]
      %v1176 = vld [vmem:[%s1155 + $0x50] sm:$0xf]
      %v1177 = vld [vmem:[%s1155 + $0x54] sm:$0xf]
      %v1178 = vld [vmem:[%s1155 + $0x58] sm:$0xf]
      %v1179 = vld [vmem:[%s1155 + $0x5c] sm:$0xf]
      %v1180 = vld [vmem:[%s1155 + $0x60] sm:$0xf]
      %v1181 = vld [vmem:[%s1155 + $0x64] sm:$0xf]
      %v1182 = vld [vmem:[%s1155 + $0x68] sm:$0xf]
      %v1183 = vld [vmem:[%s1155 + $0x6c] sm:$0xf]
      %v1184 = vld [vmem:[%s1155 + $0x70] sm:$0xf]
      %v1185 = vld [vmem:[%s1155 + $0x74] sm:$0xf]
      %v1186 = vld [vmem:[%s1155 + $0x78] sm:$0xf]
      %v1187 = vld [vmem:[%s1155 + $0x7c] sm:$0xf]
      %v1196 = vunpack.c.l.b16 %v1147
      %v1197 = vunpack.c.h.b16 %v1147
      %v1198 = vunpack.c.l.b16 %v1148
      %v1199 = vunpack.c.h.b16 %v1148
      %v1200 = vunpack.c.l.b16 %v1149
      %v1201 = vunpack.c.h.b16 %v1149
      %v1202 = vunpack.c.l.b16 %v1150
      %v1203 = vunpack.c.h.b16 %v1150
      %v1204 = vunpack.c.l.b16 %v1151
      %v1205 = vunpack.c.h.b16 %v1151
      %v1206 = vunpack.c.l.b16 %v1152
      %v1207 = vunpack.c.h.b16 %v1152
      %v1208 = vunpack.c.l.b16 %v1153
      %v1209 = vunpack.c.h.b16 %v1153
      %v1210 = vunpack.c.l.b16 %v1154
      %v1211 = vunpack.c.h.b16 %v1154
      %v1212 = vpack.c.b16 %v1198, %v1196
      %v1213 = vpack.c.b16 %v1199, %v1197
      %v1214 = vpack.c.b16 %v1202, %v1200
      %v1215 = vpack.c.b16 %v1203, %v1201
      %v1216 = vpack.c.b16 %v1206, %v1204
      %v1217 = vpack.c.b16 %v1207, %v1205
      %v1218 = vpack.c.b16 %v1210, %v1208
      %v1219 = vpack.c.b16 %v1211, %v1209
      %v1260 = vunpack.c.l.b16 %v1156
      %v1261 = vunpack.c.l.b16 %v1157
      %v1262 = vunpack.c.l.b16 %v1158
      %v1263 = vunpack.c.l.b16 %v1159
      %v1264 = vunpack.c.l.b16 %v1160
      %v1265 = vunpack.c.l.b16 %v1161
      %v1266 = vunpack.c.l.b16 %v1162
      %v1267 = vunpack.c.l.b16 %v1163
      %v1268 = vunpack.c.l.b16 %v1164
      %v1269 = vunpack.c.l.b16 %v1165
      %v1270 = vunpack.c.l.b16 %v1166
      %v1271 = vunpack.c.l.b16 %v1167
      %v1272 = vunpack.c.l.b16 %v1168
      %v1273 = vunpack.c.l.b16 %v1169
      %v1274 = vunpack.c.l.b16 %v1170
      %v1275 = vunpack.c.l.b16 %v1171
      %v1276 = vunpack.c.l.b16 %v1172
      %v1277 = vunpack.c.l.b16 %v1173
      %v1278 = vunpack.c.l.b16 %v1174
      %v1279 = vunpack.c.l.b16 %v1175
      %v1280 = vunpack.c.l.b16 %v1176
      %v1281 = vunpack.c.l.b16 %v1177
      %v1282 = vunpack.c.l.b16 %v1178
      %v1283 = vunpack.c.l.b16 %v1179
      %v1284 = vunpack.c.l.b16 %v1180
      %v1285 = vunpack.c.l.b16 %v1181
      %v1286 = vunpack.c.l.b16 %v1182
      %v1287 = vunpack.c.l.b16 %v1183
      %v1288 = vunpack.c.l.b16 %v1184
      %v1289 = vunpack.c.l.b16 %v1185
      %v1290 = vunpack.c.l.b16 %v1186
      %v1291 = vunpack.c.l.b16 %v1187
      %v1292 = vpack.c.b16 %v1261, %v1260
      %v1293 = vpack.c.b16 %v1263, %v1262
      %v1294 = vpack.c.b16 %v1265, %v1264
      %v1295 = vpack.c.b16 %v1267, %v1266
      %v1296 = vpack.c.b16 %v1269, %v1268
      %v1297 = vpack.c.b16 %v1271, %v1270
      %v1298 = vpack.c.b16 %v1273, %v1272
      %v1299 = vpack.c.b16 %v1275, %v1274
      %v1300 = vpack.c.b16 %v1277, %v1276
      %v1301 = vpack.c.b16 %v1279, %v1278
      %v1302 = vpack.c.b16 %v1281, %v1280
      %v1303 = vpack.c.b16 %v1283, %v1282
      %v1304 = vpack.c.b16 %v1285, %v1284
      %v1305 = vpack.c.b16 %v1287, %v1286
      %v1306 = vpack.c.b16 %v1289, %v1288
      %v1307 = vpack.c.b16 %v1291, %v1290
      %1324 = vmatprep.subr.bf16.mxu0 0
      %1325 = vmatpush1.bf16.msra.mxu0 %v1292
      %1326 = vmatprep.subr.bf16.mxu0 0
      %1327 = vmatpush1.bf16.msra.mxu0 %v1293
      %1328 = vmatprep.subr.bf16.mxu0 0
      %1329 = vmatpush1.bf16.msra.mxu0 %v1294
      %1330 = vmatprep.subr.bf16.mxu0 0
      %1331 = vmatpush1.bf16.msra.mxu0 %v1295
      %1332 = vmatprep.subr.bf16.mxu0 0
      %1333 = vmatpush1.bf16.msra.mxu0 %v1296
      %1334 = vmatprep.subr.bf16.mxu0 0
      %1335 = vmatpush1.bf16.msra.mxu0 %v1297
      %1336 = vmatprep.subr.bf16.mxu0 0
      %1337 = vmatpush1.bf16.msra.mxu0 %v1298
      %1338 = vmatprep.subr.bf16.mxu0 0
      %1339 = vmatpush1.bf16.msra.mxu0 %v1299
      %1340 = vmatprep.subr.bf16.mxu0 0
      %1341 = vmatpush1.bf16.msra.mxu0 %v1300
      %1342 = vmatprep.subr.bf16.mxu0 0
      %1343 = vmatpush1.bf16.msra.mxu0 %v1301
      %1344 = vmatprep.subr.bf16.mxu0 0
      %1345 = vmatpush1.bf16.msra.mxu0 %v1302
      %1346 = vmatprep.subr.bf16.mxu0 0
      %1347 = vmatpush1.bf16.msra.mxu0 %v1303
      %1348 = vmatprep.subr.bf16.mxu0 0
      %1349 = vmatpush1.bf16.msra.mxu0 %v1304
      %1350 = vmatprep.subr.bf16.mxu0 0
      %1351 = vmatpush1.bf16.msra.mxu0 %v1305
      %1352 = vmatprep.subr.bf16.mxu0 0
      %1353 = vmatpush1.bf16.msra.mxu0 %v1306
      %1354 = vmatprep.subr.bf16.mxu0 0
      %1355 = vmatpush1.bf16.msra.mxu0 %v1307
      %1356 = vmatprep.mubr.bf16.mxu0 %v1213
      %1357 = vmatmul.mubr.bf16.gmra.mrb[0].mxu0 %v1212
      %v1358 = vpop.f32.mrb[0].mxu0
      %v1359 = vadd.f32 0.0, %v1358
      %v1360 = vpop.f32.mrb[0].mxu0
      %v1361 = vpop.f32.mrb[0].mxu0
      %v1362 = vadd.f32 0.0, %v1361
      %v1363 = vpop.f32.mrb[0].mxu0
      %1364 = vmatprep.mubr.bf16.mxu0 %v1215
      %1365 = vmatmul.mubr.bf16.gmra.mrb[0].mxu0 %v1214
      %v1366 = vpop.f32.mrb[0].mxu0
      %v1367 = vadd.f32 0.0, %v1366
      %v1368 = vpop.f32.mrb[0].mxu0
      %v1369 = vpop.f32.mrb[0].mxu0
      %v1370 = vadd.f32 0.0, %v1369
      %v1371 = vpop.f32.mrb[0].mxu0
      %1372 = vmatprep.mubr.bf16.mxu0 %v1217
      %1373 = vmatmul.mubr.bf16.gmra.mrb[0].mxu0 %v1216
      %v1374 = vpop.f32.mrb[0].mxu0
      %v1375 = vadd.f32 0.0, %v1374
      %v1376 = vpop.f32.mrb[0].mxu0
      %v1377 = vpop.f32.mrb[0].mxu0
      %v1378 = vadd.f32 0.0, %v1377
      %v1379 = vpop.f32.mrb[0].mxu0
      %1380 = vmatprep.mubr.bf16.mxu0 %v1219
      %1381 = vmatmul.mubr.bf16.gmra.mrb[0].mxu0 %v1218
      %v1382 = vpop.f32.mrb[0].mxu0
      %v1383 = vadd.f32 0.0, %v1382
      %v1384 = vpop.f32.mrb[0].mxu0
      %v1385 = vpop.f32.mrb[0].mxu0
      %v1386 = vadd.f32 0.0, %v1385
      %v1387 = vpop.f32.mrb[0].mxu0
      %1388 = vdwg.mxu0
      %v1421 = vunpack.c.l.b16 %v1114
      %v1422 = vunpack.c.l.b16 %v1115
      %v1423 = vunpack.c.l.b16 %v1116
      %v1424 = vunpack.c.l.b16 %v1117
      %v1425 = vunpack.c.l.b16 %v1118
      %v1426 = vunpack.c.l.b16 %v1119
      %v1427 = vunpack.c.l.b16 %v1120
      %v1428 = vunpack.c.l.b16 %v1121
      %v1429 = vunpack.c.l.b16 %v1122
      %v1430 = vunpack.c.l.b16 %v1123
      %v1431 = vunpack.c.l.b16 %v1124
      %v1432 = vunpack.c.l.b16 %v1125
      %v1433 = vunpack.c.l.b16 %v1126
      %v1434 = vunpack.c.l.b16 %v1127
      %v1435 = vunpack.c.l.b16 %v1128
      %v1436 = vunpack.c.l.b16 %v1129
      %v1437 = vunpack.c.l.b16 %v1130
      %v1438 = vunpack.c.l.b16 %v1131
      %v1439 = vunpack.c.l.b16 %v1132
      %v1440 = vunpack.c.l.b16 %v1133
      %v1441 = vunpack.c.l.b16 %v1134
      %v1442 = vunpack.c.l.b16 %v1135
      %v1443 = vunpack.c.l.b16 %v1136
      %v1444 = vunpack.c.l.b16 %v1137
      %v1445 = vunpack.c.l.b16 %v1138
      %v1446 = vunpack.c.l.b16 %v1139
      %v1447 = vunpack.c.l.b16 %v1140
      %v1448 = vunpack.c.l.b16 %v1141
      %v1449 = vunpack.c.l.b16 %v1142
      %v1450 = vunpack.c.l.b16 %v1143
      %v1451 = vunpack.c.l.b16 %v1144
      %v1452 = vunpack.c.l.b16 %v1145
      %v1453 = vpack.c.b16 %v1422, %v1421
      %v1454 = vpack.c.b16 %v1424, %v1423
      %v1455 = vpack.c.b16 %v1426, %v1425
      %v1456 = vpack.c.b16 %v1428, %v1427
      %v1457 = vpack.c.b16 %v1430, %v1429
      %v1458 = vpack.c.b16 %v1432, %v1431
      %v1459 = vpack.c.b16 %v1434, %v1433
      %v1460 = vpack.c.b16 %v1436, %v1435
      %v1461 = vpack.c.b16 %v1438, %v1437
      %v1462 = vpack.c.b16 %v1440, %v1439
      %v1463 = vpack.c.b16 %v1442, %v1441
      %v1464 = vpack.c.b16 %v1444, %v1443
      %v1465 = vpack.c.b16 %v1446, %v1445
      %v1466 = vpack.c.b16 %v1448, %v1447
      %v1467 = vpack.c.b16 %v1450, %v1449
      %v1468 = vpack.c.b16 %v1452, %v1451
      %1485 = vmatprep.subr.bf16.mxu0 0
      %1486 = vmatpush1.bf16.msra.mxu0 %v1453
      %1487 = vmatprep.subr.bf16.mxu0 0
      %1488 = vmatpush1.bf16.msra.mxu0 %v1454
      %1489 = vmatprep.subr.bf16.mxu0 0
      %1490 = vmatpush1.bf16.msra.mxu0 %v1455
      %1491 = vmatprep.subr.bf16.mxu0 0
      %1492 = vmatpush1.bf16.msra.mxu0 %v1456
      %1493 = vmatprep.subr.bf16.mxu0 0
      %1494 = vmatpush1.bf16.msra.mxu0 %v1457
      %1495 = vmatprep.subr.bf16.mxu0 0
      %1496 = vmatpush1.bf16.msra.mxu0 %v1458
      %1497 = vmatprep.subr.bf16.mxu0 0
      %1498 = vmatpush1.bf16.msra.mxu0 %v1459
      %1499 = vmatprep.subr.bf16.mxu0 0
      %1500 = vmatpush1.bf16.msra.mxu0 %v1460
      %1501 = vmatprep.subr.bf16.mxu0 0
      %1502 = vmatpush1.bf16.msra.mxu0 %v1461
      %1503 = vmatprep.subr.bf16.mxu0 0
      %1504 = vmatpush1.bf16.msra.mxu0 %v1462
      %1505 = vmatprep.subr.bf16.mxu0 0
      %1506 = vmatpush1.bf16.msra.mxu0 %v1463
      %1507 = vmatprep.subr.bf16.mxu0 0
      %1508 = vmatpush1.bf16.msra.mxu0 %v1464
      %1509 = vmatprep.subr.bf16.mxu0 0
      %1510 = vmatpush1.bf16.msra.mxu0 %v1465
      %1511 = vmatprep.subr.bf16.mxu0 0
      %1512 = vmatpush1.bf16.msra.mxu0 %v1466
      %1513 = vmatprep.subr.bf16.mxu0 0
      %1514 = vmatpush1.bf16.msra.mxu0 %v1467
      %1515 = vmatprep.subr.bf16.mxu0 0
      %1516 = vmatpush1.bf16.msra.mxu0 %v1468
      %1517 = vmatprep.mubr.bf16.mxu0 %v252
      %1518 = vmatmul.mubr.bf16.gmra.mrb[0].mxu0 %v251
      %v1519 = vpop.f32.mrb[0].mxu0
      %v1520 = vadd.f32 %v1359, %v1519
      %v1521 = vpop.f32.mrb[0].mxu0
      %v1522 = vpop.f32.mrb[0].mxu0
      %v1523 = vadd.f32 %v1362, %v1522
      %v1524 = vpop.f32.mrb[0].mxu0
      %1525 = vmatprep.mubr.bf16.mxu0 %v254
      %1526 = vmatmul.mubr.bf16.gmra.mrb[0].mxu0 %v253
      %v1527 = vpop.f32.mrb[0].mxu0
      %v1528 = vadd.f32 %v1367, %v1527
      %v1529 = vpop.f32.mrb[0].mxu0
      %v1530 = vpop.f32.mrb[0].mxu0
      %v1531 = vadd.f32 %v1370, %v1530
      %v1532 = vpop.f32.mrb[0].mxu0
      %1533 = vmatprep.mubr.bf16.mxu0 %v256
      %1534 = vmatmul.mubr.bf16.gmra.mrb[0].mxu0 %v255
      %v1535 = vpop.f32.mrb[0].mxu0
      %v1536 = vadd.f32 %v1375, %v1535
      %v1537 = vpop.f32.mrb[0].mxu0
      %v1538 = vpop.f32.mrb[0].mxu0
      %v1539 = vadd.f32 %v1378, %v1538
      %v1540 = vpop.f32.mrb[0].mxu0
      %1541 = vmatprep.mubr.bf16.mxu0 %v258
      %1542 = vmatmul.mubr.bf16.gmra.mrb[0].mxu0 %v257
      %v1543 = vpop.f32.mrb[0].mxu0
      %v1544 = vadd.f32 %v1383, %v1543
      %v1545 = vpop.f32.mrb[0].mxu0
      %v1546 = vpop.f32.mrb[0].mxu0
      %v1547 = vadd.f32 %v1386, %v1546
      %v1548 = vpop.f32.mrb[0].mxu0
      %1549 = vdwg.mxu0
      %s1550 = scalar_lea.vmem %s1, 768
      %v1551 = vld [vmem:[%s1550] sm:$0xf]
      %v1552 = vld [vmem:[%s1550 + $0x4] sm:$0xf]
      %v1553 = vld [vmem:[%s1550 + $0x8] sm:$0xf]
      %v1554 = vld [vmem:[%s1550 + $0xc] sm:$0xf]
      %v1555 = vld [vmem:[%s1550 + $0x10] sm:$0xf]
      %v1556 = vld [vmem:[%s1550 + $0x14] sm:$0xf]
      %v1557 = vld [vmem:[%s1550 + $0x18] sm:$0xf]
      %v1558 = vld [vmem:[%s1550 + $0x1c] sm:$0xf]
      %v1559 = vld [vmem:[%s1550 + $0x20] sm:$0xf]
      %v1560 = vld [vmem:[%s1550 + $0x24] sm:$0xf]
      %v1561 = vld [vmem:[%s1550 + $0x28] sm:$0xf]
      %v1562 = vld [vmem:[%s1550 + $0x2c] sm:$0xf]
      %v1563 = vld [vmem:[%s1550 + $0x30] sm:$0xf]
      %v1564 = vld [vmem:[%s1550 + $0x34] sm:$0xf]
      %v1565 = vld [vmem:[%s1550 + $0x38] sm:$0xf]
      %v1566 = vld [vmem:[%s1550 + $0x3c] sm:$0xf]
      %v1567 = vld [vmem:[%s1550 + $0x40] sm:$0xf]
      %v1568 = vld [vmem:[%s1550 + $0x44] sm:$0xf]
      %v1569 = vld [vmem:[%s1550 + $0x48] sm:$0xf]
      %v1570 = vld [vmem:[%s1550 + $0x4c] sm:$0xf]
      %v1571 = vld [vmem:[%s1550 + $0x50] sm:$0xf]
      %v1572 = vld [vmem:[%s1550 + $0x54] sm:$0xf]
      %v1573 = vld [vmem:[%s1550 + $0x58] sm:$0xf]
      %v1574 = vld [vmem:[%s1550 + $0x5c] sm:$0xf]
      %v1575 = vld [vmem:[%s1550 + $0x60] sm:$0xf]
      %v1576 = vld [vmem:[%s1550 + $0x64] sm:$0xf]
      %v1577 = vld [vmem:[%s1550 + $0x68] sm:$0xf]
      %v1578 = vld [vmem:[%s1550 + $0x6c] sm:$0xf]
      %v1579 = vld [vmem:[%s1550 + $0x70] sm:$0xf]
      %v1580 = vld [vmem:[%s1550 + $0x74] sm:$0xf]
      %v1581 = vld [vmem:[%s1550 + $0x78] sm:$0xf]
      %v1582 = vld [vmem:[%s1550 + $0x7c] sm:$0xf]
      %v1583 = vld [vmem:[%s1146 + $0x4] sm:$0xff]
      %v1584 = vld [vmem:[%s1146 + $0x10] sm:$0xff]
      %v1585 = vld [vmem:[%s1146 + $0x1c] sm:$0xff]
      %v1586 = vld [vmem:[%s1146 + $0x28] sm:$0xff]
      %v1587 = vld [vmem:[%s1146 + $0x34] sm:$0xff]
      %v1588 = vld [vmem:[%s1146 + $0x40] sm:$0xff]
      %v1589 = vld [vmem:[%s1146 + $0x4c] sm:$0xff]
      %v1590 = vld [vmem:[%s1146 + $0x58] sm:$0xff]
      %s1591 = scalar_lea.vmem %s1, 896
      %v1592 = vld [vmem:[%s1591] sm:$0xf]
      %v1593 = vld [vmem:[%s1591 + $0x4] sm:$0xf]
      %v1594 = vld [vmem:[%s1591 + $0x8] sm:$0xf]
      %v1595 = vld [vmem:[%s1591 + $0xc] sm:$0xf]
      %v1596 = vld [vmem:[%s1591 + $0x10] sm:$0xf]
      %v1597 = vld [vmem:[%s1591 + $0x14] sm:$0xf]
      %v1598 = vld [vmem:[%s1591 + $0x18] sm:$0xf]
      %v1599 = vld [vmem:[%s1591 + $0x1c] sm:$0xf]
      %v1600 = vld [vmem:[%s1591 + $0x20] sm:$0xf]
      %v1601 = vld [vmem:[%s1591 + $0x24] sm:$0xf]
      %v1602 = vld [vmem:[%s1591 + $0x28] sm:$0xf]
      %v1603 = vld [vmem:[%s1591 + $0x2c] sm:$0xf]
      %v1604 = vld [vmem:[%s1591 + $0x30] sm:$0xf]
      %v1605 = vld [vmem:[%s1591 + $0x34] sm:$0xf]
      %v1606 = vld [vmem:[%s1591 + $0x38] sm:$0xf]
      %v1607 = vld [vmem:[%s1591 + $0x3c] sm:$0xf]
      %v1608 = vld [vmem:[%s1591 + $0x40] sm:$0xf]
      %v1609 = vld [vmem:[%s1591 + $0x44] sm:$0xf]
      %v1610 = vld [vmem:[%s1591 + $0x48] sm:$0xf]
      %v1611 = vld [vmem:[%s1591 + $0x4c] sm:$0xf]
      %v1612 = vld [vmem:[%s1591 + $0x50] sm:$0xf]
      %v1613 = vld [vmem:[%s1591 + $0x54] sm:$0xf]
      %v1614 = vld [vmem:[%s1591 + $0x58] sm:$0xf]
      %v1615 = vld [vmem:[%s1591 + $0x5c] sm:$0xf]
      %v1616 = vld [vmem:[%s1591 + $0x60] sm:$0xf]
      %v1617 = vld [vmem:[%s1591 + $0x64] sm:$0xf]
      %v1618 = vld [vmem:[%s1591 + $0x68] sm:$0xf]
      %v1619 = vld [vmem:[%s1591 + $0x6c] sm:$0xf]
      %v1620 = vld [vmem:[%s1591 + $0x70] sm:$0xf]
      %v1621 = vld [vmem:[%s1591 + $0x74] sm:$0xf]
      %v1622 = vld [vmem:[%s1591 + $0x78] sm:$0xf]
      %v1623 = vld [vmem:[%s1591 + $0x7c] sm:$0xf]
      %v1632 = vunpack.c.l.b16 %v1583
      %v1633 = vunpack.c.h.b16 %v1583
      %v1634 = vunpack.c.l.b16 %v1584
      %v1635 = vunpack.c.h.b16 %v1584
      %v1636 = vunpack.c.l.b16 %v1585
      %v1637 = vunpack.c.h.b16 %v1585
      %v1638 = vunpack.c.l.b16 %v1586
      %v1639 = vunpack.c.h.b16 %v1586
      %v1640 = vunpack.c.l.b16 %v1587
      %v1641 = vunpack.c.h.b16 %v1587
      %v1642 = vunpack.c.l.b16 %v1588
      %v1643 = vunpack.c.h.b16 %v1588
      %v1644 = vunpack.c.l.b16 %v1589
      %v1645 = vunpack.c.h.b16 %v1589
      %v1646 = vunpack.c.l.b16 %v1590
      %v1647 = vunpack.c.h.b16 %v1590
      %v1648 = vpack.c.b16 %v1634, %v1632
      %v1649 = vpack.c.b16 %v1635, %v1633
      %v1650 = vpack.c.b16 %v1638, %v1636
      %v1651 = vpack.c.b16 %v1639, %v1637
      %v1652 = vpack.c.b16 %v1642, %v1640
      %v1653 = vpack.c.b16 %v1643, %v1641
      %v1654 = vpack.c.b16 %v1646, %v1644
      %v1655 = vpack.c.b16 %v1647, %v1645
      %v1696 = vunpack.c.l.b16 %v1592
      %v1697 = vunpack.c.l.b16 %v1593
      %v1698 = vunpack.c.l.b16 %v1594
      %v1699 = vunpack.c.l.b16 %v1595
      %v1700 = vunpack.c.l.b16 %v1596
      %v1701 = vunpack.c.l.b16 %v1597
      %v1702 = vunpack.c.l.b16 %v1598
      %v1703 = vunpack.c.l.b16 %v1599
      %v1704 = vunpack.c.l.b16 %v1600
      %v1705 = vunpack.c.l.b16 %v1601
      %v1706 = vunpack.c.l.b16 %v1602
      %v1707 = vunpack.c.l.b16 %v1603
      %v1708 = vunpack.c.l.b16 %v1604
      %v1709 = vunpack.c.l.b16 %v1605
      %v1710 = vunpack.c.l.b16 %v1606
      %v1711 = vunpack.c.l.b16 %v1607
      %v1712 = vunpack.c.l.b16 %v1608
      %v1713 = vunpack.c.l.b16 %v1609
      %v1714 = vunpack.c.l.b16 %v1610
      %v1715 = vunpack.c.l.b16 %v1611
      %v1716 = vunpack.c.l.b16 %v1612
      %v1717 = vunpack.c.l.b16 %v1613
      %v1718 = vunpack.c.l.b16 %v1614
      %v1719 = vunpack.c.l.b16 %v1615
      %v1720 = vunpack.c.l.b16 %v1616
      %v1721 = vunpack.c.l.b16 %v1617
      %v1722 = vunpack.c.l.b16 %v1618
      %v1723 = vunpack.c.l.b16 %v1619
      %v1724 = vunpack.c.l.b16 %v1620
      %v1725 = vunpack.c.l.b16 %v1621
      %v1726 = vunpack.c.l.b16 %v1622
      %v1727 = vunpack.c.l.b16 %v1623
      %v1728 = vpack.c.b16 %v1697, %v1696
      %v1729 = vpack.c.b16 %v1699, %v1698
      %v1730 = vpack.c.b16 %v1701, %v1700
      %v1731 = vpack.c.b16 %v1703, %v1702
      %v1732 = vpack.c.b16 %v1705, %v1704
      %v1733 = vpack.c.b16 %v1707, %v1706
      %v1734 = vpack.c.b16 %v1709, %v1708
      %v1735 = vpack.c.b16 %v1711, %v1710
      %v1736 = vpack.c.b16 %v1713, %v1712
      %v1737 = vpack.c.b16 %v1715, %v1714
      %v1738 = vpack.c.b16 %v1717, %v1716
      %v1739 = vpack.c.b16 %v1719, %v1718
      %v1740 = vpack.c.b16 %v1721, %v1720
      %v1741 = vpack.c.b16 %v1723, %v1722
      %v1742 = vpack.c.b16 %v1725, %v1724
      %v1743 = vpack.c.b16 %v1727, %v1726
      %1760 = vmatprep.subr.bf16.mxu0 0
      %1761 = vmatpush1.bf16.msra.mxu0 %v1728
      %1762 = vmatprep.subr.bf16.mxu0 0
      %1763 = vmatpush1.bf16.msra.mxu0 %v1729
      %1764 = vmatprep.subr.bf16.mxu0 0
      %1765 = vmatpush1.bf16.msra.mxu0 %v1730
      %1766 = vmatprep.subr.bf16.mxu0 0
      %1767 = vmatpush1.bf16.msra.mxu0 %v1731
      %1768 = vmatprep.subr.bf16.mxu0 0
      %1769 = vmatpush1.bf16.msra.mxu0 %v1732
      %1770 = vmatprep.subr.bf16.mxu0 0
      %1771 = vmatpush1.bf16.msra.mxu0 %v1733
      %1772 = vmatprep.subr.bf16.mxu0 0
      %1773 = vmatpush1.bf16.msra.mxu0 %v1734
      %1774 = vmatprep.subr.bf16.mxu0 0
      %1775 = vmatpush1.bf16.msra.mxu0 %v1735
      %1776 = vmatprep.subr.bf16.mxu0 0
      %1777 = vmatpush1.bf16.msra.mxu0 %v1736
      %1778 = vmatprep.subr.bf16.mxu0 0
      %1779 = vmatpush1.bf16.msra.mxu0 %v1737
      %1780 = vmatprep.subr.bf16.mxu0 0
      %1781 = vmatpush1.bf16.msra.mxu0 %v1738
      %1782 = vmatprep.subr.bf16.mxu0 0
      %1783 = vmatpush1.bf16.msra.mxu0 %v1739
      %1784 = vmatprep.subr.bf16.mxu0 0
      %1785 = vmatpush1.bf16.msra.mxu0 %v1740
      %1786 = vmatprep.subr.bf16.mxu0 0
      %1787 = vmatpush1.bf16.msra.mxu0 %v1741
      %1788 = vmatprep.subr.bf16.mxu0 0
      %1789 = vmatpush1.bf16.msra.mxu0 %v1742
      %1790 = vmatprep.subr.bf16.mxu0 0
      %1791 = vmatpush1.bf16.msra.mxu0 %v1743
      %1792 = vmatprep.mubr.bf16.mxu0 %v1649
      %1793 = vmatmul.mubr.bf16.gmra.mrb[0].mxu0 %v1648
      %v1794 = vpop.f32.mrb[0].mxu0
      %v1795 = vadd.f32 0.0, %v1794
      %v1796 = vpop.f32.mrb[0].mxu0
      %v1797 = vpop.f32.mrb[0].mxu0
      %v1798 = vadd.f32 0.0, %v1797
      %v1799 = vpop.f32.mrb[0].mxu0
      %1800 = vmatprep.mubr.bf16.mxu0 %v1651
      %1801 = vmatmul.mubr.bf16.gmra.mrb[0].mxu0 %v1650
      %v1802 = vpop.f32.mrb[0].mxu0
      %v1803 = vadd.f32 0.0, %v1802
      %v1804 = vpop.f32.mrb[0].mxu0
      %v1805 = vpop.f32.mrb[0].mxu0
      %v1806 = vadd.f32 0.0, %v1805
      %v1807 = vpop.f32.mrb[0].mxu0
      %1808 = vmatprep.mubr.bf16.mxu0 %v1653
      %1809 = vmatmul.mubr.bf16.gmra.mrb[0].mxu0 %v1652
      %v1810 = vpop.f32.mrb[0].mxu0
      %v1811 = vadd.f32 0.0, %v1810
      %v1812 = vpop.f32.mrb[0].mxu0
      %v1813 = vpop.f32.mrb[0].mxu0
      %v1814 = vadd.f32 0.0, %v1813
      %v1815 = vpop.f32.mrb[0].mxu0
      %1816 = vmatprep.mubr.bf16.mxu0 %v1655
      %1817 = vmatmul.mubr.bf16.gmra.mrb[0].mxu0 %v1654
      %v1818 = vpop.f32.mrb[0].mxu0
      %v1819 = vadd.f32 0.0, %v1818
      %v1820 = vpop.f32.mrb[0].mxu0
      %v1821 = vpop.f32.mrb[0].mxu0
      %v1822 = vadd.f32 0.0, %v1821
      %v1823 = vpop.f32.mrb[0].mxu0
      %1824 = vdwg.mxu0
      %v1857 = vunpack.c.l.b16 %v1551
      %v1858 = vunpack.c.l.b16 %v1552
      %v1859 = vunpack.c.l.b16 %v1553
      %v1860 = vunpack.c.l.b16 %v1554
      %v1861 = vunpack.c.l.b16 %v1555
      %v1862 = vunpack.c.l.b16 %v1556
      %v1863 = vunpack.c.l.b16 %v1557
      %v1864 = vunpack.c.l.b16 %v1558
      %v1865 = vunpack.c.l.b16 %v1559
      %v1866 = vunpack.c.l.b16 %v1560
      %v1867 = vunpack.c.l.b16 %v1561
      %v1868 = vunpack.c.l.b16 %v1562
      %v1869 = vunpack.c.l.b16 %v1563
      %v1870 = vunpack.c.l.b16 %v1564
      %v1871 = vunpack.c.l.b16 %v1565
      %v1872 = vunpack.c.l.b16 %v1566
      %v1873 = vunpack.c.l.b16 %v1567
      %v1874 = vunpack.c.l.b16 %v1568
      %v1875 = vunpack.c.l.b16 %v1569
      %v1876 = vunpack.c.l.b16 %v1570
      %v1877 = vunpack.c.l.b16 %v1571
      %v1878 = vunpack.c.l.b16 %v1572
      %v1879 = vunpack.c.l.b16 %v1573
      %v1880 = vunpack.c.l.b16 %v1574
      %v1881 = vunpack.c.l.b16 %v1575
      %v1882 = vunpack.c.l.b16 %v1576
      %v1883 = vunpack.c.l.b16 %v1577
      %v1884 = vunpack.c.l.b16 %v1578
      %v1885 = vunpack.c.l.b16 %v1579
      %v1886 = vunpack.c.l.b16 %v1580
      %v1887 = vunpack.c.l.b16 %v1581
      %v1888 = vunpack.c.l.b16 %v1582
      %v1889 = vpack.c.b16 %v1858, %v1857
      %v1890 = vpack.c.b16 %v1860, %v1859
      %v1891 = vpack.c.b16 %v1862, %v1861
      %v1892 = vpack.c.b16 %v1864, %v1863
      %v1893 = vpack.c.b16 %v1866, %v1865
      %v1894 = vpack.c.b16 %v1868, %v1867
      %v1895 = vpack.c.b16 %v1870, %v1869
      %v1896 = vpack.c.b16 %v1872, %v1871
      %v1897 = vpack.c.b16 %v1874, %v1873
      %v1898 = vpack.c.b16 %v1876, %v1875
      %v1899 = vpack.c.b16 %v1878, %v1877
      %v1900 = vpack.c.b16 %v1880, %v1879
      %v1901 = vpack.c.b16 %v1882, %v1881
      %v1902 = vpack.c.b16 %v1884, %v1883
      %v1903 = vpack.c.b16 %v1886, %v1885
      %v1904 = vpack.c.b16 %v1888, %v1887
      %1921 = vmatprep.subr.bf16.mxu0 0
      %1922 = vmatpush1.bf16.msra.mxu0 %v1889
      %1923 = vmatprep.subr.bf16.mxu0 0
      %1924 = vmatpush1.bf16.msra.mxu0 %v1890
      %1925 = vmatprep.subr.bf16.mxu0 0
      %1926 = vmatpush1.bf16.msra.mxu0 %v1891
      %1927 = vmatprep.subr.bf16.mxu0 0
      %1928 = vmatpush1.bf16.msra.mxu0 %v1892
      %1929 = vmatprep.subr.bf16.mxu0 0
      %1930 = vmatpush1.bf16.msra.mxu0 %v1893
      %1931 = vmatprep.subr.bf16.mxu0 0
      %1932 = vmatpush1.bf16.msra.mxu0 %v1894
      %1933 = vmatprep.subr.bf16.mxu0 0
      %1934 = vmatpush1.bf16.msra.mxu0 %v1895
      %1935 = vmatprep.subr.bf16.mxu0 0
      %1936 = vmatpush1.bf16.msra.mxu0 %v1896
      %1937 = vmatprep.subr.bf16.mxu0 0
      %1938 = vmatpush1.bf16.msra.mxu0 %v1897
      %1939 = vmatprep.subr.bf16.mxu0 0
      %1940 = vmatpush1.bf16.msra.mxu0 %v1898
      %1941 = vmatprep.subr.bf16.mxu0 0
      %1942 = vmatpush1.bf16.msra.mxu0 %v1899
      %1943 = vmatprep.subr.bf16.mxu0 0
      %1944 = vmatpush1.bf16.msra.mxu0 %v1900
      %1945 = vmatprep.subr.bf16.mxu0 0
      %1946 = vmatpush1.bf16.msra.mxu0 %v1901
      %1947 = vmatprep.subr.bf16.mxu0 0
      %1948 = vmatpush1.bf16.msra.mxu0 %v1902
      %1949 = vmatprep.subr.bf16.mxu0 0
      %1950 = vmatpush1.bf16.msra.mxu0 %v1903
      %1951 = vmatprep.subr.bf16.mxu0 0
      %1952 = vmatpush1.bf16.msra.mxu0 %v1904
      %1953 = vmatprep.mubr.bf16.mxu0 %v736
      %1954 = vmatmul.mubr.bf16.gmra.mrb[0].mxu0 %v735
      %v1955 = vpop.f32.mrb[0].mxu0
      %v1956 = vadd.f32 %v1795, %v1955
      %v1957 = vpop.f32.mrb[0].mxu0
      %v1958 = vpop.f32.mrb[0].mxu0
      %v1959 = vadd.f32 %v1798, %v1958
      %v1960 = vpop.f32.mrb[0].mxu0
      %1961 = vmatprep.mubr.bf16.mxu0 %v738
      %1962 = vmatmul.mubr.bf16.gmra.mrb[0].mxu0 %v737
      %v1963 = vpop.f32.mrb[0].mxu0
      %v1964 = vadd.f32 %v1803, %v1963
      %v1965 = vpop.f32.mrb[0].mxu0
      %v1966 = vpop.f32.mrb[0].mxu0
      %v1967 = vadd.f32 %v1806, %v1966
      %v1968 = vpop.f32.mrb[0].mxu0
      %1969 = vmatprep.mubr.bf16.mxu0 %v740
      %1970 = vmatmul.mubr.bf16.gmra.mrb[0].mxu0 %v739
      %v1971 = vpop.f32.mrb[0].mxu0
      %v1972 = vadd.f32 %v1811, %v1971
      %v1973 = vpop.f32.mrb[0].mxu0
      %v1974 = vpop.f32.mrb[0].mxu0
      %v1975 = vadd.f32 %v1814, %v1974
      %v1976 = vpop.f32.mrb[0].mxu0
      %1977 = vmatprep.mubr.bf16.mxu0 %v742
      %1978 = vmatmul.mubr.bf16.gmra.mrb[0].mxu0 %v741
      %v1979 = vpop.f32.mrb[0].mxu0
      %v1980 = vadd.f32 %v1819, %v1979
      %v1981 = vpop.f32.mrb[0].mxu0
      %v1982 = vpop.f32.mrb[0].mxu0
      %v1983 = vadd.f32 %v1822, %v1982
      %v1984 = vpop.f32.mrb[0].mxu0
      %1985 = vdwg.mxu0
      %v1986 = vtanh.pop %v599
      %v1987 = vtanh.pop %v602
      %v1988 = vtanh.pop %v607
      %v1989 = vtanh.pop %v610
      %v1990 = vtanh.pop %v615
      %v1991 = vtanh.pop %v618
      %v1992 = vtanh.pop %v623
      %v1993 = vtanh.pop %v626
      %v1994 = vpack.c.bf16 %v1987, %v1986
      %v1995 = vpack.c.bf16 %v1989, %v1988
      %v1996 = vpack.c.bf16 %v1991, %v1990
      %v1997 = vpack.c.bf16 %v1993, %v1992
      %v2002 = vunpack.c.l.b16 %v1994
      %v2003 = vunpack.c.h.b16 %v1994
      %v2004 = vunpack.c.l.b16 %v1995
      %v2005 = vunpack.c.h.b16 %v1995
      %v2006 = vunpack.c.l.b16 %v1996
      %v2007 = vunpack.c.h.b16 %v1996
      %v2008 = vunpack.c.l.b16 %v1997
      %v2009 = vunpack.c.h.b16 %v1997
      %v2010 = vtanh.pop %v1083
      %v2011 = vtanh.pop %v1086
      %v2012 = vtanh.pop %v1091
      %v2013 = vtanh.pop %v1094
      %v2014 = vtanh.pop %v1099
      %v2015 = vtanh.pop %v1102
      %v2016 = vtanh.pop %v1107
      %v2017 = vtanh.pop %v1110
      %v2018 = vpack.c.bf16 %v2011, %v2010
      %v2019 = vpack.c.bf16 %v2013, %v2012
      %v2020 = vpack.c.bf16 %v2015, %v2014
      %v2021 = vpack.c.bf16 %v2017, %v2016
      %v2026 = vunpack.c.l.b16 %v2018
      %v2027 = vunpack.c.h.b16 %v2018
      %v2028 = vunpack.c.l.b16 %v2019
      %v2029 = vunpack.c.h.b16 %v2019
      %v2030 = vunpack.c.l.b16 %v2020
      %v2031 = vunpack.c.h.b16 %v2020
      %v2032 = vunpack.c.l.b16 %v2021
      %v2033 = vunpack.c.h.b16 %v2021
      %v2034 = vtanh.pop %v1520
      %v2035 = vtanh.pop %v1523
      %v2036 = vtanh.pop %v1528
      %v2037 = vtanh.pop %v1531
      %v2038 = vtanh.pop %v1536
      %v2039 = vtanh.pop %v1539
      %v2040 = vtanh.pop %v1544
      %v2041 = vtanh.pop %v1547
      %v2042 = vpack.c.bf16 %v2035, %v2034
      %v2043 = vpack.c.bf16 %v2037, %v2036
      %v2044 = vpack.c.bf16 %v2039, %v2038
      %v2045 = vpack.c.bf16 %v2041, %v2040
      %v2050 = vunpack.c.l.b16 %v2042
      %v2051 = vunpack.c.h.b16 %v2042
      %v2052 = vunpack.c.l.b16 %v2043
      %v2053 = vunpack.c.h.b16 %v2043
      %v2054 = vunpack.c.l.b16 %v2044
      %v2055 = vunpack.c.h.b16 %v2044
      %v2056 = vunpack.c.l.b16 %v2045
      %v2057 = vunpack.c.h.b16 %v2045
      %v2058 = vtanh.pop %v1956
      %v2059 = vtanh.pop %v1959
      %v2060 = vtanh.pop %v1964
      %v2061 = vtanh.pop %v1967
      %v2062 = vtanh.pop %v1972
      %v2063 = vtanh.pop %v1975
      %v2064 = vtanh.pop %v1980
      %v2065 = vtanh.pop %v1983
      %v2066 = vpack.c.bf16 %v2059, %v2058
      %v2067 = vpack.c.bf16 %v2061, %v2060
      %v2068 = vpack.c.bf16 %v2063, %v2062
      %v2069 = vpack.c.bf16 %v2065, %v2064
      %v2074 = vunpack.c.l.b16 %v2066
      %v2075 = vunpack.c.h.b16 %v2066
      %v2076 = vunpack.c.l.b16 %v2067
      %v2077 = vunpack.c.h.b16 %v2067
      %v2078 = vunpack.c.l.b16 %v2068
      %v2079 = vunpack.c.h.b16 %v2068
      %v2080 = vunpack.c.l.b16 %v2069
      %v2081 = vunpack.c.h.b16 %v2069
      %v2082 = vpack.c.b16 %v2026, %v2002
      %v2083 = vpack.c.b16 %v2074, %v2050
      %v2084 = vpack.c.b16 %v2027, %v2003
      %v2085 = vpack.c.b16 %v2075, %v2051
      %v2086 = vpack.c.b16 %v2028, %v2004
      %v2087 = vpack.c.b16 %v2076, %v2052
      %v2088 = vpack.c.b16 %v2029, %v2005
      %v2089 = vpack.c.b16 %v2077, %v2053
      %v2090 = vpack.c.b16 %v2030, %v2006
      %v2091 = vpack.c.b16 %v2078, %v2054
      %v2092 = vpack.c.b16 %v2031, %v2007
      %v2093 = vpack.c.b16 %v2079, %v2055
      %v2094 = vpack.c.b16 %v2032, %v2008
      %v2095 = vpack.c.b16 %v2080, %v2056
      %v2096 = vpack.c.b16 %v2033, %v2009
      %v2097 = vpack.c.b16 %v2081, %v2057
      %2114 = vst [vmem:[%s143] sm:$0xff] %v2082
      %2115 = vst [vmem:[%s143 + $0x8] sm:$0xff] %v2083
      %2116 = vst [vmem:[%s143 + $0x10] sm:$0xff] %v2084
      %2117 = vst [vmem:[%s143 + $0x18] sm:$0xff] %v2085
      %2118 = vst [vmem:[%s143 + $0x20] sm:$0xff] %v2086
      %2119 = vst [vmem:[%s143 + $0x28] sm:$0xff] %v2087
      %2120 = vst [vmem:[%s143 + $0x30] sm:$0xff] %v2088
      %2121 = vst [vmem:[%s143 + $0x38] sm:$0xff] %v2089
      %2122 = vst [vmem:[%s143 + $0x40] sm:$0xff] %v2090
      %2123 = vst [vmem:[%s143 + $0x48] sm:$0xff] %v2091
      %2124 = vst [vmem:[%s143 + $0x50] sm:$0xff] %v2092
      %2125 = vst [vmem:[%s143 + $0x58] sm:$0xff] %v2093
      %2126 = vst [vmem:[%s143 + $0x60] sm:$0xff] %v2094
      %2127 = vst [vmem:[%s143 + $0x68] sm:$0xff] %v2095
      %2128 = vst [vmem:[%s143 + $0x70] sm:$0xff] %v2096
      %2129 = vst [vmem:[%s143 + $0x78] sm:$0xff] %v2097
      %p2130 = scmp.lt.s32.totalorder %s13, 1
      %s2131 = scalar_select %p2130, %s13, 1
      %s2132 = smul.addr %s2131, 32
      %s2133 = smul.addr %s2132, 4
      %s2134 = scalar_lea.vmem %s2, %s2133
      // Predicated region
      $region29: #{decoder_forward.9} parent=27 // pred_check
        %p2135 = pneg %p78
      $region30: #{decoder_forward.9} parent=27 // pred_check_branch
        %2137 = sbr.rel (%p2135) target = $region32
      $region31: #{decoder_forward.9} parent=27 // pred_region
        _
      $region32: #{decoder_forward.9} parent=27 // pred_fallthru
        _
    $region28: #{decoder_forward.9} parent=5 // pred_fallthru
      _
    %p2138 = scmp.le.s32.totalorder 2, %s8
    // Predicated region
    $region33: #{decoder_forward.9} parent=5 // pred_check
      %p2139 = pneg %p2138
    $region34: #{decoder_forward.9} parent=5 // pred_check_branch
      %2141 = sbr.rel (%p2139) target = $region36
    $region35: #{decoder_forward.9} parent=5 // pred_region
      %s2142 = ssub.s32 %s8, 2
      // Predicated region
      $region37: #{decoder_forward.9} parent=35 // pred_check
        %p2143 = pneg %p84
      $region38: #{decoder_forward.9} parent=35 // pred_check_branch
        %2145 = sbr.rel (%p2143) target = $region40
      $region39: #{decoder_forward.9} parent=35 // pred_region
        %p2146 = scmp.lt.s32.totalorder %s14, 1
        %s2147 = scalar_select %p2146, %s14, 1
        %s2148 = smul.addr %s2147, 32
        %s2149 = smul.addr %s2148, 4
        %s2150 = scalar_lea.vmem %s2, %s2149
      $region40: #{decoder_forward.9} parent=35 // pred_fallthru
        _
    $region36: #{decoder_forward.9} parent=5 // pred_fallthru
      _
  $region6: #{decoder_forward.9} parent=0 // loop_footer
    %s12 = sadd.s32 1, %s8
  $region7: #{decoder_forward.9} parent=0 // loop_footer_branch
    %7 = sbr.rel target = $region3
  $region8: #{decoder_forward.9} parent=0 // loop_exit
    _

</llo_original>
